<compile_context>
chip_gen: v6e
topology: v6e:2x2x1
jax: 0.10.0
libtpu: 0.0.40
codegen_flags: <defaults>
</compile_context>

<pallas_src>
import jax
import jax.numpy as jnp
from jax import lax
from jax.experimental import pallas as pl
from jax.experimental.pallas import tpu as pltpu

STATE_SIZE = 6
ACTION_SIZE = 2
HIDDEN = 256
HEAD_ROWS = 8          # fused head rows: 0=pi0, 1=pi1, 2=v, 3..7 padding
LANE = 128


# ----------------------------------------------------------------------------
# Kernel
# ----------------------------------------------------------------------------
def a2c_kernel(x_ref, w1_ref, b1_ref, w2_ref, b2_ref, wh_ref, bh_ref, out_ref):
    """Transposed layout: batch is the lane (last) dimension.

    x_ref : (6, TM)     f32
    w1_ref: (256, 6)    ew      b1_ref: (256, 1) ew
    w2_ref: (256, 256)  mm      b2_ref: (256, 1) ew
    wh_ref: (8, 256)    mm      bh_ref: (8, 1)   f32
    out_ref: (8, TM)    f32     rows: 0=pi0, 1=pi1, 2=v, 3..7=0
    """
    ew = w1_ref.dtype

    # ---- layer 1 on the VPU: K=6 would leave the MXU nearly idle ----------
    x = x_ref[...].astype(ew)                       # (6, TM)
    w1 = w1_ref[...]                                # (256, 6)
    h1 = b1_ref[...]                                # (256, 1) -> broadcasts
    for k in range(STATE_SIZE):
        h1 = h1 + w1[:, k:k + 1] * x[k:k + 1, :]
    h1 = jnp.maximum(h1, 0.0).astype(w2_ref.dtype)  # (256, TM)

    # ---- layer 2 on the MXU (f32 accumulation) -----------------------------
    h2 = jnp.dot(w2_ref[...], h1, preferred_element_type=jnp.float32)
    h2 = jnp.maximum(h2.astype(ew) + b2_ref[...], 0.0)          # (256, TM)

    # ---- fused head: rows 0,1 = pi logits, row 2 = value -------------------
    head = jnp.dot(wh_ref[...], h2.astype(wh_ref.dtype),
                   preferred_element_type=jnp.float32)           # (8, TM)
    head = head + bh_ref[...]

    # 2-class softmax == sigmoid of the logit difference: no cross-lane
    # reductions, no 128-wide masked exp, and sum(pi) == 1 by construction.
    l0 = head[0:1, :]
    l1 = head[1:2, :]
    pi0 = 1.0 / (1.0 + jnp.exp(l1 - l0))
    pi1 = 1.0 - pi0

    row = lax.broadcasted_iota(jnp.int32, head.shape, 0)
    out_ref[...] = jnp.where(row == 0, pi0,
                             jnp.where(row == 1, pi1,
                                       jnp.where(row == 2, head, 0.0)))


# ----------------------------------------------------------------------------
# Wrapper
# ----------------------------------------------------------------------------
_SINGLE_BUFFER_WEIGHTS_OK = None   # cache for the pl.Buffered(1) feature probe


def _default_elementwise_dtype():
    # bf16 VPU exists on v6e/v7x; keep elementwise math in f32 elsewhere (v5e
    # and older have no bf16 VALU, so casts there would only add converts).
    try:
        kind = jax.devices()[0].device_kind.lower()
    except Exception:
        return jnp.float32
    if "v6" in kind or "v7" in kind:
        return jnp.bfloat16
    return jnp.float32


def prepare_params(params, *, matmul_dtype=jnp.bfloat16, elementwise_dtype=None):
    """One-time parameter prep (transpose / fuse heads / cast).

    Call once per parameter update and reuse the result across forward calls;
    this keeps scatter/pad/convert XLA ops out of the per-step hot path.
    If higher value-head precision is needed downstream, pass
    matmul_dtype=jnp.float32 (the matmuls stay cheap at these sizes).
    """
    if elementwise_dtype is None:
        elementwise_dtype = _default_elementwise_dtype()

    w1t = params["w1"].T.astype(elementwise_dtype)                 # (256, 6)
    b1c = params["b1"].reshape(HIDDEN, 1).astype(elementwise_dtype)
    w2t = params["w2"].T.astype(matmul_dtype)                      # (256, 256)
    b2c = params["b2"].reshape(HIDDEN, 1).astype(elementwise_dtype)

    wht = jnp.zeros((HEAD_ROWS, HIDDEN), jnp.float32)
    wht = wht.at[:ACTION_SIZE, :].set(params["wpi"].T)
    wht = wht.at[ACTION_SIZE, :].set(params["wv"][:, 0])
    wht = wht.astype(matmul_dtype)

    bhc = jnp.zeros((HEAD_ROWS, 1), jnp.float32)
    bhc = bhc.at[:ACTION_SIZE, 0].set(params["bpi"][0])
    bhc = bhc.at[ACTION_SIZE, 0].set(params["bv"][0, 0])

    return dict(w1t=w1t, b1c=b1c, w2t=w2t, b2c=b2c, wht=wht, bhc=bhc)


def _pallas_forward(x_t, p, *, tm, grid_b, b_total, single_buffer_weights):
    def const_spec(shape):
        # Weights/biases are resident across the whole grid; a second pipeline
        # buffer for them is pure VMEM waste.
        if single_buffer_weights:
            return pl.BlockSpec(shape, lambda i: (0, 0),
                                pipeline_mode=pl.Buffered(1))
        return pl.BlockSpec(shape, lambda i: (0, 0))

    return pl.pallas_call(
        a2c_kernel,
        out_shape=jax.ShapeDtypeStruct((HEAD_ROWS, b_total), jnp.float32),
        grid=(grid_b,),
        in_specs=[
            pl.BlockSpec((STATE_SIZE, tm), lambda i: (0, i)),   # x tile (batch on lanes)
            const_spec((HIDDEN, STATE_SIZE)),                   # w1^T (resident)
            const_spec((HIDDEN, 1)),                            # b1
            const_spec((HIDDEN, HIDDEN)),                       # w2^T
            const_spec((HIDDEN, 1)),                            # b2
            const_spec((HEAD_ROWS, HIDDEN)),                    # fused head W^T
            const_spec((HEAD_ROWS, 1)),                         # fused head b
        ],
        out_specs=pl.BlockSpec((HEAD_ROWS, tm), lambda i: (0, i)),
        compiler_params=pltpu.CompilerParams(
            dimension_semantics=("parallel",),   # v7x: shard batch tiles over 2 TCs
            vmem_limit_bytes=32 << 20,
        ),
    )(x_t, p["w1t"], p["b1c"], p["w2t"], p["b2c"], p["wht"], p["bhc"])


def a2c_forward(x, prepared, *, tm=1024):
    """x: (B, STATE_SIZE) float32; prepared = prepare_params(params).

    Returns (pi (B, 2), v (B, 1)).
    """
    global _SINGLE_BUFFER_WEIGHTS_OK
    B, S = x.shape
    assert S == STATE_SIZE

    # Batch lives on the lane axis -> tiles are multiples of 128 lanes.
    tm = max(LANE, (min(tm, 4096) // LANE) * LANE)
    b_pad = pl.cdiv(B, LANE) * LANE
    if b_pad <= tm:
        # Keep >= 2 grid steps whenever the batch allows it so the "parallel"
        # axis can actually be split across both TensorCores on v7x.
        tm = LANE if b_pad <= LANE else pl.cdiv(pl.cdiv(b_pad, 2), LANE) * LANE
    grid_b = pl.cdiv(b_pad, tm)
    b_total = grid_b * tm

    x_t = jnp.transpose(x).astype(jnp.float32)       # (6, B)
    if b_total != B:
        x_t = jnp.pad(x_t, ((0, 0), (0, b_total - B)))

    kwargs = dict(tm=tm, grid_b=grid_b, b_total=b_total)
    if _SINGLE_BUFFER_WEIGHTS_OK is None:
        try:
            out = _pallas_forward(x_t, prepared, single_buffer_weights=True, **kwargs)
            _SINGLE_BUFFER_WEIGHTS_OK = True
        except Exception:
            # pipeline_mode / Buffered(1) unsupported on this JAX build: fall
            # back to default double-buffered resident weights.
            _SINGLE_BUFFER_WEIGHTS_OK = False
            out = _pallas_forward(x_t, prepared, single_buffer_weights=False, **kwargs)
    else:
        out = _pallas_forward(x_t, prepared,
                              single_buffer_weights=_SINGLE_BUFFER_WEIGHTS_OK, **kwargs)

    pi = out[:ACTION_SIZE, :B].T                      # (B, 2)
    v = out[ACTION_SIZE:ACTION_SIZE + 1, :B].T        # (B, 1)
    return pi, v


# ----------------------------------------------------------------------------
# Reference / init (mimics the PyTorch module; weights stored as (in, out))
# ----------------------------------------------------------------------------
def init_params(key):
    ks = jax.random.split(key, 8)

    def linear(kw, kb, fan_in, fan_out):
        bound = 1.0 / jnp.sqrt(fan_in)
        w = jax.random.uniform(kw, (fan_in, fan_out), jnp.float32, -bound, bound)
        b = jax.random.uniform(kb, (1, fan_out), jnp.float32, -bound, bound)
        return w, b

    w1, b1 = linear(ks[0], ks[1], STATE_SIZE, HIDDEN)
    w2, b2 = linear(ks[2], ks[3], HIDDEN, HIDDEN)
    wpi, bpi = linear(ks[4], ks[5], HIDDEN, ACTION_SIZE)
    wv, bv = linear(ks[6], ks[7], HIDDEN, 1)
    return dict(w1=w1, b1=b1, w2=w2, b2=b2, wpi=wpi, bpi=bpi, wv=wv, bv=bv)


def reference_forward(x, p):
    h1 = jnp.maximum(x @ p["w1"] + p["b1"], 0.0)
    h2 = jnp.maximum(h1 @ p["w2"] + p["b2"], 0.0)
    logits = h2 @ p["wpi"] + p["bpi"]
    pi = jax.nn.softmax(logits, axis=1)
    v = h2 @ p["wv"] + p["bv"]
    return pi, v


if __name__ == "__main__":
    key = jax.random.PRNGKey(0)
    k_params, k_x, k_x2 = jax.random.split(key, 3)
    params = init_params(k_params)

    # --- exact f32 path: tight correctness check vs pure-JAX reference ------
    prepared_exact = prepare_params(params, matmul_dtype=jnp.float32,
                                    elementwise_dtype=jnp.float32)
    B = 8
    x = jax.random.normal(k_x, (B, STATE_SIZE), jnp.float32)
    pi, v = a2c_forward(x, prepared_exact)
    jax.block_until_ready((pi, v))

    pi_ref, v_ref = reference_forward(x, params)
    assert pi.shape == (B, ACTION_SIZE) and v.shape == (B, 1)
    assert jnp.allclose(pi, pi_ref, atol=1e-4, rtol=1e-4)
    assert jnp.allclose(v, v_ref, atol=1e-4, rtol=1e-4)
    assert jnp.allclose(jnp.sum(pi, axis=1), 1.0, atol=1e-5)

    # --- fast path: bf16 MXU (+ bf16 VPU on v6e/v7x), grid > 1, odd batch ---
    prepared_fast = prepare_params(params)   # one-time prep; reuse every step
    B2 = 300
    x2 = jax.random.normal(k_x2, (B2, STATE_SIZE), jnp.float32)
    pi2, v2 = a2c_forward(x2, prepared_fast, tm=1024)
    jax.block_until_ready((pi2, v2))

    pi2_ref, v2_ref = reference_forward(x2, params)
    assert pi2.shape == (B2, ACTION_SIZE) and v2.shape == (B2, 1)
    assert jnp.allclose(pi2, pi2_ref, atol=5e-2, rtol=5e-2)
    assert jnp.allclose(v2, v2_ref, atol=5e-2, rtol=5e-2)
    assert jnp.allclose(jnp.sum(pi2, axis=1), 1.0, atol=1e-3)

    print("KERNEL_OK")
</pallas_src>

<mosaic_0001>
module attributes {stable_mosaic.version = 11 : i64} {
  func.func @a2c_kernel(%arg0: i32, %arg1: memref<6x128xf32, #tpu.memory_space<vmem>>, %arg2: memref<256x6xf32, #tpu.memory_space<vmem>>, %arg3: memref<256x1xf32, #tpu.memory_space<vmem>>, %arg4: memref<256x256xf32, #tpu.memory_space<vmem>>, %arg5: memref<256x1xf32, #tpu.memory_space<vmem>>, %arg6: memref<8x256xf32, #tpu.memory_space<vmem>>, %arg7: memref<8x1xf32, #tpu.memory_space<vmem>>, %arg8: memref<8x128xf32, #tpu.memory_space<vmem>>) attributes {dimension_semantics = [#tpu.dimension_semantics<parallel>], iteration_bounds = array<i64: 1>, scalar_prefetch = 0 : i64, scratch_operands = 0 : i64, tpu.core_type = #tpu.core_type<tc>, window_params = [{transform_indices = @transform_0, window_bounds = array<i64: 6, 128>}, {pipeline_mode = #tpu.pipeline_mode<synchronous>, transform_indices = @transform_1, window_bounds = array<i64: 256, 6>}, {pipeline_mode = #tpu.pipeline_mode<synchronous>, transform_indices = @transform_2, window_bounds = array<i64: 256, 1>}, {pipeline_mode = #tpu.pipeline_mode<synchronous>, transform_indices = @transform_3, window_bounds = array<i64: 256, 256>}, {pipeline_mode = #tpu.pipeline_mode<synchronous>, transform_indices = @transform_4, window_bounds = array<i64: 256, 1>}, {pipeline_mode = #tpu.pipeline_mode<synchronous>, transform_indices = @transform_5, window_bounds = array<i64: 8, 256>}, {pipeline_mode = #tpu.pipeline_mode<synchronous>, transform_indices = @transform_6, window_bounds = array<i64: 8, 1>}, {transform_indices = @transform_7, window_bounds = array<i64: 8, 128>}]} {
    %c0 = arith.constant 0 : index
    %c0_0 = arith.constant 0 : index
    %0 = vector.load %arg1[%c0, %c0_0] : memref<6x128xf32, #tpu.memory_space<vmem>>, vector<6x128xf32>
    %c0_1 = arith.constant 0 : index
    %c0_2 = arith.constant 0 : index
    %1 = vector.load %arg2[%c0_1, %c0_2] : memref<256x6xf32, #tpu.memory_space<vmem>>, vector<256x6xf32>
    %c0_3 = arith.constant 0 : index
    %c0_4 = arith.constant 0 : index
    %2 = vector.load %arg3[%c0_3, %c0_4] : memref<256x1xf32, #tpu.memory_space<vmem>>, vector<256x1xf32>
    %3 = vector.extract_strided_slice %1 {offsets = [0, 0], sizes = [256, 1], strides = [1, 1]} : vector<256x6xf32> to vector<256x1xf32>
    %4 = vector.extract_strided_slice %0 {offsets = [0, 0], sizes = [1, 128], strides = [1, 1]} : vector<6x128xf32> to vector<1x128xf32>
    %5 = vector.broadcast %3 : vector<256x1xf32> to vector<256x128xf32>
    %6 = vector.broadcast %4 : vector<1x128xf32> to vector<256x128xf32>
    %7 = arith.mulf %5, %6 : vector<256x128xf32>
    %8 = vector.broadcast %2 : vector<256x1xf32> to vector<256x128xf32>
    %9 = arith.addf %8, %7 : vector<256x128xf32>
    %10 = vector.extract_strided_slice %1 {offsets = [0, 1], sizes = [256, 1], strides = [1, 1]} : vector<256x6xf32> to vector<256x1xf32>
    %11 = vector.extract_strided_slice %0 {offsets = [1, 0], sizes = [1, 128], strides = [1, 1]} : vector<6x128xf32> to vector<1x128xf32>
    %12 = vector.broadcast %10 : vector<256x1xf32> to vector<256x128xf32>
    %13 = vector.broadcast %11 : vector<1x128xf32> to vector<256x128xf32>
    %14 = arith.mulf %12, %13 : vector<256x128xf32>
    %15 = arith.addf %9, %14 : vector<256x128xf32>
    %16 = vector.extract_strided_slice %1 {offsets = [0, 2], sizes = [256, 1], strides = [1, 1]} : vector<256x6xf32> to vector<256x1xf32>
    %17 = vector.extract_strided_slice %0 {offsets = [2, 0], sizes = [1, 128], strides = [1, 1]} : vector<6x128xf32> to vector<1x128xf32>
    %18 = vector.broadcast %16 : vector<256x1xf32> to vector<256x128xf32>
    %19 = vector.broadcast %17 : vector<1x128xf32> to vector<256x128xf32>
    %20 = arith.mulf %18, %19 : vector<256x128xf32>
    %21 = arith.addf %15, %20 : vector<256x128xf32>
    %22 = vector.extract_strided_slice %1 {offsets = [0, 3], sizes = [256, 1], strides = [1, 1]} : vector<256x6xf32> to vector<256x1xf32>
    %23 = vector.extract_strided_slice %0 {offsets = [3, 0], sizes = [1, 128], strides = [1, 1]} : vector<6x128xf32> to vector<1x128xf32>
    %24 = vector.broadcast %22 : vector<256x1xf32> to vector<256x128xf32>
    %25 = vector.broadcast %23 : vector<1x128xf32> to vector<256x128xf32>
    %26 = arith.mulf %24, %25 : vector<256x128xf32>
    %27 = arith.addf %21, %26 : vector<256x128xf32>
    %28 = vector.extract_strided_slice %1 {offsets = [0, 4], sizes = [256, 1], strides = [1, 1]} : vector<256x6xf32> to vector<256x1xf32>
    %29 = vector.extract_strided_slice %0 {offsets = [4, 0], sizes = [1, 128], strides = [1, 1]} : vector<6x128xf32> to vector<1x128xf32>
    %30 = vector.broadcast %28 : vector<256x1xf32> to vector<256x128xf32>
    %31 = vector.broadcast %29 : vector<1x128xf32> to vector<256x128xf32>
    %32 = arith.mulf %30, %31 : vector<256x128xf32>
    %33 = arith.addf %27, %32 : vector<256x128xf32>
    %34 = vector.extract_strided_slice %1 {offsets = [0, 5], sizes = [256, 1], strides = [1, 1]} : vector<256x6xf32> to vector<256x1xf32>
    %35 = vector.extract_strided_slice %0 {offsets = [5, 0], sizes = [1, 128], strides = [1, 1]} : vector<6x128xf32> to vector<1x128xf32>
    %36 = vector.broadcast %34 : vector<256x1xf32> to vector<256x128xf32>
    %37 = vector.broadcast %35 : vector<1x128xf32> to vector<256x128xf32>
    %38 = arith.mulf %36, %37 : vector<256x128xf32>
    %39 = arith.addf %33, %38 : vector<256x128xf32>
    %cst = arith.constant 0.000000e+00 : f32
    %40 = vector.broadcast %cst : f32 to vector<256x128xf32>
    %41 = arith.maximumf %39, %40 : vector<256x128xf32>
    %c0_5 = arith.constant 0 : index
    %c0_6 = arith.constant 0 : index
    %42 = vector.load %arg4[%c0_5, %c0_6] : memref<256x256xf32, #tpu.memory_space<vmem>>, vector<256x256xf32>
    %cst_7 = arith.constant dense<0.000000e+00> : vector<256x128xf32>
    %43 = tpu.matmul %42, %41, %cst_7 {dimension_numbers = #tpu.dot_dimension_numbers<[1], [0], [0], [1], [0, 0, 1, 1], [], []>} : vector<256x256xf32>, vector<256x128xf32>, vector<256x128xf32> -> vector<256x128xf32>
    %c0_8 = arith.constant 0 : index
    %c0_9 = arith.constant 0 : index
    %44 = vector.load %arg5[%c0_8, %c0_9] : memref<256x1xf32, #tpu.memory_space<vmem>>, vector<256x1xf32>
    %45 = vector.broadcast %44 : vector<256x1xf32> to vector<256x128xf32>
    %46 = arith.addf %43, %45 : vector<256x128xf32>
    %cst_10 = arith.constant 0.000000e+00 : f32
    %47 = vector.broadcast %cst_10 : f32 to vector<256x128xf32>
    %48 = arith.maximumf %46, %47 : vector<256x128xf32>
    %c0_11 = arith.constant 0 : index
    %c0_12 = arith.constant 0 : index
    %49 = vector.load %arg6[%c0_11, %c0_12] : memref<8x256xf32, #tpu.memory_space<vmem>>, vector<8x256xf32>
    %cst_13 = arith.constant dense<0.000000e+00> : vector<8x128xf32>
    %50 = tpu.matmul %49, %48, %cst_13 {dimension_numbers = #tpu.dot_dimension_numbers<[1], [0], [0], [1], [0, 0, 1, 1], [], []>} : vector<8x256xf32>, vector<256x128xf32>, vector<8x128xf32> -> vector<8x128xf32>
    %c0_14 = arith.constant 0 : index
    %c0_15 = arith.constant 0 : index
    %51 = vector.load %arg7[%c0_14, %c0_15] : memref<8x1xf32, #tpu.memory_space<vmem>>, vector<8x1xf32>
    %52 = vector.broadcast %51 : vector<8x1xf32> to vector<8x128xf32>
    %53 = arith.addf %50, %52 : vector<8x128xf32>
    %54 = vector.extract_strided_slice %53 {offsets = [0, 0], sizes = [1, 128], strides = [1, 1]} : vector<8x128xf32> to vector<1x128xf32>
    %55 = vector.extract_strided_slice %53 {offsets = [1, 0], sizes = [1, 128], strides = [1, 1]} : vector<8x128xf32> to vector<1x128xf32>
    %56 = arith.subf %55, %54 : vector<1x128xf32>
    %57 = math.exp %56 : vector<1x128xf32>
    %cst_16 = arith.constant 1.000000e+00 : f32
    %58 = vector.broadcast %cst_16 : f32 to vector<1x128xf32>
    %59 = arith.addf %58, %57 : vector<1x128xf32>
    %cst_17 = arith.constant 1.000000e+00 : f32
    %60 = vector.broadcast %cst_17 : f32 to vector<1x128xf32>
    %61 = arith.divf %60, %59 : vector<1x128xf32>
    %cst_18 = arith.constant 1.000000e+00 : f32
    %62 = vector.broadcast %cst_18 : f32 to vector<1x128xf32>
    %63 = arith.subf %62, %61 : vector<1x128xf32>
    %64 = tpu.iota {dimensions = array<i32: 0>} : vector<8x128xi32>
    %c0_i32 = arith.constant 0 : i32
    %65 = vector.broadcast %c0_i32 : i32 to vector<8x128xi32>
    %66 = arith.cmpi eq, %64, %65 : vector<8x128xi32>
    %c1_i32 = arith.constant 1 : i32
    %67 = vector.broadcast %c1_i32 : i32 to vector<8x128xi32>
    %68 = arith.cmpi eq, %64, %67 : vector<8x128xi32>
    %c2_i32 = arith.constant 2 : i32
    %69 = vector.broadcast %c2_i32 : i32 to vector<8x128xi32>
    %70 = arith.cmpi eq, %64, %69 : vector<8x128xi32>
    %cst_19 = arith.constant 0.000000e+00 : f32
    %71 = vector.broadcast %cst_19 : f32 to vector<8x128xf32>
    %72 = arith.select %70, %53, %71 : vector<8x128xi1>, vector<8x128xf32>
    %73 = vector.shape_cast %63 : vector<1x128xf32> to vector<1x128xf32>
    %74 = vector.broadcast %73 : vector<1x128xf32> to vector<8x128xf32>
    %75 = arith.select %68, %74, %72 : vector<8x128xi1>, vector<8x128xf32>
    %76 = vector.shape_cast %61 : vector<1x128xf32> to vector<1x128xf32>
    %77 = vector.broadcast %76 : vector<1x128xf32> to vector<8x128xf32>
    %78 = arith.select %66, %77, %75 : vector<8x128xi1>, vector<8x128xf32>
    %c0_20 = arith.constant 0 : index
    %c0_21 = arith.constant 0 : index
    %79 = vector.load %arg8[%c0_20, %c0_21] : memref<8x128xf32, #tpu.memory_space<vmem>>, vector<8x128xf32>
    tpu.vector_store %arg8[%c0_20, %c0_21], %78 {strides = array<i32>} : memref<8x128xf32, #tpu.memory_space<vmem>>, vector<8x128xf32>,
    return
  }
  func.func @transform_0(%arg0: i32) -> (i32, i32) {
    %c0_i32 = arith.constant 0 : i32
    %c0_i32_0 = arith.constant 0 : i32
    return %c0_i32, %arg0 : i32, i32
  }
  func.func @transform_1(%arg0: i32) -> (i32, i32) {
    %c0_i32 = arith.constant 0 : i32
    %c0_i32_0 = arith.constant 0 : i32
    %c0_i32_1 = arith.constant 0 : i32
    return %c0_i32, %c0_i32_0 : i32, i32
  }
  func.func @transform_2(%arg0: i32) -> (i32, i32) {
    %c0_i32 = arith.constant 0 : i32
    %c0_i32_0 = arith.constant 0 : i32
    %c0_i32_1 = arith.constant 0 : i32
    return %c0_i32, %c0_i32_0 : i32, i32
  }
  func.func @transform_3(%arg0: i32) -> (i32, i32) {
    %c0_i32 = arith.constant 0 : i32
    %c0_i32_0 = arith.constant 0 : i32
    %c0_i32_1 = arith.constant 0 : i32
    return %c0_i32, %c0_i32_0 : i32, i32
  }
  func.func @transform_4(%arg0: i32) -> (i32, i32) {
    %c0_i32 = arith.constant 0 : i32
    %c0_i32_0 = arith.constant 0 : i32
    %c0_i32_1 = arith.constant 0 : i32
    return %c0_i32, %c0_i32_0 : i32, i32
  }
  func.func @transform_5(%arg0: i32) -> (i32, i32) {
    %c0_i32 = arith.constant 0 : i32
    %c0_i32_0 = arith.constant 0 : i32
    %c0_i32_1 = arith.constant 0 : i32
    return %c0_i32, %c0_i32_0 : i32, i32
  }
  func.func @transform_6(%arg0: i32) -> (i32, i32) {
    %c0_i32 = arith.constant 0 : i32
    %c0_i32_0 = arith.constant 0 : i32
    %c0_i32_1 = arith.constant 0 : i32
    return %c0_i32, %c0_i32_0 : i32, i32
  }
  func.func @transform_7(%arg0: i32) -> (i32, i32) {
    %c0_i32 = arith.constant 0 : i32
    %c0_i32_0 = arith.constant 0 : i32
    return %c0_i32, %arg0 : i32, i32
  }
}

module attributes {stable_mosaic.version = 11 : i64} {
  func.func @a2c_kernel(%arg0: i32, %arg1: memref<6x128xf32, #tpu.memory_space<vmem>>, %arg2: memref<256x6xf32, #tpu.memory_space<vmem>>, %arg3: memref<256x1xf32, #tpu.memory_space<vmem>>, %arg4: memref<256x256xf32, #tpu.memory_space<vmem>>, %arg5: memref<256x1xf32, #tpu.memory_space<vmem>>, %arg6: memref<8x256xf32, #tpu.memory_space<vmem>>, %arg7: memref<8x1xf32, #tpu.memory_space<vmem>>, %arg8: memref<8x128xf32, #tpu.memory_space<vmem>>) attributes {dimension_semantics = [#tpu.dimension_semantics<parallel>], iteration_bounds = array<i64: 1>, scalar_prefetch = 0 : i64, scratch_operands = 0 : i64, tpu.core_type = #tpu.core_type<tc>, window_params = [{transform_indices = @transform_0, window_bounds = array<i64: 6, 128>}, {pipeline_mode = #tpu.pipeline_mode<synchronous>, transform_indices = @transform_1, window_bounds = array<i64: 256, 6>}, {pipeline_mode = #tpu.pipeline_mode<synchronous>, transform_indices = @transform_2, window_bounds = array<i64: 256, 1>}, {pipeline_mode = #tpu.pipeline_mode<synchronous>, transform_indices = @transform_3, window_bounds = array<i64: 256, 256>}, {pipeline_mode = #tpu.pipeline_mode<synchronous>, transform_indices = @transform_4, window_bounds = array<i64: 256, 1>}, {pipeline_mode = #tpu.pipeline_mode<synchronous>, transform_indices = @transform_5, window_bounds = array<i64: 8, 256>}, {pipeline_mode = #tpu.pipeline_mode<synchronous>, transform_indices = @transform_6, window_bounds = array<i64: 8, 1>}, {transform_indices = @transform_7, window_bounds = array<i64: 8, 128>}]} {
    %c0 = arith.constant 0 : index
    %c0_0 = arith.constant 0 : index
    %0 = vector.load %arg1[%c0, %c0_0] : memref<6x128xf32, #tpu.memory_space<vmem>>, vector<6x128xf32>
    %c0_1 = arith.constant 0 : index
    %c0_2 = arith.constant 0 : index
    %1 = vector.load %arg2[%c0_1, %c0_2] : memref<256x6xf32, #tpu.memory_space<vmem>>, vector<256x6xf32>
    %c0_3 = arith.constant 0 : index
    %c0_4 = arith.constant 0 : index
    %2 = vector.load %arg3[%c0_3, %c0_4] : memref<256x1xf32, #tpu.memory_space<vmem>>, vector<256x1xf32>
    %3 = vector.extract_strided_slice %1 {offsets = [0, 0], sizes = [256, 1], strides = [1, 1]} : vector<256x6xf32> to vector<256x1xf32>
    %4 = vector.extract_strided_slice %0 {offsets = [0, 0], sizes = [1, 128], strides = [1, 1]} : vector<6x128xf32> to vector<1x128xf32>
    %5 = vector.broadcast %3 : vector<256x1xf32> to vector<256x128xf32>
    %6 = vector.broadcast %4 : vector<1x128xf32> to vector<256x128xf32>
    %7 = arith.mulf %5, %6 : vector<256x128xf32>
    %8 = vector.broadcast %2 : vector<256x1xf32> to vector<256x128xf32>
    %9 = arith.addf %8, %7 : vector<256x128xf32>
    %10 = vector.extract_strided_slice %1 {offsets = [0, 1], sizes = [256, 1], strides = [1, 1]} : vector<256x6xf32> to vector<256x1xf32>
    %11 = vector.extract_strided_slice %0 {offsets = [1, 0], sizes = [1, 128], strides = [1, 1]} : vector<6x128xf32> to vector<1x128xf32>
    %12 = vector.broadcast %10 : vector<256x1xf32> to vector<256x128xf32>
    %13 = vector.broadcast %11 : vector<1x128xf32> to vector<256x128xf32>
    %14 = arith.mulf %12, %13 : vector<256x128xf32>
    %15 = arith.addf %9, %14 : vector<256x128xf32>
    %16 = vector.extract_strided_slice %1 {offsets = [0, 2], sizes = [256, 1], strides = [1, 1]} : vector<256x6xf32> to vector<256x1xf32>
    %17 = vector.extract_strided_slice %0 {offsets = [2, 0], sizes = [1, 128], strides = [1, 1]} : vector<6x128xf32> to vector<1x128xf32>
    %18 = vector.broadcast %16 : vector<256x1xf32> to vector<256x128xf32>
    %19 = vector.broadcast %17 : vector<1x128xf32> to vector<256x128xf32>
    %20 = arith.mulf %18, %19 : vector<256x128xf32>
    %21 = arith.addf %15, %20 : vector<256x128xf32>
    %22 = vector.extract_strided_slice %1 {offsets = [0, 3], sizes = [256, 1], strides = [1, 1]} : vector<256x6xf32> to vector<256x1xf32>
    %23 = vector.extract_strided_slice %0 {offsets = [3, 0], sizes = [1, 128], strides = [1, 1]} : vector<6x128xf32> to vector<1x128xf32>
    %24 = vector.broadcast %22 : vector<256x1xf32> to vector<256x128xf32>
    %25 = vector.broadcast %23 : vector<1x128xf32> to vector<256x128xf32>
    %26 = arith.mulf %24, %25 : vector<256x128xf32>
    %27 = arith.addf %21, %26 : vector<256x128xf32>
    %28 = vector.extract_strided_slice %1 {offsets = [0, 4], sizes = [256, 1], strides = [1, 1]} : vector<256x6xf32> to vector<256x1xf32>
    %29 = vector.extract_strided_slice %0 {offsets = [4, 0], sizes = [1, 128], strides = [1, 1]} : vector<6x128xf32> to vector<1x128xf32>
    %30 = vector.broadcast %28 : vector<256x1xf32> to vector<256x128xf32>
    %31 = vector.broadcast %29 : vector<1x128xf32> to vector<256x128xf32>
    %32 = arith.mulf %30, %31 : vector<256x128xf32>
    %33 = arith.addf %27, %32 : vector<256x128xf32>
    %34 = vector.extract_strided_slice %1 {offsets = [0, 5], sizes = [256, 1], strides = [1, 1]} : vector<256x6xf32> to vector<256x1xf32>
    %35 = vector.extract_strided_slice %0 {offsets = [5, 0], sizes = [1, 128], strides = [1, 1]} : vector<6x128xf32> to vector<1x128xf32>
    %36 = vector.broadcast %34 : vector<256x1xf32> to vector<256x128xf32>
    %37 = vector.broadcast %35 : vector<1x128xf32> to vector<256x128xf32>
    %38 = arith.mulf %36, %37 : vector<256x128xf32>
    %39 = arith.addf %33, %38 : vector<256x128xf32>
    %cst = arith.constant 0.000000e+00 : f32
    %40 = vector.broadcast %cst : f32 to vector<256x128xf32>
    %41 = arith.maximumf %39, %40 : vector<256x128xf32>
    %c0_5 = arith.constant 0 : index
    %c0_6 = arith.constant 0 : index
    %42 = vector.load %arg4[%c0_5, %c0_6] : memref<256x256xf32, #tpu.memory_space<vmem>>, vector<256x256xf32>
    %cst_7 = arith.constant dense<0.000000e+00> : vector<256x128xf32>
    %43 = tpu.matmul %42, %41, %cst_7 {dimension_numbers = #tpu.dot_dimension_numbers<[1], [0], [0], [1], [0, 0, 1, 1], [], []>} : vector<256x256xf32>, vector<256x128xf32>, vector<256x128xf32> -> vector<256x128xf32>
    %c0_8 = arith.constant 0 : index
    %c0_9 = arith.constant 0 : index
    %44 = vector.load %arg5[%c0_8, %c0_9] : memref<256x1xf32, #tpu.memory_space<vmem>>, vector<256x1xf32>
    %45 = vector.broadcast %44 : vector<256x1xf32> to vector<256x128xf32>
    %46 = arith.addf %43, %45 : vector<256x128xf32>
    %cst_10 = arith.constant 0.000000e+00 : f32
    %47 = vector.broadcast %cst_10 : f32 to vector<256x128xf32>
    %48 = arith.maximumf %46, %47 : vector<256x128xf32>
    %c0_11 = arith.constant 0 : index
    %c0_12 = arith.constant 0 : index
    %49 = vector.load %arg6[%c0_11, %c0_12] : memref<8x256xf32, #tpu.memory_space<vmem>>, vector<8x256xf32>
    %cst_13 = arith.constant dense<0.000000e+00> : vector<8x128xf32>
    %50 = tpu.matmul %49, %48, %cst_13 {dimension_numbers = #tpu.dot_dimension_numbers<[1], [0], [0], [1], [0, 0, 1, 1], [], []>} : vector<8x256xf32>, vector<256x128xf32>, vector<8x128xf32> -> vector<8x128xf32>
    %c0_14 = arith.constant 0 : index
    %c0_15 = arith.constant 0 : index
    %51 = vector.load %arg7[%c0_14, %c0_15] : memref<8x1xf32, #tpu.memory_space<vmem>>, vector<8x1xf32>
    %52 = vector.broadcast %51 : vector<8x1xf32> to vector<8x128xf32>
    %53 = arith.addf %50, %52 : vector<8x128xf32>
    %54 = vector.extract_strided_slice %53 {offsets = [0, 0], sizes = [1, 128], strides = [1, 1]} : vector<8x128xf32> to vector<1x128xf32>
    %55 = vector.extract_strided_slice %53 {offsets = [1, 0], sizes = [1, 128], strides = [1, 1]} : vector<8x128xf32> to vector<1x128xf32>
    %56 = arith.subf %55, %54 : vector<1x128xf32>
    %57 = math.exp %56 : vector<1x128xf32>
    %cst_16 = arith.constant 1.000000e+00 : f32
    %58 = vector.broadcast %cst_16 : f32 to vector<1x128xf32>
    %59 = arith.addf %58, %57 : vector<1x128xf32>
    %cst_17 = arith.constant 1.000000e+00 : f32
    %60 = vector.broadcast %cst_17 : f32 to vector<1x128xf32>
    %61 = arith.divf %60, %59 : vector<1x128xf32>
    %cst_18 = arith.constant 1.000000e+00 : f32
    %62 = vector.broadcast %cst_18 : f32 to vector<1x128xf32>
    %63 = arith.subf %62, %61 : vector<1x128xf32>
    %64 = tpu.iota {dimensions = array<i32: 0>} : vector<8x128xi32>
    %c0_i32 = arith.constant 0 : i32
    %65 = vector.broadcast %c0_i32 : i32 to vector<8x128xi32>
    %66 = arith.cmpi eq, %64, %65 : vector<8x128xi32>
    %c1_i32 = arith.constant 1 : i32
    %67 = vector.broadcast %c1_i32 : i32 to vector<8x128xi32>
    %68 = arith.cmpi eq, %64, %67 : vector<8x128xi32>
    %c2_i32 = arith.constant 2 : i32
    %69 = vector.broadcast %c2_i32 : i32 to vector<8x128xi32>
    %70 = arith.cmpi eq, %64, %69 : vector<8x128xi32>
    %cst_19 = arith.constant 0.000000e+00 : f32
    %71 = vector.broadcast %cst_19 : f32 to vector<8x128xf32>
    %72 = arith.select %70, %53, %71 : vector<8x128xi1>, vector<8x128xf32>
    %73 = vector.shape_cast %63 : vector<1x128xf32> to vector<1x128xf32>
    %74 = vector.broadcast %73 : vector<1x128xf32> to vector<8x128xf32>
    %75 = arith.select %68, %74, %72 : vector<8x128xi1>, vector<8x128xf32>
    %76 = vector.shape_cast %61 : vector<1x128xf32> to vector<1x128xf32>
    %77 = vector.broadcast %76 : vector<1x128xf32> to vector<8x128xf32>
    %78 = arith.select %66, %77, %75 : vector<8x128xi1>, vector<8x128xf32>
    %c0_20 = arith.constant 0 : index
    %c0_21 = arith.constant 0 : index
    %79 = vector.load %arg8[%c0_20, %c0_21] : memref<8x128xf32, #tpu.memory_space<vmem>>, vector<8x128xf32>
    tpu.vector_store %arg8[%c0_20, %c0_21], %78 {strides = array<i32>} : memref<8x128xf32, #tpu.memory_space<vmem>>, vector<8x128xf32>,
    return
  }
  func.func @transform_0(%arg0: i32) -> (i32, i32) {
    %c0_i32 = arith.constant 0 : i32
    %c0_i32_0 = arith.constant 0 : i32
    return %c0_i32, %arg0 : i32, i32
  }
  func.func @transform_1(%arg0: i32) -> (i32, i32) {
    %c0_i32 = arith.constant 0 : i32
    %c0_i32_0 = arith.constant 0 : i32
    %c0_i32_1 = arith.constant 0 : i32
    return %c0_i32, %c0_i32_0 : i32, i32
  }
  func.func @transform_2(%arg0: i32) -> (i32, i32) {
    %c0_i32 = arith.constant 0 : i32
    %c0_i32_0 = arith.constant 0 : i32
    %c0_i32_1 = arith.constant 0 : i32
    return %c0_i32, %c0_i32_0 : i32, i32
  }
  func.func @transform_3(%arg0: i32) -> (i32, i32) {
    %c0_i32 = arith.constant 0 : i32
    %c0_i32_0 = arith.constant 0 : i32
    %c0_i32_1 = arith.constant 0 : i32
    return %c0_i32, %c0_i32_0 : i32, i32
  }
  func.func @transform_4(%arg0: i32) -> (i32, i32) {
    %c0_i32 = arith.constant 0 : i32
    %c0_i32_0 = arith.constant 0 : i32
    %c0_i32_1 = arith.constant 0 : i32
    return %c0_i32, %c0_i32_0 : i32, i32
  }
  func.func @transform_5(%arg0: i32) -> (i32, i32) {
    %c0_i32 = arith.constant 0 : i32
    %c0_i32_0 = arith.constant 0 : i32
    %c0_i32_1 = arith.constant 0 : i32
    return %c0_i32, %c0_i32_0 : i32, i32
  }
  func.func @transform_6(%arg0: i32) -> (i32, i32) {
    %c0_i32 = arith.constant 0 : i32
    %c0_i32_0 = arith.constant 0 : i32
    %c0_i32_1 = arith.constant 0 : i32
    return %c0_i32, %c0_i32_0 : i32, i32
  }
  func.func @transform_7(%arg0: i32) -> (i32, i32) {
    %c0_i32 = arith.constant 0 : i32
    %c0_i32_0 = arith.constant 0 : i32
    return %c0_i32, %arg0 : i32, i32
  }
}

</mosaic_0001>

<llo_original>
// kernel: tpu_custom_call.1
$region0: #{tpu_custom_call.1}
  #allocation0 [shape = 'u32[]', space=smem, size = 0x4, offset = 0x4, fixed_abs, tag = 'smem constant byte address 0x4 - core index']
  #allocation1 [shape = 'u32[144,128]{1,0:T(1,128)}', space=vmem, size = 0x12000, scoped, tag = 'internal scratch']
  %s0 = inlined_call_operand.vmem [shape: f32[6,128], index: 0, kind: input, shape index: {}]
  %s1 = inlined_call_operand.vmem [shape: f32[256,6], index: 1, kind: input, shape index: {}]
  %s2 = inlined_call_operand.vmem [shape: f32[256,1], index: 2, kind: input, shape index: {}]
  %s3 = inlined_call_operand.vmem [shape: f32[256,256], index: 3, kind: input, shape index: {}]
  %s4 = inlined_call_operand.vmem [shape: f32[256,1], index: 4, kind: input, shape index: {}]
  %s5 = inlined_call_operand.vmem [shape: f32[8,256], index: 5, kind: input, shape index: {}]
  %s6 = inlined_call_operand.vmem [shape: f32[8,1], index: 6, kind: input, shape index: {}]
  %s7 = inlined_call_operand.hbm [shape: f32[8,128], index: 7, kind: output, shape index: {}]
  %s8 = sld [smem:[#allocation0]]
  $region38: #{tpu_custom_call.1} parent=0
    _
  %s10 = ssub.s32 1, %s8
  %s11 = scalar_select 0, %s10, %s8
  $region1: #{tpu_custom_call.1} parent=0
    #allocation2 [shape = 'u8[4096]{0}', space=vmem, size = 0x1000, scoped, tag = 'output window, operand 0, single buffered']
    #allocation3 [shape = 's32[1]{0}', space=sflag, size = 0x4, scoped, tag = 'scoped memory for tpu_custom_call.1']
    %12 = vsyncpa [#allocation3], 0
    // Predicated region
    $region2: #{tpu_custom_call.1} parent=1 // pred_check
      _
    $region3: #{tpu_custom_call.1} parent=1 // pred_check_branch
      %14 = sbr.rel (0) target = $region5
    $region4: #{tpu_custom_call.1} parent=1 // pred_region
      _
    $region5: #{tpu_custom_call.1} parent=1 // pred_fallthru
      _
    // Predicated region
    $region6: #{tpu_custom_call.1} parent=1 // pred_check
      _
    $region7: #{tpu_custom_call.1} parent=1 // pred_check_branch
      %16 = sbr.rel (0) target = $region9
    $region8: #{tpu_custom_call.1} parent=1 // pred_region
      _
    $region9: #{tpu_custom_call.1} parent=1 // pred_fallthru
      _
    // Predicated region
    $region10: #{tpu_custom_call.1} parent=1 // pred_check
      _
    $region11: #{tpu_custom_call.1} parent=1 // pred_check_branch
      %18 = sbr.rel (0) target = $region13
    $region12: #{tpu_custom_call.1} parent=1 // pred_region
      _
    $region13: #{tpu_custom_call.1} parent=1 // pred_fallthru
      _
    // Predicated region
    $region14: #{tpu_custom_call.1} parent=1 // pred_check
      _
    $region15: #{tpu_custom_call.1} parent=1 // pred_check_branch
      %20 = sbr.rel (0) target = $region17
    $region16: #{tpu_custom_call.1} parent=1 // pred_region
      _
    $region17: #{tpu_custom_call.1} parent=1 // pred_fallthru
      _
    // Predicated region
    $region18: #{tpu_custom_call.1} parent=1 // pred_check
      _
    $region19: #{tpu_custom_call.1} parent=1 // pred_check_branch
      %22 = sbr.rel (0) target = $region21
    $region20: #{tpu_custom_call.1} parent=1 // pred_region
      _
    $region21: #{tpu_custom_call.1} parent=1 // pred_fallthru
      _
    // Predicated region
    $region22: #{tpu_custom_call.1} parent=1 // pred_check
      _
    $region23: #{tpu_custom_call.1} parent=1 // pred_check_branch
      %24 = sbr.rel (0) target = $region25
    $region24: #{tpu_custom_call.1} parent=1 // pred_region
      _
    $region25: #{tpu_custom_call.1} parent=1 // pred_fallthru
      _
    // Predicated region
    $region26: #{tpu_custom_call.1} parent=1 // pred_check
      _
    $region27: #{tpu_custom_call.1} parent=1 // pred_check_branch
      %26 = sbr.rel (0) target = $region29
    $region28: #{tpu_custom_call.1} parent=1 // pred_region
      _
    $region29: #{tpu_custom_call.1} parent=1 // pred_fallthru
      _
    %v27 = vld [vmem:[%s0] sm:$0x3f]
    %v28 = vld [vmem:[%s1] sm:$0xff]
    %v29 = vld [vmem:[%s1 + $0x8] sm:$0xff]
    %v30 = vld [vmem:[%s1 + $0x10] sm:$0xff]
    %v31 = vld [vmem:[%s1 + $0x18] sm:$0xff]
    %v32 = vld [vmem:[%s1 + $0x20] sm:$0xff]
    %v33 = vld [vmem:[%s1 + $0x28] sm:$0xff]
    %v34 = vld [vmem:[%s1 + $0x30] sm:$0xff]
    %v35 = vld [vmem:[%s1 + $0x38] sm:$0xff]
    %v36 = vld [vmem:[%s1 + $0x40] sm:$0xff]
    %v37 = vld [vmem:[%s1 + $0x48] sm:$0xff]
    %v38 = vld [vmem:[%s1 + $0x50] sm:$0xff]
    %v39 = vld [vmem:[%s1 + $0x58] sm:$0xff]
    %v40 = vld [vmem:[%s1 + $0x60] sm:$0xff]
    %v41 = vld [vmem:[%s1 + $0x68] sm:$0xff]
    %v42 = vld [vmem:[%s1 + $0x70] sm:$0xff]
    %v43 = vld [vmem:[%s1 + $0x78] sm:$0xff]
    %v44 = vld [vmem:[%s1 + $0x80] sm:$0xff]
    %v45 = vld [vmem:[%s1 + $0x88] sm:$0xff]
    %v46 = vld [vmem:[%s1 + $0x90] sm:$0xff]
    %v47 = vld [vmem:[%s1 + $0x98] sm:$0xff]
    %v48 = vld [vmem:[%s1 + $0xa0] sm:$0xff]
    %v49 = vld [vmem:[%s1 + $0xa8] sm:$0xff]
    %v50 = vld [vmem:[%s1 + $0xb0] sm:$0xff]
    %v51 = vld [vmem:[%s1 + $0xb8] sm:$0xff]
    %v52 = vld [vmem:[%s1 + $0xc0] sm:$0xff]
    %v53 = vld [vmem:[%s1 + $0xc8] sm:$0xff]
    %v54 = vld [vmem:[%s1 + $0xd0] sm:$0xff]
    %v55 = vld [vmem:[%s1 + $0xd8] sm:$0xff]
    %v56 = vld [vmem:[%s1 + $0xe0] sm:$0xff]
    %v57 = vld [vmem:[%s1 + $0xe8] sm:$0xff]
    %v58 = vld [vmem:[%s1 + $0xf0] sm:$0xff]
    %v59 = vld [vmem:[%s1 + $0xf8] sm:$0xff]
    %v60 = vld [vmem:[%s2] sm:$0xff]
    %v61 = vld [vmem:[%s2 + $0x8] sm:$0xff]
    %v62 = vld [vmem:[%s2 + $0x10] sm:$0xff]
    %v63 = vld [vmem:[%s2 + $0x18] sm:$0xff]
    %v64 = vld [vmem:[%s2 + $0x20] sm:$0xff]
    %v65 = vld [vmem:[%s2 + $0x28] sm:$0xff]
    %v66 = vld [vmem:[%s2 + $0x30] sm:$0xff]
    %v67 = vld [vmem:[%s2 + $0x38] sm:$0xff]
    %v68 = vld [vmem:[%s2 + $0x40] sm:$0xff]
    %v69 = vld [vmem:[%s2 + $0x48] sm:$0xff]
    %v70 = vld [vmem:[%s2 + $0x50] sm:$0xff]
    %v71 = vld [vmem:[%s2 + $0x58] sm:$0xff]
    %v72 = vld [vmem:[%s2 + $0x60] sm:$0xff]
    %v73 = vld [vmem:[%s2 + $0x68] sm:$0xff]
    %v74 = vld [vmem:[%s2 + $0x70] sm:$0xff]
    %v75 = vld [vmem:[%s2 + $0x78] sm:$0xff]
    %v76 = vld [vmem:[%s2 + $0x80] sm:$0xff]
    %v77 = vld [vmem:[%s2 + $0x88] sm:$0xff]
    %v78 = vld [vmem:[%s2 + $0x90] sm:$0xff]
    %v79 = vld [vmem:[%s2 + $0x98] sm:$0xff]
    %v80 = vld [vmem:[%s2 + $0xa0] sm:$0xff]
    %v81 = vld [vmem:[%s2 + $0xa8] sm:$0xff]
    %v82 = vld [vmem:[%s2 + $0xb0] sm:$0xff]
    %v83 = vld [vmem:[%s2 + $0xb8] sm:$0xff]
    %v84 = vld [vmem:[%s2 + $0xc0] sm:$0xff]
    %v85 = vld [vmem:[%s2 + $0xc8] sm:$0xff]
    %v86 = vld [vmem:[%s2 + $0xd0] sm:$0xff]
    %v87 = vld [vmem:[%s2 + $0xd8] sm:$0xff]
    %v88 = vld [vmem:[%s2 + $0xe0] sm:$0xff]
    %v89 = vld [vmem:[%s2 + $0xe8] sm:$0xff]
    %v90 = vld [vmem:[%s2 + $0xf0] sm:$0xff]
    %v91 = vld [vmem:[%s2 + $0xf8] sm:$0xff]
    %93 = vset.pattern.permute.xlu0 0
    %94 = vperm.xlu0 %93, %v28
    %v95 = vpop.permute.xlu0 %94
    %98 = vset.pattern.permute.xlu0 0
    %99 = vperm.xlu0 %98, %v29
    %v100 = vpop.permute.xlu0 %99
    %103 = vset.pattern.permute.xlu0 0
    %104 = vperm.xlu0 %103, %v30
    %v105 = vpop.permute.xlu0 %104
    %108 = vset.pattern.permute.xlu0 0
    %109 = vperm.xlu0 %108, %v31
    %v110 = vpop.permute.xlu0 %109
    %113 = vset.pattern.permute.xlu0 0
    %114 = vperm.xlu0 %113, %v32
    %v115 = vpop.permute.xlu0 %114
    %118 = vset.pattern.permute.xlu0 0
    %119 = vperm.xlu0 %118, %v33
    %v120 = vpop.permute.xlu0 %119
    %123 = vset.pattern.permute.xlu0 0
    %124 = vperm.xlu0 %123, %v34
    %v125 = vpop.permute.xlu0 %124
    %128 = vset.pattern.permute.xlu0 0
    %129 = vperm.xlu0 %128, %v35
    %v130 = vpop.permute.xlu0 %129
    %133 = vset.pattern.permute.xlu0 0
    %134 = vperm.xlu0 %133, %v36
    %v135 = vpop.permute.xlu0 %134
    %138 = vset.pattern.permute.xlu0 0
    %139 = vperm.xlu0 %138, %v37
    %v140 = vpop.permute.xlu0 %139
    %143 = vset.pattern.permute.xlu0 0
    %144 = vperm.xlu0 %143, %v38
    %v145 = vpop.permute.xlu0 %144
    %148 = vset.pattern.permute.xlu0 0
    %149 = vperm.xlu0 %148, %v39
    %v150 = vpop.permute.xlu0 %149
    %153 = vset.pattern.permute.xlu0 0
    %154 = vperm.xlu0 %153, %v40
    %v155 = vpop.permute.xlu0 %154
    %158 = vset.pattern.permute.xlu0 0
    %159 = vperm.xlu0 %158, %v41
    %v160 = vpop.permute.xlu0 %159
    %163 = vset.pattern.permute.xlu0 0
    %164 = vperm.xlu0 %163, %v42
    %v165 = vpop.permute.xlu0 %164
    %168 = vset.pattern.permute.xlu0 0
    %169 = vperm.xlu0 %168, %v43
    %v170 = vpop.permute.xlu0 %169
    %173 = vset.pattern.permute.xlu0 0
    %174 = vperm.xlu0 %173, %v44
    %v175 = vpop.permute.xlu0 %174
    %178 = vset.pattern.permute.xlu0 0
    %179 = vperm.xlu0 %178, %v45
    %v180 = vpop.permute.xlu0 %179
    %183 = vset.pattern.permute.xlu0 0
    %184 = vperm.xlu0 %183, %v46
    %v185 = vpop.permute.xlu0 %184
    %188 = vset.pattern.permute.xlu0 0
    %189 = vperm.xlu0 %188, %v47
    %v190 = vpop.permute.xlu0 %189
    %193 = vset.pattern.permute.xlu0 0
    %194 = vperm.xlu0 %193, %v48
    %v195 = vpop.permute.xlu0 %194
    %198 = vset.pattern.permute.xlu0 0
    %199 = vperm.xlu0 %198, %v49
    %v200 = vpop.permute.xlu0 %199
    %203 = vset.pattern.permute.xlu0 0
    %204 = vperm.xlu0 %203, %v50
    %v205 = vpop.permute.xlu0 %204
    %208 = vset.pattern.permute.xlu0 0
    %209 = vperm.xlu0 %208, %v51
    %v210 = vpop.permute.xlu0 %209
    %213 = vset.pattern.permute.xlu0 0
    %214 = vperm.xlu0 %213, %v52
    %v215 = vpop.permute.xlu0 %214
    %218 = vset.pattern.permute.xlu0 0
    %219 = vperm.xlu0 %218, %v53
    %v220 = vpop.permute.xlu0 %219
    %223 = vset.pattern.permute.xlu0 0
    %224 = vperm.xlu0 %223, %v54
    %v225 = vpop.permute.xlu0 %224
    %228 = vset.pattern.permute.xlu0 0
    %229 = vperm.xlu0 %228, %v55
    %v230 = vpop.permute.xlu0 %229
    %233 = vset.pattern.permute.xlu0 0
    %234 = vperm.xlu0 %233, %v56
    %v235 = vpop.permute.xlu0 %234
    %238 = vset.pattern.permute.xlu0 0
    %239 = vperm.xlu0 %238, %v57
    %v240 = vpop.permute.xlu0 %239
    %243 = vset.pattern.permute.xlu0 0
    %244 = vperm.xlu0 %243, %v58
    %v245 = vpop.permute.xlu0 %244
    %248 = vset.pattern.permute.xlu0 0
    %249 = vperm.xlu0 %248, %v59
    %v250 = vpop.permute.xlu0 %249
    %v252 = vlaneseq
    %v253 = vshrl.u32 %v252, 7
    %v254 = vsub.s32 0, %v253
    %v255 = vrot.slane %v27, %v254
    %v256 = vmul.f32 %v95, %v255
    %v257 = vmul.f32 %v100, %v255
    %v258 = vmul.f32 %v105, %v255
    %v259 = vmul.f32 %v110, %v255
    %v260 = vmul.f32 %v115, %v255
    %v261 = vmul.f32 %v120, %v255
    %v262 = vmul.f32 %v125, %v255
    %v263 = vmul.f32 %v130, %v255
    %v264 = vmul.f32 %v135, %v255
    %v265 = vmul.f32 %v140, %v255
    %v266 = vmul.f32 %v145, %v255
    %v267 = vmul.f32 %v150, %v255
    %v268 = vmul.f32 %v155, %v255
    %v269 = vmul.f32 %v160, %v255
    %v270 = vmul.f32 %v165, %v255
    %v271 = vmul.f32 %v170, %v255
    %v272 = vmul.f32 %v175, %v255
    %v273 = vmul.f32 %v180, %v255
    %v274 = vmul.f32 %v185, %v255
    %v275 = vmul.f32 %v190, %v255
    %v276 = vmul.f32 %v195, %v255
    %v277 = vmul.f32 %v200, %v255
    %v278 = vmul.f32 %v205, %v255
    %v279 = vmul.f32 %v210, %v255
    %v280 = vmul.f32 %v215, %v255
    %v281 = vmul.f32 %v220, %v255
    %v282 = vmul.f32 %v225, %v255
    %v283 = vmul.f32 %v230, %v255
    %v284 = vmul.f32 %v235, %v255
    %v285 = vmul.f32 %v240, %v255
    %v286 = vmul.f32 %v245, %v255
    %v287 = vmul.f32 %v250, %v255
    %289 = vset.pattern.permute.xlu0 0
    %290 = vperm.xlu0 %289, %v60
    %v291 = vpop.permute.xlu0 %290
    %294 = vset.pattern.permute.xlu0 0
    %295 = vperm.xlu0 %294, %v61
    %v296 = vpop.permute.xlu0 %295
    %299 = vset.pattern.permute.xlu0 0
    %300 = vperm.xlu0 %299, %v62
    %v301 = vpop.permute.xlu0 %300
    %304 = vset.pattern.permute.xlu0 0
    %305 = vperm.xlu0 %304, %v63
    %v306 = vpop.permute.xlu0 %305
    %309 = vset.pattern.permute.xlu0 0
    %310 = vperm.xlu0 %309, %v64
    %v311 = vpop.permute.xlu0 %310
    %314 = vset.pattern.permute.xlu0 0
    %315 = vperm.xlu0 %314, %v65
    %v316 = vpop.permute.xlu0 %315
    %319 = vset.pattern.permute.xlu0 0
    %320 = vperm.xlu0 %319, %v66
    %v321 = vpop.permute.xlu0 %320
    %324 = vset.pattern.permute.xlu0 0
    %325 = vperm.xlu0 %324, %v67
    %v326 = vpop.permute.xlu0 %325
    %329 = vset.pattern.permute.xlu0 0
    %330 = vperm.xlu0 %329, %v68
    %v331 = vpop.permute.xlu0 %330
    %334 = vset.pattern.permute.xlu0 0
    %335 = vperm.xlu0 %334, %v69
    %v336 = vpop.permute.xlu0 %335
    %339 = vset.pattern.permute.xlu0 0
    %340 = vperm.xlu0 %339, %v70
    %v341 = vpop.permute.xlu0 %340
    %344 = vset.pattern.permute.xlu0 0
    %345 = vperm.xlu0 %344, %v71
    %v346 = vpop.permute.xlu0 %345
    %349 = vset.pattern.permute.xlu0 0
    %350 = vperm.xlu0 %349, %v72
    %v351 = vpop.permute.xlu0 %350
    %354 = vset.pattern.permute.xlu0 0
    %355 = vperm.xlu0 %354, %v73
    %v356 = vpop.permute.xlu0 %355
    %359 = vset.pattern.permute.xlu0 0
    %360 = vperm.xlu0 %359, %v74
    %v361 = vpop.permute.xlu0 %360
    %364 = vset.pattern.permute.xlu0 0
    %365 = vperm.xlu0 %364, %v75
    %v366 = vpop.permute.xlu0 %365
    %369 = vset.pattern.permute.xlu0 0
    %370 = vperm.xlu0 %369, %v76
    %v371 = vpop.permute.xlu0 %370
    %374 = vset.pattern.permute.xlu0 0
    %375 = vperm.xlu0 %374, %v77
    %v376 = vpop.permute.xlu0 %375
    %379 = vset.pattern.permute.xlu0 0
    %380 = vperm.xlu0 %379, %v78
    %v381 = vpop.permute.xlu0 %380
    %384 = vset.pattern.permute.xlu0 0
    %385 = vperm.xlu0 %384, %v79
    %v386 = vpop.permute.xlu0 %385
    %389 = vset.pattern.permute.xlu0 0
    %390 = vperm.xlu0 %389, %v80
    %v391 = vpop.permute.xlu0 %390
    %394 = vset.pattern.permute.xlu0 0
    %395 = vperm.xlu0 %394, %v81
    %v396 = vpop.permute.xlu0 %395
    %399 = vset.pattern.permute.xlu0 0
    %400 = vperm.xlu0 %399, %v82
    %v401 = vpop.permute.xlu0 %400
    %404 = vset.pattern.permute.xlu0 0
    %405 = vperm.xlu0 %404, %v83
    %v406 = vpop.permute.xlu0 %405
    %409 = vset.pattern.permute.xlu0 0
    %410 = vperm.xlu0 %409, %v84
    %v411 = vpop.permute.xlu0 %410
    %414 = vset.pattern.permute.xlu0 0
    %415 = vperm.xlu0 %414, %v85
    %v416 = vpop.permute.xlu0 %415
    %419 = vset.pattern.permute.xlu0 0
    %420 = vperm.xlu0 %419, %v86
    %v421 = vpop.permute.xlu0 %420
    %424 = vset.pattern.permute.xlu0 0
    %425 = vperm.xlu0 %424, %v87
    %v426 = vpop.permute.xlu0 %425
    %429 = vset.pattern.permute.xlu0 0
    %430 = vperm.xlu0 %429, %v88
    %v431 = vpop.permute.xlu0 %430
    %434 = vset.pattern.permute.xlu0 0
    %435 = vperm.xlu0 %434, %v89
    %v436 = vpop.permute.xlu0 %435
    %439 = vset.pattern.permute.xlu0 0
    %440 = vperm.xlu0 %439, %v90
    %v441 = vpop.permute.xlu0 %440
    %444 = vset.pattern.permute.xlu0 0
    %445 = vperm.xlu0 %444, %v91
    %v446 = vpop.permute.xlu0 %445
    %v448 = vadd.f32 %v291, %v256
    %v449 = vadd.f32 %v296, %v257
    %v450 = vadd.f32 %v301, %v258
    %v451 = vadd.f32 %v306, %v259
    %v452 = vadd.f32 %v311, %v260
    %v453 = vadd.f32 %v316, %v261
    %v454 = vadd.f32 %v321, %v262
    %v455 = vadd.f32 %v326, %v263
    %v456 = vadd.f32 %v331, %v264
    %v457 = vadd.f32 %v336, %v265
    %v458 = vadd.f32 %v341, %v266
    %v459 = vadd.f32 %v346, %v267
    %v460 = vadd.f32 %v351, %v268
    %v461 = vadd.f32 %v356, %v269
    %v462 = vadd.f32 %v361, %v270
    %v463 = vadd.f32 %v366, %v271
    %v464 = vadd.f32 %v371, %v272
    %v465 = vadd.f32 %v376, %v273
    %v466 = vadd.f32 %v381, %v274
    %v467 = vadd.f32 %v386, %v275
    %v468 = vadd.f32 %v391, %v276
    %v469 = vadd.f32 %v396, %v277
    %v470 = vadd.f32 %v401, %v278
    %v471 = vadd.f32 %v406, %v279
    %v472 = vadd.f32 %v411, %v280
    %v473 = vadd.f32 %v416, %v281
    %v474 = vadd.f32 %v421, %v282
    %v475 = vadd.f32 %v426, %v283
    %v476 = vadd.f32 %v431, %v284
    %v477 = vadd.f32 %v436, %v285
    %v478 = vadd.f32 %v441, %v286
    %v479 = vadd.f32 %v446, %v287
    %480 = vset.pattern.permute.xlu0 1
    %481 = vperm.xlu0 %480, %v28
    %v482 = vpop.permute.xlu0 %481
    %484 = vset.pattern.permute.xlu0 1
    %485 = vperm.xlu0 %484, %v29
    %v486 = vpop.permute.xlu0 %485
    %488 = vset.pattern.permute.xlu0 1
    %489 = vperm.xlu0 %488, %v30
    %v490 = vpop.permute.xlu0 %489
    %492 = vset.pattern.permute.xlu0 1
    %493 = vperm.xlu0 %492, %v31
    %v494 = vpop.permute.xlu0 %493
    %496 = vset.pattern.permute.xlu0 1
    %497 = vperm.xlu0 %496, %v32
    %v498 = vpop.permute.xlu0 %497
    %500 = vset.pattern.permute.xlu0 1
    %501 = vperm.xlu0 %500, %v33
    %v502 = vpop.permute.xlu0 %501
    %504 = vset.pattern.permute.xlu0 1
    %505 = vperm.xlu0 %504, %v34
    %v506 = vpop.permute.xlu0 %505
    %508 = vset.pattern.permute.xlu0 1
    %509 = vperm.xlu0 %508, %v35
    %v510 = vpop.permute.xlu0 %509
    %512 = vset.pattern.permute.xlu0 1
    %513 = vperm.xlu0 %512, %v36
    %v514 = vpop.permute.xlu0 %513
    %516 = vset.pattern.permute.xlu0 1
    %517 = vperm.xlu0 %516, %v37
    %v518 = vpop.permute.xlu0 %517
    %520 = vset.pattern.permute.xlu0 1
    %521 = vperm.xlu0 %520, %v38
    %v522 = vpop.permute.xlu0 %521
    %524 = vset.pattern.permute.xlu0 1
    %525 = vperm.xlu0 %524, %v39
    %v526 = vpop.permute.xlu0 %525
    %528 = vset.pattern.permute.xlu0 1
    %529 = vperm.xlu0 %528, %v40
    %v530 = vpop.permute.xlu0 %529
    %532 = vset.pattern.permute.xlu0 1
    %533 = vperm.xlu0 %532, %v41
    %v534 = vpop.permute.xlu0 %533
    %536 = vset.pattern.permute.xlu0 1
    %537 = vperm.xlu0 %536, %v42
    %v538 = vpop.permute.xlu0 %537
    %540 = vset.pattern.permute.xlu0 1
    %541 = vperm.xlu0 %540, %v43
    %v542 = vpop.permute.xlu0 %541
    %544 = vset.pattern.permute.xlu0 1
    %545 = vperm.xlu0 %544, %v44
    %v546 = vpop.permute.xlu0 %545
    %548 = vset.pattern.permute.xlu0 1
    %549 = vperm.xlu0 %548, %v45
    %v550 = vpop.permute.xlu0 %549
    %552 = vset.pattern.permute.xlu0 1
    %553 = vperm.xlu0 %552, %v46
    %v554 = vpop.permute.xlu0 %553
    %556 = vset.pattern.permute.xlu0 1
    %557 = vperm.xlu0 %556, %v47
    %v558 = vpop.permute.xlu0 %557
    %560 = vset.pattern.permute.xlu0 1
    %561 = vperm.xlu0 %560, %v48
    %v562 = vpop.permute.xlu0 %561
    %564 = vset.pattern.permute.xlu0 1
    %565 = vperm.xlu0 %564, %v49
    %v566 = vpop.permute.xlu0 %565
    %568 = vset.pattern.permute.xlu0 1
    %569 = vperm.xlu0 %568, %v50
    %v570 = vpop.permute.xlu0 %569
    %572 = vset.pattern.permute.xlu0 1
    %573 = vperm.xlu0 %572, %v51
    %v574 = vpop.permute.xlu0 %573
    %576 = vset.pattern.permute.xlu0 1
    %577 = vperm.xlu0 %576, %v52
    %v578 = vpop.permute.xlu0 %577
    %580 = vset.pattern.permute.xlu0 1
    %581 = vperm.xlu0 %580, %v53
    %v582 = vpop.permute.xlu0 %581
    %584 = vset.pattern.permute.xlu0 1
    %585 = vperm.xlu0 %584, %v54
    %v586 = vpop.permute.xlu0 %585
    %588 = vset.pattern.permute.xlu0 1
    %589 = vperm.xlu0 %588, %v55
    %v590 = vpop.permute.xlu0 %589
    %592 = vset.pattern.permute.xlu0 1
    %593 = vperm.xlu0 %592, %v56
    %v594 = vpop.permute.xlu0 %593
    %596 = vset.pattern.permute.xlu0 1
    %597 = vperm.xlu0 %596, %v57
    %v598 = vpop.permute.xlu0 %597
    %600 = vset.pattern.permute.xlu0 1
    %601 = vperm.xlu0 %600, %v58
    %v602 = vpop.permute.xlu0 %601
    %604 = vset.pattern.permute.xlu0 1
    %605 = vperm.xlu0 %604, %v59
    %v606 = vpop.permute.xlu0 %605
    %v608 = vlaneseq
    %v609 = vshrl.u32 %v608, 7
    %v610 = vsub.s32 1, %v609
    %v611 = vrot.slane %v27, %v610
    %v612 = vmul.f32 %v482, %v611
    %v613 = vmul.f32 %v486, %v611
    %v614 = vmul.f32 %v490, %v611
    %v615 = vmul.f32 %v494, %v611
    %v616 = vmul.f32 %v498, %v611
    %v617 = vmul.f32 %v502, %v611
    %v618 = vmul.f32 %v506, %v611
    %v619 = vmul.f32 %v510, %v611
    %v620 = vmul.f32 %v514, %v611
    %v621 = vmul.f32 %v518, %v611
    %v622 = vmul.f32 %v522, %v611
    %v623 = vmul.f32 %v526, %v611
    %v624 = vmul.f32 %v530, %v611
    %v625 = vmul.f32 %v534, %v611
    %v626 = vmul.f32 %v538, %v611
    %v627 = vmul.f32 %v542, %v611
    %v628 = vmul.f32 %v546, %v611
    %v629 = vmul.f32 %v550, %v611
    %v630 = vmul.f32 %v554, %v611
    %v631 = vmul.f32 %v558, %v611
    %v632 = vmul.f32 %v562, %v611
    %v633 = vmul.f32 %v566, %v611
    %v634 = vmul.f32 %v570, %v611
    %v635 = vmul.f32 %v574, %v611
    %v636 = vmul.f32 %v578, %v611
    %v637 = vmul.f32 %v582, %v611
    %v638 = vmul.f32 %v586, %v611
    %v639 = vmul.f32 %v590, %v611
    %v640 = vmul.f32 %v594, %v611
    %v641 = vmul.f32 %v598, %v611
    %v642 = vmul.f32 %v602, %v611
    %v643 = vmul.f32 %v606, %v611
    %v644 = vadd.f32 %v448, %v612
    %v645 = vadd.f32 %v449, %v613
    %v646 = vadd.f32 %v450, %v614
    %v647 = vadd.f32 %v451, %v615
    %v648 = vadd.f32 %v452, %v616
    %v649 = vadd.f32 %v453, %v617
    %v650 = vadd.f32 %v454, %v618
    %v651 = vadd.f32 %v455, %v619
    %v652 = vadd.f32 %v456, %v620
    %v653 = vadd.f32 %v457, %v621
    %v654 = vadd.f32 %v458, %v622
    %v655 = vadd.f32 %v459, %v623
    %v656 = vadd.f32 %v460, %v624
    %v657 = vadd.f32 %v461, %v625
    %v658 = vadd.f32 %v462, %v626
    %v659 = vadd.f32 %v463, %v627
    %v660 = vadd.f32 %v464, %v628
    %v661 = vadd.f32 %v465, %v629
    %v662 = vadd.f32 %v466, %v630
    %v663 = vadd.f32 %v467, %v631
    %v664 = vadd.f32 %v468, %v632
    %v665 = vadd.f32 %v469, %v633
    %v666 = vadd.f32 %v470, %v634
    %v667 = vadd.f32 %v471, %v635
    %v668 = vadd.f32 %v472, %v636
    %v669 = vadd.f32 %v473, %v637
    %v670 = vadd.f32 %v474, %v638
    %v671 = vadd.f32 %v475, %v639
    %v672 = vadd.f32 %v476, %v640
    %v673 = vadd.f32 %v477, %v641
    %v674 = vadd.f32 %v478, %v642
    %v675 = vadd.f32 %v479, %v643
    %676 = vset.pattern.permute.xlu0 2
    %677 = vperm.xlu0 %676, %v28
    %v678 = vpop.permute.xlu0 %677
    %680 = vset.pattern.permute.xlu0 2
    %681 = vperm.xlu0 %680, %v29
    %v682 = vpop.permute.xlu0 %681
    %684 = vset.pattern.permute.xlu0 2
    %685 = vperm.xlu0 %684, %v30
    %v686 = vpop.permute.xlu0 %685
    %688 = vset.pattern.permute.xlu0 2
    %689 = vperm.xlu0 %688, %v31
    %v690 = vpop.permute.xlu0 %689
    %692 = vset.pattern.permute.xlu0 2
    %693 = vperm.xlu0 %692, %v32
    %v694 = vpop.permute.xlu0 %693
    %696 = vset.pattern.permute.xlu0 2
    %697 = vperm.xlu0 %696, %v33
    %v698 = vpop.permute.xlu0 %697
    %700 = vset.pattern.permute.xlu0 2
    %701 = vperm.xlu0 %700, %v34
    %v702 = vpop.permute.xlu0 %701
    %704 = vset.pattern.permute.xlu0 2
    %705 = vperm.xlu0 %704, %v35
    %v706 = vpop.permute.xlu0 %705
    %708 = vset.pattern.permute.xlu0 2
    %709 = vperm.xlu0 %708, %v36
    %v710 = vpop.permute.xlu0 %709
    %712 = vset.pattern.permute.xlu0 2
    %713 = vperm.xlu0 %712, %v37
    %v714 = vpop.permute.xlu0 %713
    %716 = vset.pattern.permute.xlu0 2
    %717 = vperm.xlu0 %716, %v38
    %v718 = vpop.permute.xlu0 %717
    %720 = vset.pattern.permute.xlu0 2
    %721 = vperm.xlu0 %720, %v39
    %v722 = vpop.permute.xlu0 %721
    %724 = vset.pattern.permute.xlu0 2
    %725 = vperm.xlu0 %724, %v40
    %v726 = vpop.permute.xlu0 %725
    %728 = vset.pattern.permute.xlu0 2
    %729 = vperm.xlu0 %728, %v41
    %v730 = vpop.permute.xlu0 %729
    %732 = vset.pattern.permute.xlu0 2
    %733 = vperm.xlu0 %732, %v42
    %v734 = vpop.permute.xlu0 %733
    %736 = vset.pattern.permute.xlu0 2
    %737 = vperm.xlu0 %736, %v43
    %v738 = vpop.permute.xlu0 %737
    %740 = vset.pattern.permute.xlu0 2
    %741 = vperm.xlu0 %740, %v44
    %v742 = vpop.permute.xlu0 %741
    %744 = vset.pattern.permute.xlu0 2
    %745 = vperm.xlu0 %744, %v45
    %v746 = vpop.permute.xlu0 %745
    %748 = vset.pattern.permute.xlu0 2
    %749 = vperm.xlu0 %748, %v46
    %v750 = vpop.permute.xlu0 %749
    %752 = vset.pattern.permute.xlu0 2
    %753 = vperm.xlu0 %752, %v47
    %v754 = vpop.permute.xlu0 %753
    %756 = vset.pattern.permute.xlu0 2
    %757 = vperm.xlu0 %756, %v48
    %v758 = vpop.permute.xlu0 %757
    %760 = vset.pattern.permute.xlu0 2
    %761 = vperm.xlu0 %760, %v49
    %v762 = vpop.permute.xlu0 %761
    %764 = vset.pattern.permute.xlu0 2
    %765 = vperm.xlu0 %764, %v50
    %v766 = vpop.permute.xlu0 %765
    %768 = vset.pattern.permute.xlu0 2
    %769 = vperm.xlu0 %768, %v51
    %v770 = vpop.permute.xlu0 %769
    %772 = vset.pattern.permute.xlu0 2
    %773 = vperm.xlu0 %772, %v52
    %v774 = vpop.permute.xlu0 %773
    %776 = vset.pattern.permute.xlu0 2
    %777 = vperm.xlu0 %776, %v53
    %v778 = vpop.permute.xlu0 %777
    %780 = vset.pattern.permute.xlu0 2
    %781 = vperm.xlu0 %780, %v54
    %v782 = vpop.permute.xlu0 %781
    %784 = vset.pattern.permute.xlu0 2
    %785 = vperm.xlu0 %784, %v55
    %v786 = vpop.permute.xlu0 %785
    %788 = vset.pattern.permute.xlu0 2
    %789 = vperm.xlu0 %788, %v56
    %v790 = vpop.permute.xlu0 %789
    %792 = vset.pattern.permute.xlu0 2
    %793 = vperm.xlu0 %792, %v57
    %v794 = vpop.permute.xlu0 %793
    %796 = vset.pattern.permute.xlu0 2
    %797 = vperm.xlu0 %796, %v58
    %v798 = vpop.permute.xlu0 %797
    %800 = vset.pattern.permute.xlu0 2
    %801 = vperm.xlu0 %800, %v59
    %v802 = vpop.permute.xlu0 %801
    %v804 = vlaneseq
    %v805 = vshrl.u32 %v804, 7
    %v806 = vsub.s32 2, %v805
    %v807 = vrot.slane %v27, %v806
    %v808 = vmul.f32 %v678, %v807
    %v809 = vmul.f32 %v682, %v807
    %v810 = vmul.f32 %v686, %v807
    %v811 = vmul.f32 %v690, %v807
    %v812 = vmul.f32 %v694, %v807
    %v813 = vmul.f32 %v698, %v807
    %v814 = vmul.f32 %v702, %v807
    %v815 = vmul.f32 %v706, %v807
    %v816 = vmul.f32 %v710, %v807
    %v817 = vmul.f32 %v714, %v807
    %v818 = vmul.f32 %v718, %v807
    %v819 = vmul.f32 %v722, %v807
    %v820 = vmul.f32 %v726, %v807
    %v821 = vmul.f32 %v730, %v807
    %v822 = vmul.f32 %v734, %v807
    %v823 = vmul.f32 %v738, %v807
    %v824 = vmul.f32 %v742, %v807
    %v825 = vmul.f32 %v746, %v807
    %v826 = vmul.f32 %v750, %v807
    %v827 = vmul.f32 %v754, %v807
    %v828 = vmul.f32 %v758, %v807
    %v829 = vmul.f32 %v762, %v807
    %v830 = vmul.f32 %v766, %v807
    %v831 = vmul.f32 %v770, %v807
    %v832 = vmul.f32 %v774, %v807
    %v833 = vmul.f32 %v778, %v807
    %v834 = vmul.f32 %v782, %v807
    %v835 = vmul.f32 %v786, %v807
    %v836 = vmul.f32 %v790, %v807
    %v837 = vmul.f32 %v794, %v807
    %v838 = vmul.f32 %v798, %v807
    %v839 = vmul.f32 %v802, %v807
    %v840 = vadd.f32 %v644, %v808
    %v841 = vadd.f32 %v645, %v809
    %v842 = vadd.f32 %v646, %v810
    %v843 = vadd.f32 %v647, %v811
    %v844 = vadd.f32 %v648, %v812
    %v845 = vadd.f32 %v649, %v813
    %v846 = vadd.f32 %v650, %v814
    %v847 = vadd.f32 %v651, %v815
    %v848 = vadd.f32 %v652, %v816
    %v849 = vadd.f32 %v653, %v817
    %v850 = vadd.f32 %v654, %v818
    %v851 = vadd.f32 %v655, %v819
    %v852 = vadd.f32 %v656, %v820
    %v853 = vadd.f32 %v657, %v821
    %v854 = vadd.f32 %v658, %v822
    %v855 = vadd.f32 %v659, %v823
    %v856 = vadd.f32 %v660, %v824
    %v857 = vadd.f32 %v661, %v825
    %v858 = vadd.f32 %v662, %v826
    %v859 = vadd.f32 %v663, %v827
    %v860 = vadd.f32 %v664, %v828
    %v861 = vadd.f32 %v665, %v829
    %v862 = vadd.f32 %v666, %v830
    %v863 = vadd.f32 %v667, %v831
    %v864 = vadd.f32 %v668, %v832
    %v865 = vadd.f32 %v669, %v833
    %v866 = vadd.f32 %v670, %v834
    %v867 = vadd.f32 %v671, %v835
    %v868 = vadd.f32 %v672, %v836
    %v869 = vadd.f32 %v673, %v837
    %v870 = vadd.f32 %v674, %v838
    %v871 = vadd.f32 %v675, %v839
    %872 = vset.pattern.permute.xlu0 3
    %873 = vperm.xlu0 %872, %v28
    %v874 = vpop.permute.xlu0 %873
    %876 = vset.pattern.permute.xlu0 3
    %877 = vperm.xlu0 %876, %v29
    %v878 = vpop.permute.xlu0 %877
    %880 = vset.pattern.permute.xlu0 3
    %881 = vperm.xlu0 %880, %v30
    %v882 = vpop.permute.xlu0 %881
    %884 = vset.pattern.permute.xlu0 3
    %885 = vperm.xlu0 %884, %v31
    %v886 = vpop.permute.xlu0 %885
    %888 = vset.pattern.permute.xlu0 3
    %889 = vperm.xlu0 %888, %v32
    %v890 = vpop.permute.xlu0 %889
    %892 = vset.pattern.permute.xlu0 3
    %893 = vperm.xlu0 %892, %v33
    %v894 = vpop.permute.xlu0 %893
    %896 = vset.pattern.permute.xlu0 3
    %897 = vperm.xlu0 %896, %v34
    %v898 = vpop.permute.xlu0 %897
    %900 = vset.pattern.permute.xlu0 3
    %901 = vperm.xlu0 %900, %v35
    %v902 = vpop.permute.xlu0 %901
    %904 = vset.pattern.permute.xlu0 3
    %905 = vperm.xlu0 %904, %v36
    %v906 = vpop.permute.xlu0 %905
    %908 = vset.pattern.permute.xlu0 3
    %909 = vperm.xlu0 %908, %v37
    %v910 = vpop.permute.xlu0 %909
    %912 = vset.pattern.permute.xlu0 3
    %913 = vperm.xlu0 %912, %v38
    %v914 = vpop.permute.xlu0 %913
    %916 = vset.pattern.permute.xlu0 3
    %917 = vperm.xlu0 %916, %v39
    %v918 = vpop.permute.xlu0 %917
    %920 = vset.pattern.permute.xlu0 3
    %921 = vperm.xlu0 %920, %v40
    %v922 = vpop.permute.xlu0 %921
    %924 = vset.pattern.permute.xlu0 3
    %925 = vperm.xlu0 %924, %v41
    %v926 = vpop.permute.xlu0 %925
    %928 = vset.pattern.permute.xlu0 3
    %929 = vperm.xlu0 %928, %v42
    %v930 = vpop.permute.xlu0 %929
    %932 = vset.pattern.permute.xlu0 3
    %933 = vperm.xlu0 %932, %v43
    %v934 = vpop.permute.xlu0 %933
    %936 = vset.pattern.permute.xlu0 3
    %937 = vperm.xlu0 %936, %v44
    %v938 = vpop.permute.xlu0 %937
    %940 = vset.pattern.permute.xlu0 3
    %941 = vperm.xlu0 %940, %v45
    %v942 = vpop.permute.xlu0 %941
    %944 = vset.pattern.permute.xlu0 3
    %945 = vperm.xlu0 %944, %v46
    %v946 = vpop.permute.xlu0 %945
    %948 = vset.pattern.permute.xlu0 3
    %949 = vperm.xlu0 %948, %v47
    %v950 = vpop.permute.xlu0 %949
    %952 = vset.pattern.permute.xlu0 3
    %953 = vperm.xlu0 %952, %v48
    %v954 = vpop.permute.xlu0 %953
    %956 = vset.pattern.permute.xlu0 3
    %957 = vperm.xlu0 %956, %v49
    %v958 = vpop.permute.xlu0 %957
    %960 = vset.pattern.permute.xlu0 3
    %961 = vperm.xlu0 %960, %v50
    %v962 = vpop.permute.xlu0 %961
    %964 = vset.pattern.permute.xlu0 3
    %965 = vperm.xlu0 %964, %v51
    %v966 = vpop.permute.xlu0 %965
    %968 = vset.pattern.permute.xlu0 3
    %969 = vperm.xlu0 %968, %v52
    %v970 = vpop.permute.xlu0 %969
    %972 = vset.pattern.permute.xlu0 3
    %973 = vperm.xlu0 %972, %v53
    %v974 = vpop.permute.xlu0 %973
    %976 = vset.pattern.permute.xlu0 3
    %977 = vperm.xlu0 %976, %v54
    %v978 = vpop.permute.xlu0 %977
    %980 = vset.pattern.permute.xlu0 3
    %981 = vperm.xlu0 %980, %v55
    %v982 = vpop.permute.xlu0 %981
    %984 = vset.pattern.permute.xlu0 3
    %985 = vperm.xlu0 %984, %v56
    %v986 = vpop.permute.xlu0 %985
    %988 = vset.pattern.permute.xlu0 3
    %989 = vperm.xlu0 %988, %v57
    %v990 = vpop.permute.xlu0 %989
    %992 = vset.pattern.permute.xlu0 3
    %993 = vperm.xlu0 %992, %v58
    %v994 = vpop.permute.xlu0 %993
    %996 = vset.pattern.permute.xlu0 3
    %997 = vperm.xlu0 %996, %v59
    %v998 = vpop.permute.xlu0 %997
    %v1000 = vlaneseq
    %v1001 = vshrl.u32 %v1000, 7
    %v1002 = vsub.s32 3, %v1001
    %v1003 = vrot.slane %v27, %v1002
    %v1004 = vmul.f32 %v874, %v1003
    %v1005 = vmul.f32 %v878, %v1003
    %v1006 = vmul.f32 %v882, %v1003
    %v1007 = vmul.f32 %v886, %v1003
    %v1008 = vmul.f32 %v890, %v1003
    %v1009 = vmul.f32 %v894, %v1003
    %v1010 = vmul.f32 %v898, %v1003
    %v1011 = vmul.f32 %v902, %v1003
    %v1012 = vmul.f32 %v906, %v1003
    %v1013 = vmul.f32 %v910, %v1003
    %v1014 = vmul.f32 %v914, %v1003
    %v1015 = vmul.f32 %v918, %v1003
    %v1016 = vmul.f32 %v922, %v1003
    %v1017 = vmul.f32 %v926, %v1003
    %v1018 = vmul.f32 %v930, %v1003
    %v1019 = vmul.f32 %v934, %v1003
    %v1020 = vmul.f32 %v938, %v1003
    %v1021 = vmul.f32 %v942, %v1003
    %v1022 = vmul.f32 %v946, %v1003
    %v1023 = vmul.f32 %v950, %v1003
    %v1024 = vmul.f32 %v954, %v1003
    %v1025 = vmul.f32 %v958, %v1003
    %v1026 = vmul.f32 %v962, %v1003
    %v1027 = vmul.f32 %v966, %v1003
    %v1028 = vmul.f32 %v970, %v1003
    %v1029 = vmul.f32 %v974, %v1003
    %v1030 = vmul.f32 %v978, %v1003
    %v1031 = vmul.f32 %v982, %v1003
    %v1032 = vmul.f32 %v986, %v1003
    %v1033 = vmul.f32 %v990, %v1003
    %v1034 = vmul.f32 %v994, %v1003
    %v1035 = vmul.f32 %v998, %v1003
    %v1036 = vadd.f32 %v840, %v1004
    %v1037 = vadd.f32 %v841, %v1005
    %v1038 = vadd.f32 %v842, %v1006
    %v1039 = vadd.f32 %v843, %v1007
    %v1040 = vadd.f32 %v844, %v1008
    %v1041 = vadd.f32 %v845, %v1009
    %v1042 = vadd.f32 %v846, %v1010
    %v1043 = vadd.f32 %v847, %v1011
    %v1044 = vadd.f32 %v848, %v1012
    %v1045 = vadd.f32 %v849, %v1013
    %v1046 = vadd.f32 %v850, %v1014
    %v1047 = vadd.f32 %v851, %v1015
    %v1048 = vadd.f32 %v852, %v1016
    %v1049 = vadd.f32 %v853, %v1017
    %v1050 = vadd.f32 %v854, %v1018
    %v1051 = vadd.f32 %v855, %v1019
    %v1052 = vadd.f32 %v856, %v1020
    %v1053 = vadd.f32 %v857, %v1021
    %v1054 = vadd.f32 %v858, %v1022
    %v1055 = vadd.f32 %v859, %v1023
    %v1056 = vadd.f32 %v860, %v1024
    %v1057 = vadd.f32 %v861, %v1025
    %v1058 = vadd.f32 %v862, %v1026
    %v1059 = vadd.f32 %v863, %v1027
    %v1060 = vadd.f32 %v864, %v1028
    %v1061 = vadd.f32 %v865, %v1029
    %v1062 = vadd.f32 %v866, %v1030
    %v1063 = vadd.f32 %v867, %v1031
    %v1064 = vadd.f32 %v868, %v1032
    %v1065 = vadd.f32 %v869, %v1033
    %v1066 = vadd.f32 %v870, %v1034
    %v1067 = vadd.f32 %v871, %v1035
    %1068 = vset.pattern.permute.xlu0 4
    %1069 = vperm.xlu0 %1068, %v28
    %v1070 = vpop.permute.xlu0 %1069
    %1072 = vset.pattern.permute.xlu0 4
    %1073 = vperm.xlu0 %1072, %v29
    %v1074 = vpop.permute.xlu0 %1073
    %1076 = vset.pattern.permute.xlu0 4
    %1077 = vperm.xlu0 %1076, %v30
    %v1078 = vpop.permute.xlu0 %1077
    %1080 = vset.pattern.permute.xlu0 4
    %1081 = vperm.xlu0 %1080, %v31
    %v1082 = vpop.permute.xlu0 %1081
    %1084 = vset.pattern.permute.xlu0 4
    %1085 = vperm.xlu0 %1084, %v32
    %v1086 = vpop.permute.xlu0 %1085
    %1088 = vset.pattern.permute.xlu0 4
    %1089 = vperm.xlu0 %1088, %v33
    %v1090 = vpop.permute.xlu0 %1089
    %1092 = vset.pattern.permute.xlu0 4
    %1093 = vperm.xlu0 %1092, %v34
    %v1094 = vpop.permute.xlu0 %1093
    %1096 = vset.pattern.permute.xlu0 4
    %1097 = vperm.xlu0 %1096, %v35
    %v1098 = vpop.permute.xlu0 %1097
    %1100 = vset.pattern.permute.xlu0 4
    %1101 = vperm.xlu0 %1100, %v36
    %v1102 = vpop.permute.xlu0 %1101
    %1104 = vset.pattern.permute.xlu0 4
    %1105 = vperm.xlu0 %1104, %v37
    %v1106 = vpop.permute.xlu0 %1105
    %1108 = vset.pattern.permute.xlu0 4
    %1109 = vperm.xlu0 %1108, %v38
    %v1110 = vpop.permute.xlu0 %1109
    %1112 = vset.pattern.permute.xlu0 4
    %1113 = vperm.xlu0 %1112, %v39
    %v1114 = vpop.permute.xlu0 %1113
    %1116 = vset.pattern.permute.xlu0 4
    %1117 = vperm.xlu0 %1116, %v40
    %v1118 = vpop.permute.xlu0 %1117
    %1120 = vset.pattern.permute.xlu0 4
    %1121 = vperm.xlu0 %1120, %v41
    %v1122 = vpop.permute.xlu0 %1121
    %1124 = vset.pattern.permute.xlu0 4
    %1125 = vperm.xlu0 %1124, %v42
    %v1126 = vpop.permute.xlu0 %1125
    %1128 = vset.pattern.permute.xlu0 4
    %1129 = vperm.xlu0 %1128, %v43
    %v1130 = vpop.permute.xlu0 %1129
    %1132 = vset.pattern.permute.xlu0 4
    %1133 = vperm.xlu0 %1132, %v44
    %v1134 = vpop.permute.xlu0 %1133
    %1136 = vset.pattern.permute.xlu0 4
    %1137 = vperm.xlu0 %1136, %v45
    %v1138 = vpop.permute.xlu0 %1137
    %1140 = vset.pattern.permute.xlu0 4
    %1141 = vperm.xlu0 %1140, %v46
    %v1142 = vpop.permute.xlu0 %1141
    %1144 = vset.pattern.permute.xlu0 4
    %1145 = vperm.xlu0 %1144, %v47
    %v1146 = vpop.permute.xlu0 %1145
    %1148 = vset.pattern.permute.xlu0 4
    %1149 = vperm.xlu0 %1148, %v48
    %v1150 = vpop.permute.xlu0 %1149
    %1152 = vset.pattern.permute.xlu0 4
    %1153 = vperm.xlu0 %1152, %v49
    %v1154 = vpop.permute.xlu0 %1153
    %1156 = vset.pattern.permute.xlu0 4
    %1157 = vperm.xlu0 %1156, %v50
    %v1158 = vpop.permute.xlu0 %1157
    %1160 = vset.pattern.permute.xlu0 4
    %1161 = vperm.xlu0 %1160, %v51
    %v1162 = vpop.permute.xlu0 %1161
    %1164 = vset.pattern.permute.xlu0 4
    %1165 = vperm.xlu0 %1164, %v52
    %v1166 = vpop.permute.xlu0 %1165
    %1168 = vset.pattern.permute.xlu0 4
    %1169 = vperm.xlu0 %1168, %v53
    %v1170 = vpop.permute.xlu0 %1169
    %1172 = vset.pattern.permute.xlu0 4
    %1173 = vperm.xlu0 %1172, %v54
    %v1174 = vpop.permute.xlu0 %1173
    %1176 = vset.pattern.permute.xlu0 4
    %1177 = vperm.xlu0 %1176, %v55
    %v1178 = vpop.permute.xlu0 %1177
    %1180 = vset.pattern.permute.xlu0 4
    %1181 = vperm.xlu0 %1180, %v56
    %v1182 = vpop.permute.xlu0 %1181
    %1184 = vset.pattern.permute.xlu0 4
    %1185 = vperm.xlu0 %1184, %v57
    %v1186 = vpop.permute.xlu0 %1185
    %1188 = vset.pattern.permute.xlu0 4
    %1189 = vperm.xlu0 %1188, %v58
    %v1190 = vpop.permute.xlu0 %1189
    %1192 = vset.pattern.permute.xlu0 4
    %1193 = vperm.xlu0 %1192, %v59
    %v1194 = vpop.permute.xlu0 %1193
    %v1196 = vlaneseq
    %v1197 = vshrl.u32 %v1196, 7
    %v1198 = vsub.s32 4, %v1197
    %v1199 = vrot.slane %v27, %v1198
    %v1200 = vmul.f32 %v1070, %v1199
    %v1201 = vmul.f32 %v1074, %v1199
    %v1202 = vmul.f32 %v1078, %v1199
    %v1203 = vmul.f32 %v1082, %v1199
    %v1204 = vmul.f32 %v1086, %v1199
    %v1205 = vmul.f32 %v1090, %v1199
    %v1206 = vmul.f32 %v1094, %v1199
    %v1207 = vmul.f32 %v1098, %v1199
    %v1208 = vmul.f32 %v1102, %v1199
    %v1209 = vmul.f32 %v1106, %v1199
    %v1210 = vmul.f32 %v1110, %v1199
    %v1211 = vmul.f32 %v1114, %v1199
    %v1212 = vmul.f32 %v1118, %v1199
    %v1213 = vmul.f32 %v1122, %v1199
    %v1214 = vmul.f32 %v1126, %v1199
    %v1215 = vmul.f32 %v1130, %v1199
    %v1216 = vmul.f32 %v1134, %v1199
    %v1217 = vmul.f32 %v1138, %v1199
    %v1218 = vmul.f32 %v1142, %v1199
    %v1219 = vmul.f32 %v1146, %v1199
    %v1220 = vmul.f32 %v1150, %v1199
    %v1221 = vmul.f32 %v1154, %v1199
    %v1222 = vmul.f32 %v1158, %v1199
    %v1223 = vmul.f32 %v1162, %v1199
    %v1224 = vmul.f32 %v1166, %v1199
    %v1225 = vmul.f32 %v1170, %v1199
    %v1226 = vmul.f32 %v1174, %v1199
    %v1227 = vmul.f32 %v1178, %v1199
    %v1228 = vmul.f32 %v1182, %v1199
    %v1229 = vmul.f32 %v1186, %v1199
    %v1230 = vmul.f32 %v1190, %v1199
    %v1231 = vmul.f32 %v1194, %v1199
    %v1232 = vadd.f32 %v1036, %v1200
    %v1233 = vadd.f32 %v1037, %v1201
    %v1234 = vadd.f32 %v1038, %v1202
    %v1235 = vadd.f32 %v1039, %v1203
    %v1236 = vadd.f32 %v1040, %v1204
    %v1237 = vadd.f32 %v1041, %v1205
    %v1238 = vadd.f32 %v1042, %v1206
    %v1239 = vadd.f32 %v1043, %v1207
    %v1240 = vadd.f32 %v1044, %v1208
    %v1241 = vadd.f32 %v1045, %v1209
    %v1242 = vadd.f32 %v1046, %v1210
    %v1243 = vadd.f32 %v1047, %v1211
    %v1244 = vadd.f32 %v1048, %v1212
    %v1245 = vadd.f32 %v1049, %v1213
    %v1246 = vadd.f32 %v1050, %v1214
    %v1247 = vadd.f32 %v1051, %v1215
    %v1248 = vadd.f32 %v1052, %v1216
    %v1249 = vadd.f32 %v1053, %v1217
    %v1250 = vadd.f32 %v1054, %v1218
    %v1251 = vadd.f32 %v1055, %v1219
    %v1252 = vadd.f32 %v1056, %v1220
    %v1253 = vadd.f32 %v1057, %v1221
    %v1254 = vadd.f32 %v1058, %v1222
    %v1255 = vadd.f32 %v1059, %v1223
    %v1256 = vadd.f32 %v1060, %v1224
    %v1257 = vadd.f32 %v1061, %v1225
    %v1258 = vadd.f32 %v1062, %v1226
    %v1259 = vadd.f32 %v1063, %v1227
    %v1260 = vadd.f32 %v1064, %v1228
    %v1261 = vadd.f32 %v1065, %v1229
    %v1262 = vadd.f32 %v1066, %v1230
    %v1263 = vadd.f32 %v1067, %v1231
    %1264 = vset.pattern.permute.xlu0 5
    %1265 = vperm.xlu0 %1264, %v28
    %v1266 = vpop.permute.xlu0 %1265
    %1268 = vset.pattern.permute.xlu0 5
    %1269 = vperm.xlu0 %1268, %v29
    %v1270 = vpop.permute.xlu0 %1269
    %1272 = vset.pattern.permute.xlu0 5
    %1273 = vperm.xlu0 %1272, %v30
    %v1274 = vpop.permute.xlu0 %1273
    %1276 = vset.pattern.permute.xlu0 5
    %1277 = vperm.xlu0 %1276, %v31
    %v1278 = vpop.permute.xlu0 %1277
    %1280 = vset.pattern.permute.xlu0 5
    %1281 = vperm.xlu0 %1280, %v32
    %v1282 = vpop.permute.xlu0 %1281
    %1284 = vset.pattern.permute.xlu0 5
    %1285 = vperm.xlu0 %1284, %v33
    %v1286 = vpop.permute.xlu0 %1285
    %1288 = vset.pattern.permute.xlu0 5
    %1289 = vperm.xlu0 %1288, %v34
    %v1290 = vpop.permute.xlu0 %1289
    %1292 = vset.pattern.permute.xlu0 5
    %1293 = vperm.xlu0 %1292, %v35
    %v1294 = vpop.permute.xlu0 %1293
    %1296 = vset.pattern.permute.xlu0 5
    %1297 = vperm.xlu0 %1296, %v36
    %v1298 = vpop.permute.xlu0 %1297
    %1300 = vset.pattern.permute.xlu0 5
    %1301 = vperm.xlu0 %1300, %v37
    %v1302 = vpop.permute.xlu0 %1301
    %1304 = vset.pattern.permute.xlu0 5
    %1305 = vperm.xlu0 %1304, %v38
    %v1306 = vpop.permute.xlu0 %1305
    %1308 = vset.pattern.permute.xlu0 5
    %1309 = vperm.xlu0 %1308, %v39
    %v1310 = vpop.permute.xlu0 %1309
    %1312 = vset.pattern.permute.xlu0 5
    %1313 = vperm.xlu0 %1312, %v40
    %v1314 = vpop.permute.xlu0 %1313
    %1316 = vset.pattern.permute.xlu0 5
    %1317 = vperm.xlu0 %1316, %v41
    %v1318 = vpop.permute.xlu0 %1317
    %1320 = vset.pattern.permute.xlu0 5
    %1321 = vperm.xlu0 %1320, %v42
    %v1322 = vpop.permute.xlu0 %1321
    %1324 = vset.pattern.permute.xlu0 5
    %1325 = vperm.xlu0 %1324, %v43
    %v1326 = vpop.permute.xlu0 %1325
    %1328 = vset.pattern.permute.xlu0 5
    %1329 = vperm.xlu0 %1328, %v44
    %v1330 = vpop.permute.xlu0 %1329
    %1332 = vset.pattern.permute.xlu0 5
    %1333 = vperm.xlu0 %1332, %v45
    %v1334 = vpop.permute.xlu0 %1333
    %1336 = vset.pattern.permute.xlu0 5
    %1337 = vperm.xlu0 %1336, %v46
    %v1338 = vpop.permute.xlu0 %1337
    %1340 = vset.pattern.permute.xlu0 5
    %1341 = vperm.xlu0 %1340, %v47
    %v1342 = vpop.permute.xlu0 %1341
    %1344 = vset.pattern.permute.xlu0 5
    %1345 = vperm.xlu0 %1344, %v48
    %v1346 = vpop.permute.xlu0 %1345
    %1348 = vset.pattern.permute.xlu0 5
    %1349 = vperm.xlu0 %1348, %v49
    %v1350 = vpop.permute.xlu0 %1349
    %1352 = vset.pattern.permute.xlu0 5
    %1353 = vperm.xlu0 %1352, %v50
    %v1354 = vpop.permute.xlu0 %1353
    %1356 = vset.pattern.permute.xlu0 5
    %1357 = vperm.xlu0 %1356, %v51
    %v1358 = vpop.permute.xlu0 %1357
    %1360 = vset.pattern.permute.xlu0 5
    %1361 = vperm.xlu0 %1360, %v52
    %v1362 = vpop.permute.xlu0 %1361
    %1364 = vset.pattern.permute.xlu0 5
    %1365 = vperm.xlu0 %1364, %v53
    %v1366 = vpop.permute.xlu0 %1365
    %1368 = vset.pattern.permute.xlu0 5
    %1369 = vperm.xlu0 %1368, %v54
    %v1370 = vpop.permute.xlu0 %1369
    %1372 = vset.pattern.permute.xlu0 5
    %1373 = vperm.xlu0 %1372, %v55
    %v1374 = vpop.permute.xlu0 %1373
    %1376 = vset.pattern.permute.xlu0 5
    %1377 = vperm.xlu0 %1376, %v56
    %v1378 = vpop.permute.xlu0 %1377
    %1380 = vset.pattern.permute.xlu0 5
    %1381 = vperm.xlu0 %1380, %v57
    %v1382 = vpop.permute.xlu0 %1381
    %1384 = vset.pattern.permute.xlu0 5
    %1385 = vperm.xlu0 %1384, %v58
    %v1386 = vpop.permute.xlu0 %1385
    %1388 = vset.pattern.permute.xlu0 5
    %1389 = vperm.xlu0 %1388, %v59
    %v1390 = vpop.permute.xlu0 %1389
    %v1392 = vlaneseq
    %v1393 = vshrl.u32 %v1392, 7
    %v1394 = vsub.s32 5, %v1393
    %v1395 = vrot.slane %v27, %v1394
    %v1396 = vmul.f32 %v1266, %v1395
    %v1397 = vmul.f32 %v1270, %v1395
    %v1398 = vmul.f32 %v1274, %v1395
    %v1399 = vmul.f32 %v1278, %v1395
    %v1400 = vmul.f32 %v1282, %v1395
    %v1401 = vmul.f32 %v1286, %v1395
    %v1402 = vmul.f32 %v1290, %v1395
    %v1403 = vmul.f32 %v1294, %v1395
    %v1404 = vmul.f32 %v1298, %v1395
    %v1405 = vmul.f32 %v1302, %v1395
    %v1406 = vmul.f32 %v1306, %v1395
    %v1407 = vmul.f32 %v1310, %v1395
    %v1408 = vmul.f32 %v1314, %v1395
    %v1409 = vmul.f32 %v1318, %v1395
    %v1410 = vmul.f32 %v1322, %v1395
    %v1411 = vmul.f32 %v1326, %v1395
    %v1412 = vmul.f32 %v1330, %v1395
    %v1413 = vmul.f32 %v1334, %v1395
    %v1414 = vmul.f32 %v1338, %v1395
    %v1415 = vmul.f32 %v1342, %v1395
    %v1416 = vmul.f32 %v1346, %v1395
    %v1417 = vmul.f32 %v1350, %v1395
    %v1418 = vmul.f32 %v1354, %v1395
    %v1419 = vmul.f32 %v1358, %v1395
    %v1420 = vmul.f32 %v1362, %v1395
    %v1421 = vmul.f32 %v1366, %v1395
    %v1422 = vmul.f32 %v1370, %v1395
    %v1423 = vmul.f32 %v1374, %v1395
    %v1424 = vmul.f32 %v1378, %v1395
    %v1425 = vmul.f32 %v1382, %v1395
    %v1426 = vmul.f32 %v1386, %v1395
    %v1427 = vmul.f32 %v1390, %v1395
    %v1428 = vadd.f32 %v1232, %v1396
    %v1429 = vadd.f32 %v1233, %v1397
    %v1430 = vadd.f32 %v1234, %v1398
    %v1431 = vadd.f32 %v1235, %v1399
    %v1432 = vadd.f32 %v1236, %v1400
    %v1433 = vadd.f32 %v1237, %v1401
    %v1434 = vadd.f32 %v1238, %v1402
    %v1435 = vadd.f32 %v1239, %v1403
    %v1436 = vadd.f32 %v1240, %v1404
    %v1437 = vadd.f32 %v1241, %v1405
    %v1438 = vadd.f32 %v1242, %v1406
    %v1439 = vadd.f32 %v1243, %v1407
    %v1440 = vadd.f32 %v1244, %v1408
    %v1441 = vadd.f32 %v1245, %v1409
    %v1442 = vadd.f32 %v1246, %v1410
    %v1443 = vadd.f32 %v1247, %v1411
    %v1444 = vadd.f32 %v1248, %v1412
    %v1445 = vadd.f32 %v1249, %v1413
    %v1446 = vadd.f32 %v1250, %v1414
    %v1447 = vadd.f32 %v1251, %v1415
    %v1448 = vadd.f32 %v1252, %v1416
    %v1449 = vadd.f32 %v1253, %v1417
    %v1450 = vadd.f32 %v1254, %v1418
    %v1451 = vadd.f32 %v1255, %v1419
    %v1452 = vadd.f32 %v1256, %v1420
    %v1453 = vadd.f32 %v1257, %v1421
    %v1454 = vadd.f32 %v1258, %v1422
    %v1455 = vadd.f32 %v1259, %v1423
    %v1456 = vadd.f32 %v1260, %v1424
    %v1457 = vadd.f32 %v1261, %v1425
    %v1458 = vadd.f32 %v1262, %v1426
    %v1459 = vadd.f32 %v1263, %v1427
    %v1460 = vmax.f32 %v1428, 0.0
    %v1461 = vmax.f32 %v1429, 0.0
    %v1462 = vmax.f32 %v1430, 0.0
    %v1463 = vmax.f32 %v1431, 0.0
    %v1464 = vmax.f32 %v1432, 0.0
    %v1465 = vmax.f32 %v1433, 0.0
    %v1466 = vmax.f32 %v1434, 0.0
    %v1467 = vmax.f32 %v1435, 0.0
    %v1468 = vmax.f32 %v1436, 0.0
    %v1469 = vmax.f32 %v1437, 0.0
    %v1470 = vmax.f32 %v1438, 0.0
    %v1471 = vmax.f32 %v1439, 0.0
    %v1472 = vmax.f32 %v1440, 0.0
    %v1473 = vmax.f32 %v1441, 0.0
    %v1474 = vmax.f32 %v1442, 0.0
    %v1475 = vmax.f32 %v1443, 0.0
    %v1476 = vmax.f32 %v1444, 0.0
    %v1477 = vmax.f32 %v1445, 0.0
    %v1478 = vmax.f32 %v1446, 0.0
    %v1479 = vmax.f32 %v1447, 0.0
    %v1480 = vmax.f32 %v1448, 0.0
    %v1481 = vmax.f32 %v1449, 0.0
    %v1482 = vmax.f32 %v1450, 0.0
    %v1483 = vmax.f32 %v1451, 0.0
    %v1484 = vmax.f32 %v1452, 0.0
    %v1485 = vmax.f32 %v1453, 0.0
    %v1486 = vmax.f32 %v1454, 0.0
    %v1487 = vmax.f32 %v1455, 0.0
    %v1488 = vmax.f32 %v1456, 0.0
    %v1489 = vmax.f32 %v1457, 0.0
    %v1490 = vmax.f32 %v1458, 0.0
    %v1491 = vmax.f32 %v1459, 0.0
    %v1492 = vld [vmem:[%s3] sm:$0xff]
    %v1493 = vld [vmem:[%s3 + $0x8] sm:$0xff]
    %v1494 = vld [vmem:[%s3 + $0x10] sm:$0xff]
    %v1495 = vld [vmem:[%s3 + $0x18] sm:$0xff]
    %v1496 = vld [vmem:[%s3 + $0x20] sm:$0xff]
    %v1497 = vld [vmem:[%s3 + $0x28] sm:$0xff]
    %v1498 = vld [vmem:[%s3 + $0x30] sm:$0xff]
    %v1499 = vld [vmem:[%s3 + $0x38] sm:$0xff]
    %v1500 = vld [vmem:[%s3 + $0x40] sm:$0xff]
    %v1501 = vld [vmem:[%s3 + $0x48] sm:$0xff]
    %v1502 = vld [vmem:[%s3 + $0x50] sm:$0xff]
    %v1503 = vld [vmem:[%s3 + $0x58] sm:$0xff]
    %v1504 = vld [vmem:[%s3 + $0x60] sm:$0xff]
    %v1505 = vld [vmem:[%s3 + $0x68] sm:$0xff]
    %v1506 = vld [vmem:[%s3 + $0x70] sm:$0xff]
    %v1507 = vld [vmem:[%s3 + $0x78] sm:$0xff]
    %v1508 = vld [vmem:[%s3 + $0x80] sm:$0xff]
    %v1509 = vld [vmem:[%s3 + $0x88] sm:$0xff]
    %v1510 = vld [vmem:[%s3 + $0x90] sm:$0xff]
    %v1511 = vld [vmem:[%s3 + $0x98] sm:$0xff]
    %v1512 = vld [vmem:[%s3 + $0xa0] sm:$0xff]
    %v1513 = vld [vmem:[%s3 + $0xa8] sm:$0xff]
    %v1514 = vld [vmem:[%s3 + $0xb0] sm:$0xff]
    %v1515 = vld [vmem:[%s3 + $0xb8] sm:$0xff]
    %v1516 = vld [vmem:[%s3 + $0xc0] sm:$0xff]
    %v1517 = vld [vmem:[%s3 + $0xc8] sm:$0xff]
    %v1518 = vld [vmem:[%s3 + $0xd0] sm:$0xff]
    %v1519 = vld [vmem:[%s3 + $0xd8] sm:$0xff]
    %v1520 = vld [vmem:[%s3 + $0xe0] sm:$0xff]
    %v1521 = vld [vmem:[%s3 + $0xe8] sm:$0xff]
    %v1522 = vld [vmem:[%s3 + $0xf0] sm:$0xff]
    %v1523 = vld [vmem:[%s3 + $0xf8] sm:$0xff]
    %v1524 = vld [vmem:[%s3 + $0x100] sm:$0xff]
    %v1525 = vld [vmem:[%s3 + $0x108] sm:$0xff]
    %v1526 = vld [vmem:[%s3 + $0x110] sm:$0xff]
    %v1527 = vld [vmem:[%s3 + $0x118] sm:$0xff]
    %v1528 = vld [vmem:[%s3 + $0x120] sm:$0xff]
    %v1529 = vld [vmem:[%s3 + $0x128] sm:$0xff]
    %v1530 = vld [vmem:[%s3 + $0x130] sm:$0xff]
    %v1531 = vld [vmem:[%s3 + $0x138] sm:$0xff]
    %v1532 = vld [vmem:[%s3 + $0x140] sm:$0xff]
    %v1533 = vld [vmem:[%s3 + $0x148] sm:$0xff]
    %v1534 = vld [vmem:[%s3 + $0x150] sm:$0xff]
    %v1535 = vld [vmem:[%s3 + $0x158] sm:$0xff]
    %v1536 = vld [vmem:[%s3 + $0x160] sm:$0xff]
    %v1537 = vld [vmem:[%s3 + $0x168] sm:$0xff]
    %v1538 = vld [vmem:[%s3 + $0x170] sm:$0xff]
    %v1539 = vld [vmem:[%s3 + $0x178] sm:$0xff]
    %v1540 = vld [vmem:[%s3 + $0x180] sm:$0xff]
    %v1541 = vld [vmem:[%s3 + $0x188] sm:$0xff]
    %v1542 = vld [vmem:[%s3 + $0x190] sm:$0xff]
    %v1543 = vld [vmem:[%s3 + $0x198] sm:$0xff]
    %v1544 = vld [vmem:[%s3 + $0x1a0] sm:$0xff]
    %v1545 = vld [vmem:[%s3 + $0x1a8] sm:$0xff]
    %v1546 = vld [vmem:[%s3 + $0x1b0] sm:$0xff]
    %v1547 = vld [vmem:[%s3 + $0x1b8] sm:$0xff]
    %v1548 = vld [vmem:[%s3 + $0x1c0] sm:$0xff]
    %v1549 = vld [vmem:[%s3 + $0x1c8] sm:$0xff]
    %v1550 = vld [vmem:[%s3 + $0x1d0] sm:$0xff]
    %v1551 = vld [vmem:[%s3 + $0x1d8] sm:$0xff]
    %v1552 = vld [vmem:[%s3 + $0x1e0] sm:$0xff]
    %v1553 = vld [vmem:[%s3 + $0x1e8] sm:$0xff]
    %v1554 = vld [vmem:[%s3 + $0x1f0] sm:$0xff]
    %v1555 = vld [vmem:[%s3 + $0x1f8] sm:$0xff]
    %v1556 = vld [vmem:[%s4] sm:$0xff]
    %v1557 = vld [vmem:[%s4 + $0x8] sm:$0xff]
    %v1558 = vld [vmem:[%s4 + $0x10] sm:$0xff]
    %v1559 = vld [vmem:[%s4 + $0x18] sm:$0xff]
    %v1560 = vld [vmem:[%s4 + $0x20] sm:$0xff]
    %v1561 = vld [vmem:[%s4 + $0x28] sm:$0xff]
    %v1562 = vld [vmem:[%s4 + $0x30] sm:$0xff]
    %v1563 = vld [vmem:[%s4 + $0x38] sm:$0xff]
    %v1564 = vld [vmem:[%s4 + $0x40] sm:$0xff]
    %v1565 = vld [vmem:[%s4 + $0x48] sm:$0xff]
    %v1566 = vld [vmem:[%s4 + $0x50] sm:$0xff]
    %v1567 = vld [vmem:[%s4 + $0x58] sm:$0xff]
    %v1568 = vld [vmem:[%s4 + $0x60] sm:$0xff]
    %v1569 = vld [vmem:[%s4 + $0x68] sm:$0xff]
    %v1570 = vld [vmem:[%s4 + $0x70] sm:$0xff]
    %v1571 = vld [vmem:[%s4 + $0x78] sm:$0xff]
    %v1572 = vld [vmem:[%s4 + $0x80] sm:$0xff]
    %v1573 = vld [vmem:[%s4 + $0x88] sm:$0xff]
    %v1574 = vld [vmem:[%s4 + $0x90] sm:$0xff]
    %v1575 = vld [vmem:[%s4 + $0x98] sm:$0xff]
    %v1576 = vld [vmem:[%s4 + $0xa0] sm:$0xff]
    %v1577 = vld [vmem:[%s4 + $0xa8] sm:$0xff]
    %v1578 = vld [vmem:[%s4 + $0xb0] sm:$0xff]
    %v1579 = vld [vmem:[%s4 + $0xb8] sm:$0xff]
    %v1580 = vld [vmem:[%s4 + $0xc0] sm:$0xff]
    %v1581 = vld [vmem:[%s4 + $0xc8] sm:$0xff]
    %v1582 = vld [vmem:[%s4 + $0xd0] sm:$0xff]
    %v1583 = vld [vmem:[%s4 + $0xd8] sm:$0xff]
    %v1584 = vld [vmem:[%s4 + $0xe0] sm:$0xff]
    %v1585 = vld [vmem:[%s4 + $0xe8] sm:$0xff]
    %v1586 = vld [vmem:[%s4 + $0xf0] sm:$0xff]
    %v1587 = vld [vmem:[%s4 + $0xf8] sm:$0xff]
    %1589 = vset.pattern.permute.xlu0 0
    %1590 = vperm.xlu0 %1589, %v1556
    %v1591 = vpop.permute.xlu0 %1590
    %1594 = vset.pattern.permute.xlu0 0
    %1595 = vperm.xlu0 %1594, %v1557
    %v1596 = vpop.permute.xlu0 %1595
    %1599 = vset.pattern.permute.xlu0 0
    %1600 = vperm.xlu0 %1599, %v1558
    %v1601 = vpop.permute.xlu0 %1600
    %1604 = vset.pattern.permute.xlu0 0
    %1605 = vperm.xlu0 %1604, %v1559
    %v1606 = vpop.permute.xlu0 %1605
    %1609 = vset.pattern.permute.xlu0 0
    %1610 = vperm.xlu0 %1609, %v1560
    %v1611 = vpop.permute.xlu0 %1610
    %1614 = vset.pattern.permute.xlu0 0
    %1615 = vperm.xlu0 %1614, %v1561
    %v1616 = vpop.permute.xlu0 %1615
    %1619 = vset.pattern.permute.xlu0 0
    %1620 = vperm.xlu0 %1619, %v1562
    %v1621 = vpop.permute.xlu0 %1620
    %1624 = vset.pattern.permute.xlu0 0
    %1625 = vperm.xlu0 %1624, %v1563
    %v1626 = vpop.permute.xlu0 %1625
    %1629 = vset.pattern.permute.xlu0 0
    %1630 = vperm.xlu0 %1629, %v1564
    %v1631 = vpop.permute.xlu0 %1630
    %1634 = vset.pattern.permute.xlu0 0
    %1635 = vperm.xlu0 %1634, %v1565
    %v1636 = vpop.permute.xlu0 %1635
    %1639 = vset.pattern.permute.xlu0 0
    %1640 = vperm.xlu0 %1639, %v1566
    %v1641 = vpop.permute.xlu0 %1640
    %1644 = vset.pattern.permute.xlu0 0
    %1645 = vperm.xlu0 %1644, %v1567
    %v1646 = vpop.permute.xlu0 %1645
    %1649 = vset.pattern.permute.xlu0 0
    %1650 = vperm.xlu0 %1649, %v1568
    %v1651 = vpop.permute.xlu0 %1650
    %1654 = vset.pattern.permute.xlu0 0
    %1655 = vperm.xlu0 %1654, %v1569
    %v1656 = vpop.permute.xlu0 %1655
    %1659 = vset.pattern.permute.xlu0 0
    %1660 = vperm.xlu0 %1659, %v1570
    %v1661 = vpop.permute.xlu0 %1660
    %1664 = vset.pattern.permute.xlu0 0
    %1665 = vperm.xlu0 %1664, %v1571
    %v1666 = vpop.permute.xlu0 %1665
    %1669 = vset.pattern.permute.xlu0 0
    %1670 = vperm.xlu0 %1669, %v1572
    %v1671 = vpop.permute.xlu0 %1670
    %1674 = vset.pattern.permute.xlu0 0
    %1675 = vperm.xlu0 %1674, %v1573
    %v1676 = vpop.permute.xlu0 %1675
    %1679 = vset.pattern.permute.xlu0 0
    %1680 = vperm.xlu0 %1679, %v1574
    %v1681 = vpop.permute.xlu0 %1680
    %1684 = vset.pattern.permute.xlu0 0
    %1685 = vperm.xlu0 %1684, %v1575
    %v1686 = vpop.permute.xlu0 %1685
    %1689 = vset.pattern.permute.xlu0 0
    %1690 = vperm.xlu0 %1689, %v1576
    %v1691 = vpop.permute.xlu0 %1690
    %1694 = vset.pattern.permute.xlu0 0
    %1695 = vperm.xlu0 %1694, %v1577
    %v1696 = vpop.permute.xlu0 %1695
    %1699 = vset.pattern.permute.xlu0 0
    %1700 = vperm.xlu0 %1699, %v1578
    %v1701 = vpop.permute.xlu0 %1700
    %1704 = vset.pattern.permute.xlu0 0
    %1705 = vperm.xlu0 %1704, %v1579
    %v1706 = vpop.permute.xlu0 %1705
    %1709 = vset.pattern.permute.xlu0 0
    %1710 = vperm.xlu0 %1709, %v1580
    %v1711 = vpop.permute.xlu0 %1710
    %1714 = vset.pattern.permute.xlu0 0
    %1715 = vperm.xlu0 %1714, %v1581
    %v1716 = vpop.permute.xlu0 %1715
    %1719 = vset.pattern.permute.xlu0 0
    %1720 = vperm.xlu0 %1719, %v1582
    %v1721 = vpop.permute.xlu0 %1720
    %1724 = vset.pattern.permute.xlu0 0
    %1725 = vperm.xlu0 %1724, %v1583
    %v1726 = vpop.permute.xlu0 %1725
    %1729 = vset.pattern.permute.xlu0 0
    %1730 = vperm.xlu0 %1729, %v1584
    %v1731 = vpop.permute.xlu0 %1730
    %1734 = vset.pattern.permute.xlu0 0
    %1735 = vperm.xlu0 %1734, %v1585
    %v1736 = vpop.permute.xlu0 %1735
    %1739 = vset.pattern.permute.xlu0 0
    %1740 = vperm.xlu0 %1739, %v1586
    %v1741 = vpop.permute.xlu0 %1740
    %1744 = vset.pattern.permute.xlu0 0
    %1745 = vperm.xlu0 %1744, %v1587
    %v1746 = vpop.permute.xlu0 %1745
    %1748 = vmatprep.subr.mxu0 0.0
    %1749 = vmatpush1.msra.mxu0 %v1475
    %1750 = vmatprep.subr.mxu0 0.0
    %1751 = vmatpush1.msra.mxu0 %v1474
    %1752 = vmatprep.subr.mxu0 0.0
    %1753 = vmatpush1.msra.mxu0 %v1473
    %1754 = vmatprep.subr.mxu0 0.0
    %1755 = vmatpush1.msra.mxu0 %v1472
    %1756 = vmatprep.subr.mxu0 0.0
    %1757 = vmatpush1.msra.mxu0 %v1471
    %1758 = vmatprep.subr.mxu0 0.0
    %1759 = vmatpush1.msra.mxu0 %v1470
    %1760 = vmatprep.subr.mxu0 0.0
    %1761 = vmatpush1.msra.mxu0 %v1469
    %1762 = vmatprep.subr.mxu0 0.0
    %1763 = vmatpush1.msra.mxu0 %v1468
    %1764 = vmatprep.subr.mxu0 0.0
    %1765 = vmatpush1.msra.mxu0 %v1467
    %1766 = vmatprep.subr.mxu0 0.0
    %1767 = vmatpush1.msra.mxu0 %v1466
    %1768 = vmatprep.subr.mxu0 0.0
    %1769 = vmatpush1.msra.mxu0 %v1465
    %1770 = vmatprep.subr.mxu0 0.0
    %1771 = vmatpush1.msra.mxu0 %v1464
    %1772 = vmatprep.subr.mxu0 0.0
    %1773 = vmatpush1.msra.mxu0 %v1463
    %1774 = vmatprep.subr.mxu0 0.0
    %1775 = vmatpush1.msra.mxu0 %v1462
    %1776 = vmatprep.subr.mxu0 0.0
    %1777 = vmatpush1.msra.mxu0 %v1461
    %1778 = vmatprep.subr.mxu0 0.0
    %1779 = vmatpush1.msra.mxu0 %v1460
    %1780 = vmatprep.subr.mxu0 0.0
    %1781 = vmatpush2.msra.mxu0 %v1491
    %1782 = vmatprep.subr.mxu0 0.0
    %1783 = vmatpush2.msra.mxu0 %v1490
    %1784 = vmatprep.subr.mxu0 0.0
    %1785 = vmatpush2.msra.mxu0 %v1489
    %1786 = vmatprep.subr.mxu0 0.0
    %1787 = vmatpush2.msra.mxu0 %v1488
    %1788 = vmatprep.subr.mxu0 0.0
    %1789 = vmatpush2.msra.mxu0 %v1487
    %1790 = vmatprep.subr.mxu0 0.0
    %1791 = vmatpush2.msra.mxu0 %v1486
    %1792 = vmatprep.subr.mxu0 0.0
    %1793 = vmatpush2.msra.mxu0 %v1485
    %1794 = vmatprep.subr.mxu0 0.0
    %1795 = vmatpush2.msra.mxu0 %v1484
    %1796 = vmatprep.subr.mxu0 0.0
    %1797 = vmatpush2.msra.mxu0 %v1483
    %1798 = vmatprep.subr.mxu0 0.0
    %1799 = vmatpush2.msra.mxu0 %v1482
    %1800 = vmatprep.subr.mxu0 0.0
    %1801 = vmatpush2.msra.mxu0 %v1481
    %1802 = vmatprep.subr.mxu0 0.0
    %1803 = vmatpush2.msra.mxu0 %v1480
    %1804 = vmatprep.subr.mxu0 0.0
    %1805 = vmatpush2.msra.mxu0 %v1479
    %1806 = vmatprep.subr.mxu0 0.0
    %1807 = vmatpush2.msra.mxu0 %v1478
    %1808 = vmatprep.subr.mxu0 0.0
    %1809 = vmatpush2.msra.mxu0 %v1477
    %1810 = vmatprep.subr.mxu0 0.0
    %1811 = vmatpush2.msra.mxu0 %v1476
    %1812 = vmatprep.mubr.f32.mxu0 %v1493
    %1813 = vmatmul.mubr.f32.gmra.mxu0 %v1492
    %v1814 = vpop.f32.mrf.mxu0
    %v1815 = vadd.f32 %v1591, %v1814
    %v1816 = vpop.f32.mrf.mxu0
    %1817 = vmatprep.mubr.f32.mxu0 %v1495
    %1818 = vmatmul.mubr.f32.gmra.mxu0 %v1494
    %v1819 = vpop.f32.mrf.mxu0
    %v1820 = vadd.f32 %v1596, %v1819
    %v1821 = vpop.f32.mrf.mxu0
    %1822 = vmatprep.mubr.f32.mxu0 %v1497
    %1823 = vmatmul.mubr.f32.gmra.mxu0 %v1496
    %v1824 = vpop.f32.mrf.mxu0
    %v1825 = vadd.f32 %v1601, %v1824
    %v1826 = vpop.f32.mrf.mxu0
    %1827 = vmatprep.mubr.f32.mxu0 %v1499
    %1828 = vmatmul.mubr.f32.gmra.mxu0 %v1498
    %v1829 = vpop.f32.mrf.mxu0
    %v1830 = vadd.f32 %v1606, %v1829
    %v1831 = vpop.f32.mrf.mxu0
    %1832 = vmatprep.mubr.f32.mxu0 %v1501
    %1833 = vmatmul.mubr.f32.gmra.mxu0 %v1500
    %v1834 = vpop.f32.mrf.mxu0
    %v1835 = vadd.f32 %v1611, %v1834
    %v1836 = vpop.f32.mrf.mxu0
    %1837 = vmatprep.mubr.f32.mxu0 %v1503
    %1838 = vmatmul.mubr.f32.gmra.mxu0 %v1502
    %v1839 = vpop.f32.mrf.mxu0
    %v1840 = vadd.f32 %v1616, %v1839
    %v1841 = vpop.f32.mrf.mxu0
    %1842 = vmatprep.mubr.f32.mxu0 %v1505
    %1843 = vmatmul.mubr.f32.gmra.mxu0 %v1504
    %v1844 = vpop.f32.mrf.mxu0
    %v1845 = vadd.f32 %v1621, %v1844
    %v1846 = vpop.f32.mrf.mxu0
    %1847 = vmatprep.mubr.f32.mxu0 %v1507
    %1848 = vmatmul.mubr.f32.gmra.mxu0 %v1506
    %v1849 = vpop.f32.mrf.mxu0
    %v1850 = vadd.f32 %v1626, %v1849
    %v1851 = vpop.f32.mrf.mxu0
    %1852 = vmatprep.mubr.f32.mxu0 %v1509
    %1853 = vmatmul.mubr.f32.gmra.mxu0 %v1508
    %v1854 = vpop.f32.mrf.mxu0
    %v1855 = vadd.f32 %v1631, %v1854
    %v1856 = vpop.f32.mrf.mxu0
    %1857 = vmatprep.mubr.f32.mxu0 %v1511
    %1858 = vmatmul.mubr.f32.gmra.mxu0 %v1510
    %v1859 = vpop.f32.mrf.mxu0
    %v1860 = vadd.f32 %v1636, %v1859
    %v1861 = vpop.f32.mrf.mxu0
    %1862 = vmatprep.mubr.f32.mxu0 %v1513
    %1863 = vmatmul.mubr.f32.gmra.mxu0 %v1512
    %v1864 = vpop.f32.mrf.mxu0
    %v1865 = vadd.f32 %v1641, %v1864
    %v1866 = vpop.f32.mrf.mxu0
    %1867 = vmatprep.mubr.f32.mxu0 %v1515
    %1868 = vmatmul.mubr.f32.gmra.mxu0 %v1514
    %v1869 = vpop.f32.mrf.mxu0
    %v1870 = vadd.f32 %v1646, %v1869
    %v1871 = vpop.f32.mrf.mxu0
    %1872 = vmatprep.mubr.f32.mxu0 %v1517
    %1873 = vmatmul.mubr.f32.gmra.mxu0 %v1516
    %v1874 = vpop.f32.mrf.mxu0
    %v1875 = vadd.f32 %v1651, %v1874
    %v1876 = vpop.f32.mrf.mxu0
    %1877 = vmatprep.mubr.f32.mxu0 %v1519
    %1878 = vmatmul.mubr.f32.gmra.mxu0 %v1518
    %v1879 = vpop.f32.mrf.mxu0
    %v1880 = vadd.f32 %v1656, %v1879
    %v1881 = vpop.f32.mrf.mxu0
    %1882 = vmatprep.mubr.f32.mxu0 %v1521
    %1883 = vmatmul.mubr.f32.gmra.mxu0 %v1520
    %v1884 = vpop.f32.mrf.mxu0
    %v1885 = vadd.f32 %v1661, %v1884
    %v1886 = vpop.f32.mrf.mxu0
    %1887 = vmatprep.mubr.f32.mxu0 %v1523
    %1888 = vmatmul.mubr.f32.gmra.mxu0 %v1522
    %v1889 = vpop.f32.mrf.mxu0
    %v1890 = vadd.f32 %v1666, %v1889
    %v1891 = vpop.f32.mrf.mxu0
    %1892 = vmatprep.mubr.f32.mxu0 %v1525
    %1893 = vmatmul.mubr.f32.gmra.mxu0 %v1524
    %v1894 = vpop.f32.mrf.mxu0
    %v1895 = vadd.f32 %v1671, %v1894
    %v1896 = vpop.f32.mrf.mxu0
    %1897 = vmatprep.mubr.f32.mxu0 %v1527
    %1898 = vmatmul.mubr.f32.gmra.mxu0 %v1526
    %v1899 = vpop.f32.mrf.mxu0
    %v1900 = vadd.f32 %v1676, %v1899
    %v1901 = vpop.f32.mrf.mxu0
    %1902 = vmatprep.mubr.f32.mxu0 %v1529
    %1903 = vmatmul.mubr.f32.gmra.mxu0 %v1528
    %v1904 = vpop.f32.mrf.mxu0
    %v1905 = vadd.f32 %v1681, %v1904
    %v1906 = vpop.f32.mrf.mxu0
    %1907 = vmatprep.mubr.f32.mxu0 %v1531
    %1908 = vmatmul.mubr.f32.gmra.mxu0 %v1530
    %v1909 = vpop.f32.mrf.mxu0
    %v1910 = vadd.f32 %v1686, %v1909
    %v1911 = vpop.f32.mrf.mxu0
    %1912 = vmatprep.mubr.f32.mxu0 %v1533
    %1913 = vmatmul.mubr.f32.gmra.mxu0 %v1532
    %v1914 = vpop.f32.mrf.mxu0
    %v1915 = vadd.f32 %v1691, %v1914
    %v1916 = vpop.f32.mrf.mxu0
    %1917 = vmatprep.mubr.f32.mxu0 %v1535
    %1918 = vmatmul.mubr.f32.gmra.mxu0 %v1534
    %v1919 = vpop.f32.mrf.mxu0
    %v1920 = vadd.f32 %v1696, %v1919
    %v1921 = vpop.f32.mrf.mxu0
    %1922 = vmatprep.mubr.f32.mxu0 %v1537
    %1923 = vmatmul.mubr.f32.gmra.mxu0 %v1536
    %v1924 = vpop.f32.mrf.mxu0
    %v1925 = vadd.f32 %v1701, %v1924
    %v1926 = vpop.f32.mrf.mxu0
    %1927 = vmatprep.mubr.f32.mxu0 %v1539
    %1928 = vmatmul.mubr.f32.gmra.mxu0 %v1538
    %v1929 = vpop.f32.mrf.mxu0
    %v1930 = vadd.f32 %v1706, %v1929
    %v1931 = vpop.f32.mrf.mxu0
    %1932 = vmatprep.mubr.f32.mxu0 %v1541
    %1933 = vmatmul.mubr.f32.gmra.mxu0 %v1540
    %v1934 = vpop.f32.mrf.mxu0
    %v1935 = vadd.f32 %v1711, %v1934
    %v1936 = vpop.f32.mrf.mxu0
    %1937 = vmatprep.mubr.f32.mxu0 %v1543
    %1938 = vmatmul.mubr.f32.gmra.mxu0 %v1542
    %v1939 = vpop.f32.mrf.mxu0
    %v1940 = vadd.f32 %v1716, %v1939
    %v1941 = vpop.f32.mrf.mxu0
    %1942 = vmatprep.mubr.f32.mxu0 %v1545
    %1943 = vmatmul.mubr.f32.gmra.mxu0 %v1544
    %v1944 = vpop.f32.mrf.mxu0
    %v1945 = vadd.f32 %v1721, %v1944
    %v1946 = vpop.f32.mrf.mxu0
    %1947 = vmatprep.mubr.f32.mxu0 %v1547
    %1948 = vmatmul.mubr.f32.gmra.mxu0 %v1546
    %v1949 = vpop.f32.mrf.mxu0
    %v1950 = vadd.f32 %v1726, %v1949
    %v1951 = vpop.f32.mrf.mxu0
    %1952 = vmatprep.mubr.f32.mxu0 %v1549
    %1953 = vmatmul.mubr.f32.gmra.mxu0 %v1548
    %v1954 = vpop.f32.mrf.mxu0
    %v1955 = vadd.f32 %v1731, %v1954
    %v1956 = vpop.f32.mrf.mxu0
    %1957 = vmatprep.mubr.f32.mxu0 %v1551
    %1958 = vmatmul.mubr.f32.gmra.mxu0 %v1550
    %v1959 = vpop.f32.mrf.mxu0
    %v1960 = vadd.f32 %v1736, %v1959
    %v1961 = vpop.f32.mrf.mxu0
    %1962 = vmatprep.mubr.f32.mxu0 %v1553
    %1963 = vmatmul.mubr.f32.gmra.mxu0 %v1552
    %v1964 = vpop.f32.mrf.mxu0
    %v1965 = vadd.f32 %v1741, %v1964
    %v1966 = vpop.f32.mrf.mxu0
    %1967 = vmatprep.mubr.f32.mxu0 %v1555
    %1968 = vmatmul.mubr.f32.gmra.mxu0 %v1554
    %v1969 = vpop.f32.mrf.mxu0
    %v1970 = vadd.f32 %v1746, %v1969
    %v1971 = vpop.f32.mrf.mxu0
    %1972 = vdwg.mxu0
    %v1973 = vmax.f32 %v1815, 0.0
    %v1974 = vmax.f32 %v1820, 0.0
    %v1975 = vmax.f32 %v1825, 0.0
    %v1976 = vmax.f32 %v1830, 0.0
    %v1977 = vmax.f32 %v1835, 0.0
    %v1978 = vmax.f32 %v1840, 0.0
    %v1979 = vmax.f32 %v1845, 0.0
    %v1980 = vmax.f32 %v1850, 0.0
    %v1981 = vmax.f32 %v1855, 0.0
    %v1982 = vmax.f32 %v1860, 0.0
    %v1983 = vmax.f32 %v1865, 0.0
    %v1984 = vmax.f32 %v1870, 0.0
    %v1985 = vmax.f32 %v1875, 0.0
    %v1986 = vmax.f32 %v1880, 0.0
    %v1987 = vmax.f32 %v1885, 0.0
    %v1988 = vmax.f32 %v1890, 0.0
    %v1989 = vmax.f32 %v1895, 0.0
    %v1990 = vmax.f32 %v1900, 0.0
    %v1991 = vmax.f32 %v1905, 0.0
    %v1992 = vmax.f32 %v1910, 0.0
    %v1993 = vmax.f32 %v1915, 0.0
    %v1994 = vmax.f32 %v1920, 0.0
    %v1995 = vmax.f32 %v1925, 0.0
    %v1996 = vmax.f32 %v1930, 0.0
    %v1997 = vmax.f32 %v1935, 0.0
    %v1998 = vmax.f32 %v1940, 0.0
    %v1999 = vmax.f32 %v1945, 0.0
    %v2000 = vmax.f32 %v1950, 0.0
    %v2001 = vmax.f32 %v1955, 0.0
    %v2002 = vmax.f32 %v1960, 0.0
    %v2003 = vmax.f32 %v1965, 0.0
    %v2004 = vmax.f32 %v1970, 0.0
    %v2005 = vld [vmem:[%s5] sm:$0xff]
    %v2006 = vld [vmem:[%s5 + $0x8] sm:$0xff]
    %v2007 = vld [vmem:[%s6] sm:$0xff]
    %2009 = vset.pattern.permute.xlu0 0
    %2010 = vperm.xlu0 %2009, %v2007
    %v2011 = vpop.permute.xlu0 %2010
    %2013 = vmatprep.subr.mxu0 0.0
    %2014 = vmatpush1.msra.mxu0 %v1988
    %2015 = vmatprep.subr.mxu0 0.0
    %2016 = vmatpush1.msra.mxu0 %v1987
    %2017 = vmatprep.subr.mxu0 0.0
    %2018 = vmatpush1.msra.mxu0 %v1986
    %2019 = vmatprep.subr.mxu0 0.0
    %2020 = vmatpush1.msra.mxu0 %v1985
    %2021 = vmatprep.subr.mxu0 0.0
    %2022 = vmatpush1.msra.mxu0 %v1984
    %2023 = vmatprep.subr.mxu0 0.0
    %2024 = vmatpush1.msra.mxu0 %v1983
    %2025 = vmatprep.subr.mxu0 0.0
    %2026 = vmatpush1.msra.mxu0 %v1982
    %2027 = vmatprep.subr.mxu0 0.0
    %2028 = vmatpush1.msra.mxu0 %v1981
    %2029 = vmatprep.subr.mxu0 0.0
    %2030 = vmatpush1.msra.mxu0 %v1980
    %2031 = vmatprep.subr.mxu0 0.0
    %2032 = vmatpush1.msra.mxu0 %v1979
    %2033 = vmatprep.subr.mxu0 0.0
    %2034 = vmatpush1.msra.mxu0 %v1978
    %2035 = vmatprep.subr.mxu0 0.0
    %2036 = vmatpush1.msra.mxu0 %v1977
    %2037 = vmatprep.subr.mxu0 0.0
    %2038 = vmatpush1.msra.mxu0 %v1976
    %2039 = vmatprep.subr.mxu0 0.0
    %2040 = vmatpush1.msra.mxu0 %v1975
    %2041 = vmatprep.subr.mxu0 0.0
    %2042 = vmatpush1.msra.mxu0 %v1974
    %2043 = vmatprep.subr.mxu0 0.0
    %2044 = vmatpush1.msra.mxu0 %v1973
    %2045 = vmatprep.subr.mxu0 0.0
    %2046 = vmatpush2.msra.mxu0 %v2004
    %2047 = vmatprep.subr.mxu0 0.0
    %2048 = vmatpush2.msra.mxu0 %v2003
    %2049 = vmatprep.subr.mxu0 0.0
    %2050 = vmatpush2.msra.mxu0 %v2002
    %2051 = vmatprep.subr.mxu0 0.0
    %2052 = vmatpush2.msra.mxu0 %v2001
    %2053 = vmatprep.subr.mxu0 0.0
    %2054 = vmatpush2.msra.mxu0 %v2000
    %2055 = vmatprep.subr.mxu0 0.0
    %2056 = vmatpush2.msra.mxu0 %v1999
    %2057 = vmatprep.subr.mxu0 0.0
    %2058 = vmatpush2.msra.mxu0 %v1998
    %2059 = vmatprep.subr.mxu0 0.0
    %2060 = vmatpush2.msra.mxu0 %v1997
    %2061 = vmatprep.subr.mxu0 0.0
    %2062 = vmatpush2.msra.mxu0 %v1996
    %2063 = vmatprep.subr.mxu0 0.0
    %2064 = vmatpush2.msra.mxu0 %v1995
    %2065 = vmatprep.subr.mxu0 0.0
    %2066 = vmatpush2.msra.mxu0 %v1994
    %2067 = vmatprep.subr.mxu0 0.0
    %2068 = vmatpush2.msra.mxu0 %v1993
    %2069 = vmatprep.subr.mxu0 0.0
    %2070 = vmatpush2.msra.mxu0 %v1992
    %2071 = vmatprep.subr.mxu0 0.0
    %2072 = vmatpush2.msra.mxu0 %v1991
    %2073 = vmatprep.subr.mxu0 0.0
    %2074 = vmatpush2.msra.mxu0 %v1990
    %2075 = vmatprep.subr.mxu0 0.0
    %2076 = vmatpush2.msra.mxu0 %v1989
    %2077 = vmatprep.mubr.f32.mxu0 %v2006
    %2078 = vmatmul.mubr.f32.gmra.mxu0 %v2005
    %v2079 = vpop.f32.mrf.mxu0
    %v2080 = vadd.f32 %v2011, %v2079
    %v2081 = vpop.f32.mrf.mxu0
    %2082 = vdwg.mxu0
    %v2084 = vrot.slane %v2080, 7
    %v2086 = vsub.f32 %v2080, %v2084
    %v2087 = vmul.f32 %v2086, 1.442695
    %v2088 = vpow.pop %v2087
    %v2089 = vadd.f32 %v2088, 1.0
    %v2090 = vrcp.pop %v2089
    %v2091 = vmul.f32 1.0, %v2090
    %v2092 = vsub.f32 1.0, %v2091
    %v2093 = vlaneseq
    %v2094 = vshrl.u32 %v2093, 7
    %vm2095 = vcmp.eq.s32.totalorder %v2094, 0
    %vm2096 = vcmp.eq.s32.totalorder %v2094, 1
    %vm2097 = vcmp.eq.s32.totalorder %v2094, 2
    %v2098 = vsel %vm2097, %v2080, 0.0
    %v2099 = vlaneseq
    %v2100 = vshrl.u32 %v2099, 7
    %v2101 = vsub.s32 1, %v2100
    %v2102 = vrot.slane %v2092, %v2101
    %v2103 = vsel %vm2096, %v2102, %v2098
    %v2104 = vlaneseq
    %v2105 = vshrl.u32 %v2104, 7
    %v2106 = vsub.s32 1, %v2105
    %v2107 = vrot.slane %v2091, %v2106
    %v2108 = vsel %vm2095, %v2107, %v2103
    %2109 = vst [vmem:[#allocation2] sm:$0xff] %v2108
    // Predicated region
    $region30: #{tpu_custom_call.1} parent=1 // pred_check
      _
    $region31: #{tpu_custom_call.1} parent=1 // pred_check_branch
      %2111 = sbr.rel (0) target = $region33
    $region32: #{tpu_custom_call.1} parent=1 // pred_region
      %s2113 = ssub.s32 128, 128
      %2114 = vsyncadd [#allocation3], %s2113
      %s2116 = sshll.u32 [#allocation2], 4
      %s2117 = int_to_ptr.vmem [resolvable:$true] %s2116
      %2119 = dma.vmem_to_hbm [thread:$0]  %s2117, 128, %s7, [#allocation3]
    $region33: #{tpu_custom_call.1} parent=1 // pred_fallthru
      _
    // Predicated region
    $region34: #{tpu_custom_call.1} parent=1 // pred_check
      _
    $region35: #{tpu_custom_call.1} parent=1 // pred_check_branch
      %2121 = sbr.rel (0) target = $region37
    $region36: #{tpu_custom_call.1} parent=1 // pred_region
      %2122 = dma.done [#allocation3], 128
    $region37: #{tpu_custom_call.1} parent=1 // pred_fallthru
      _
    %2123 = vsyncpa [#allocation3], 1

// kernel: tpu_custom_call.1
$region0: #{tpu_custom_call.1}
  #allocation0 [shape = 'u32[]', space=smem, size = 0x4, offset = 0x4, fixed_abs, tag = 'smem constant byte address 0x4 - core index']
  #allocation1 [shape = 'u32[144,128]{1,0:T(1,128)}', space=vmem, size = 0x12000, scoped, tag = 'internal scratch']
  %s0 = inlined_call_operand.vmem [shape: f32[6,128], index: 0, kind: input, shape index: {}]
  %s1 = inlined_call_operand.vmem [shape: f32[256,6], index: 1, kind: input, shape index: {}]
  %s2 = inlined_call_operand.vmem [shape: f32[256,1], index: 2, kind: input, shape index: {}]
  %s3 = inlined_call_operand.vmem [shape: f32[256,256], index: 3, kind: input, shape index: {}]
  %s4 = inlined_call_operand.vmem [shape: f32[256,1], index: 4, kind: input, shape index: {}]
  %s5 = inlined_call_operand.vmem [shape: f32[8,256], index: 5, kind: input, shape index: {}]
  %s6 = inlined_call_operand.vmem [shape: f32[8,1], index: 6, kind: input, shape index: {}]
  %s7 = inlined_call_operand.hbm [shape: f32[8,128], index: 7, kind: output, shape index: {}]
  %s8 = sld [smem:[#allocation0]]
  $region38: #{tpu_custom_call.1} parent=0
    _
  %s10 = ssub.s32 1, %s8
  %s11 = scalar_select 0, %s10, %s8
  $region1: #{tpu_custom_call.1} parent=0
    #allocation2 [shape = 'u8[4096]{0}', space=vmem, size = 0x1000, scoped, tag = 'output window, operand 0, single buffered']
    #allocation3 [shape = 's32[1]{0}', space=sflag, size = 0x4, scoped, tag = 'scoped memory for tpu_custom_call.1']
    %12 = vsyncpa [#allocation3], 0
    // Predicated region
    $region2: #{tpu_custom_call.1} parent=1 // pred_check
      _
    $region3: #{tpu_custom_call.1} parent=1 // pred_check_branch
      %14 = sbr.rel (0) target = $region5
    $region4: #{tpu_custom_call.1} parent=1 // pred_region
      _
    $region5: #{tpu_custom_call.1} parent=1 // pred_fallthru
      _
    // Predicated region
    $region6: #{tpu_custom_call.1} parent=1 // pred_check
      _
    $region7: #{tpu_custom_call.1} parent=1 // pred_check_branch
      %16 = sbr.rel (0) target = $region9
    $region8: #{tpu_custom_call.1} parent=1 // pred_region
      _
    $region9: #{tpu_custom_call.1} parent=1 // pred_fallthru
      _
    // Predicated region
    $region10: #{tpu_custom_call.1} parent=1 // pred_check
      _
    $region11: #{tpu_custom_call.1} parent=1 // pred_check_branch
      %18 = sbr.rel (0) target = $region13
    $region12: #{tpu_custom_call.1} parent=1 // pred_region
      _
    $region13: #{tpu_custom_call.1} parent=1 // pred_fallthru
      _
    // Predicated region
    $region14: #{tpu_custom_call.1} parent=1 // pred_check
      _
    $region15: #{tpu_custom_call.1} parent=1 // pred_check_branch
      %20 = sbr.rel (0) target = $region17
    $region16: #{tpu_custom_call.1} parent=1 // pred_region
      _
    $region17: #{tpu_custom_call.1} parent=1 // pred_fallthru
      _
    // Predicated region
    $region18: #{tpu_custom_call.1} parent=1 // pred_check
      _
    $region19: #{tpu_custom_call.1} parent=1 // pred_check_branch
      %22 = sbr.rel (0) target = $region21
    $region20: #{tpu_custom_call.1} parent=1 // pred_region
      _
    $region21: #{tpu_custom_call.1} parent=1 // pred_fallthru
      _
    // Predicated region
    $region22: #{tpu_custom_call.1} parent=1 // pred_check
      _
    $region23: #{tpu_custom_call.1} parent=1 // pred_check_branch
      %24 = sbr.rel (0) target = $region25
    $region24: #{tpu_custom_call.1} parent=1 // pred_region
      _
    $region25: #{tpu_custom_call.1} parent=1 // pred_fallthru
      _
    // Predicated region
    $region26: #{tpu_custom_call.1} parent=1 // pred_check
      _
    $region27: #{tpu_custom_call.1} parent=1 // pred_check_branch
      %26 = sbr.rel (0) target = $region29
    $region28: #{tpu_custom_call.1} parent=1 // pred_region
      _
    $region29: #{tpu_custom_call.1} parent=1 // pred_fallthru
      _
    %v27 = vld [vmem:[%s0] sm:$0x3f]
    %v28 = vld [vmem:[%s1] sm:$0xff]
    %v29 = vld [vmem:[%s1 + $0x8] sm:$0xff]
    %v30 = vld [vmem:[%s1 + $0x10] sm:$0xff]
    %v31 = vld [vmem:[%s1 + $0x18] sm:$0xff]
    %v32 = vld [vmem:[%s1 + $0x20] sm:$0xff]
    %v33 = vld [vmem:[%s1 + $0x28] sm:$0xff]
    %v34 = vld [vmem:[%s1 + $0x30] sm:$0xff]
    %v35 = vld [vmem:[%s1 + $0x38] sm:$0xff]
    %v36 = vld [vmem:[%s1 + $0x40] sm:$0xff]
    %v37 = vld [vmem:[%s1 + $0x48] sm:$0xff]
    %v38 = vld [vmem:[%s1 + $0x50] sm:$0xff]
    %v39 = vld [vmem:[%s1 + $0x58] sm:$0xff]
    %v40 = vld [vmem:[%s1 + $0x60] sm:$0xff]
    %v41 = vld [vmem:[%s1 + $0x68] sm:$0xff]
    %v42 = vld [vmem:[%s1 + $0x70] sm:$0xff]
    %v43 = vld [vmem:[%s1 + $0x78] sm:$0xff]
    %v44 = vld [vmem:[%s1 + $0x80] sm:$0xff]
    %v45 = vld [vmem:[%s1 + $0x88] sm:$0xff]
    %v46 = vld [vmem:[%s1 + $0x90] sm:$0xff]
    %v47 = vld [vmem:[%s1 + $0x98] sm:$0xff]
    %v48 = vld [vmem:[%s1 + $0xa0] sm:$0xff]
    %v49 = vld [vmem:[%s1 + $0xa8] sm:$0xff]
    %v50 = vld [vmem:[%s1 + $0xb0] sm:$0xff]
    %v51 = vld [vmem:[%s1 + $0xb8] sm:$0xff]
    %v52 = vld [vmem:[%s1 + $0xc0] sm:$0xff]
    %v53 = vld [vmem:[%s1 + $0xc8] sm:$0xff]
    %v54 = vld [vmem:[%s1 + $0xd0] sm:$0xff]
    %v55 = vld [vmem:[%s1 + $0xd8] sm:$0xff]
    %v56 = vld [vmem:[%s1 + $0xe0] sm:$0xff]
    %v57 = vld [vmem:[%s1 + $0xe8] sm:$0xff]
    %v58 = vld [vmem:[%s1 + $0xf0] sm:$0xff]
    %v59 = vld [vmem:[%s1 + $0xf8] sm:$0xff]
    %v60 = vld [vmem:[%s2] sm:$0xff]
    %v61 = vld [vmem:[%s2 + $0x8] sm:$0xff]
    %v62 = vld [vmem:[%s2 + $0x10] sm:$0xff]
    %v63 = vld [vmem:[%s2 + $0x18] sm:$0xff]
    %v64 = vld [vmem:[%s2 + $0x20] sm:$0xff]
    %v65 = vld [vmem:[%s2 + $0x28] sm:$0xff]
    %v66 = vld [vmem:[%s2 + $0x30] sm:$0xff]
    %v67 = vld [vmem:[%s2 + $0x38] sm:$0xff]
    %v68 = vld [vmem:[%s2 + $0x40] sm:$0xff]
    %v69 = vld [vmem:[%s2 + $0x48] sm:$0xff]
    %v70 = vld [vmem:[%s2 + $0x50] sm:$0xff]
    %v71 = vld [vmem:[%s2 + $0x58] sm:$0xff]
    %v72 = vld [vmem:[%s2 + $0x60] sm:$0xff]
    %v73 = vld [vmem:[%s2 + $0x68] sm:$0xff]
    %v74 = vld [vmem:[%s2 + $0x70] sm:$0xff]
    %v75 = vld [vmem:[%s2 + $0x78] sm:$0xff]
    %v76 = vld [vmem:[%s2 + $0x80] sm:$0xff]
    %v77 = vld [vmem:[%s2 + $0x88] sm:$0xff]
    %v78 = vld [vmem:[%s2 + $0x90] sm:$0xff]
    %v79 = vld [vmem:[%s2 + $0x98] sm:$0xff]
    %v80 = vld [vmem:[%s2 + $0xa0] sm:$0xff]
    %v81 = vld [vmem:[%s2 + $0xa8] sm:$0xff]
    %v82 = vld [vmem:[%s2 + $0xb0] sm:$0xff]
    %v83 = vld [vmem:[%s2 + $0xb8] sm:$0xff]
    %v84 = vld [vmem:[%s2 + $0xc0] sm:$0xff]
    %v85 = vld [vmem:[%s2 + $0xc8] sm:$0xff]
    %v86 = vld [vmem:[%s2 + $0xd0] sm:$0xff]
    %v87 = vld [vmem:[%s2 + $0xd8] sm:$0xff]
    %v88 = vld [vmem:[%s2 + $0xe0] sm:$0xff]
    %v89 = vld [vmem:[%s2 + $0xe8] sm:$0xff]
    %v90 = vld [vmem:[%s2 + $0xf0] sm:$0xff]
    %v91 = vld [vmem:[%s2 + $0xf8] sm:$0xff]
    %93 = vset.pattern.permute.xlu0 0
    %94 = vperm.xlu0 %93, %v28
    %v95 = vpop.permute.xlu0 %94
    %98 = vset.pattern.permute.xlu0 0
    %99 = vperm.xlu0 %98, %v29
    %v100 = vpop.permute.xlu0 %99
    %103 = vset.pattern.permute.xlu0 0
    %104 = vperm.xlu0 %103, %v30
    %v105 = vpop.permute.xlu0 %104
    %108 = vset.pattern.permute.xlu0 0
    %109 = vperm.xlu0 %108, %v31
    %v110 = vpop.permute.xlu0 %109
    %113 = vset.pattern.permute.xlu0 0
    %114 = vperm.xlu0 %113, %v32
    %v115 = vpop.permute.xlu0 %114
    %118 = vset.pattern.permute.xlu0 0
    %119 = vperm.xlu0 %118, %v33
    %v120 = vpop.permute.xlu0 %119
    %123 = vset.pattern.permute.xlu0 0
    %124 = vperm.xlu0 %123, %v34
    %v125 = vpop.permute.xlu0 %124
    %128 = vset.pattern.permute.xlu0 0
    %129 = vperm.xlu0 %128, %v35
    %v130 = vpop.permute.xlu0 %129
    %133 = vset.pattern.permute.xlu0 0
    %134 = vperm.xlu0 %133, %v36
    %v135 = vpop.permute.xlu0 %134
    %138 = vset.pattern.permute.xlu0 0
    %139 = vperm.xlu0 %138, %v37
    %v140 = vpop.permute.xlu0 %139
    %143 = vset.pattern.permute.xlu0 0
    %144 = vperm.xlu0 %143, %v38
    %v145 = vpop.permute.xlu0 %144
    %148 = vset.pattern.permute.xlu0 0
    %149 = vperm.xlu0 %148, %v39
    %v150 = vpop.permute.xlu0 %149
    %153 = vset.pattern.permute.xlu0 0
    %154 = vperm.xlu0 %153, %v40
    %v155 = vpop.permute.xlu0 %154
    %158 = vset.pattern.permute.xlu0 0
    %159 = vperm.xlu0 %158, %v41
    %v160 = vpop.permute.xlu0 %159
    %163 = vset.pattern.permute.xlu0 0
    %164 = vperm.xlu0 %163, %v42
    %v165 = vpop.permute.xlu0 %164
    %168 = vset.pattern.permute.xlu0 0
    %169 = vperm.xlu0 %168, %v43
    %v170 = vpop.permute.xlu0 %169
    %173 = vset.pattern.permute.xlu0 0
    %174 = vperm.xlu0 %173, %v44
    %v175 = vpop.permute.xlu0 %174
    %178 = vset.pattern.permute.xlu0 0
    %179 = vperm.xlu0 %178, %v45
    %v180 = vpop.permute.xlu0 %179
    %183 = vset.pattern.permute.xlu0 0
    %184 = vperm.xlu0 %183, %v46
    %v185 = vpop.permute.xlu0 %184
    %188 = vset.pattern.permute.xlu0 0
    %189 = vperm.xlu0 %188, %v47
    %v190 = vpop.permute.xlu0 %189
    %193 = vset.pattern.permute.xlu0 0
    %194 = vperm.xlu0 %193, %v48
    %v195 = vpop.permute.xlu0 %194
    %198 = vset.pattern.permute.xlu0 0
    %199 = vperm.xlu0 %198, %v49
    %v200 = vpop.permute.xlu0 %199
    %203 = vset.pattern.permute.xlu0 0
    %204 = vperm.xlu0 %203, %v50
    %v205 = vpop.permute.xlu0 %204
    %208 = vset.pattern.permute.xlu0 0
    %209 = vperm.xlu0 %208, %v51
    %v210 = vpop.permute.xlu0 %209
    %213 = vset.pattern.permute.xlu0 0
    %214 = vperm.xlu0 %213, %v52
    %v215 = vpop.permute.xlu0 %214
    %218 = vset.pattern.permute.xlu0 0
    %219 = vperm.xlu0 %218, %v53
    %v220 = vpop.permute.xlu0 %219
    %223 = vset.pattern.permute.xlu0 0
    %224 = vperm.xlu0 %223, %v54
    %v225 = vpop.permute.xlu0 %224
    %228 = vset.pattern.permute.xlu0 0
    %229 = vperm.xlu0 %228, %v55
    %v230 = vpop.permute.xlu0 %229
    %233 = vset.pattern.permute.xlu0 0
    %234 = vperm.xlu0 %233, %v56
    %v235 = vpop.permute.xlu0 %234
    %238 = vset.pattern.permute.xlu0 0
    %239 = vperm.xlu0 %238, %v57
    %v240 = vpop.permute.xlu0 %239
    %243 = vset.pattern.permute.xlu0 0
    %244 = vperm.xlu0 %243, %v58
    %v245 = vpop.permute.xlu0 %244
    %248 = vset.pattern.permute.xlu0 0
    %249 = vperm.xlu0 %248, %v59
    %v250 = vpop.permute.xlu0 %249
    %v252 = vlaneseq
    %v253 = vshrl.u32 %v252, 7
    %v254 = vsub.s32 0, %v253
    %v255 = vrot.slane %v27, %v254
    %v256 = vmul.f32 %v95, %v255
    %v257 = vmul.f32 %v100, %v255
    %v258 = vmul.f32 %v105, %v255
    %v259 = vmul.f32 %v110, %v255
    %v260 = vmul.f32 %v115, %v255
    %v261 = vmul.f32 %v120, %v255
    %v262 = vmul.f32 %v125, %v255
    %v263 = vmul.f32 %v130, %v255
    %v264 = vmul.f32 %v135, %v255
    %v265 = vmul.f32 %v140, %v255
    %v266 = vmul.f32 %v145, %v255
    %v267 = vmul.f32 %v150, %v255
    %v268 = vmul.f32 %v155, %v255
    %v269 = vmul.f32 %v160, %v255
    %v270 = vmul.f32 %v165, %v255
    %v271 = vmul.f32 %v170, %v255
    %v272 = vmul.f32 %v175, %v255
    %v273 = vmul.f32 %v180, %v255
    %v274 = vmul.f32 %v185, %v255
    %v275 = vmul.f32 %v190, %v255
    %v276 = vmul.f32 %v195, %v255
    %v277 = vmul.f32 %v200, %v255
    %v278 = vmul.f32 %v205, %v255
    %v279 = vmul.f32 %v210, %v255
    %v280 = vmul.f32 %v215, %v255
    %v281 = vmul.f32 %v220, %v255
    %v282 = vmul.f32 %v225, %v255
    %v283 = vmul.f32 %v230, %v255
    %v284 = vmul.f32 %v235, %v255
    %v285 = vmul.f32 %v240, %v255
    %v286 = vmul.f32 %v245, %v255
    %v287 = vmul.f32 %v250, %v255
    %289 = vset.pattern.permute.xlu0 0
    %290 = vperm.xlu0 %289, %v60
    %v291 = vpop.permute.xlu0 %290
    %294 = vset.pattern.permute.xlu0 0
    %295 = vperm.xlu0 %294, %v61
    %v296 = vpop.permute.xlu0 %295
    %299 = vset.pattern.permute.xlu0 0
    %300 = vperm.xlu0 %299, %v62
    %v301 = vpop.permute.xlu0 %300
    %304 = vset.pattern.permute.xlu0 0
    %305 = vperm.xlu0 %304, %v63
    %v306 = vpop.permute.xlu0 %305
    %309 = vset.pattern.permute.xlu0 0
    %310 = vperm.xlu0 %309, %v64
    %v311 = vpop.permute.xlu0 %310
    %314 = vset.pattern.permute.xlu0 0
    %315 = vperm.xlu0 %314, %v65
    %v316 = vpop.permute.xlu0 %315
    %319 = vset.pattern.permute.xlu0 0
    %320 = vperm.xlu0 %319, %v66
    %v321 = vpop.permute.xlu0 %320
    %324 = vset.pattern.permute.xlu0 0
    %325 = vperm.xlu0 %324, %v67
    %v326 = vpop.permute.xlu0 %325
    %329 = vset.pattern.permute.xlu0 0
    %330 = vperm.xlu0 %329, %v68
    %v331 = vpop.permute.xlu0 %330
    %334 = vset.pattern.permute.xlu0 0
    %335 = vperm.xlu0 %334, %v69
    %v336 = vpop.permute.xlu0 %335
    %339 = vset.pattern.permute.xlu0 0
    %340 = vperm.xlu0 %339, %v70
    %v341 = vpop.permute.xlu0 %340
    %344 = vset.pattern.permute.xlu0 0
    %345 = vperm.xlu0 %344, %v71
    %v346 = vpop.permute.xlu0 %345
    %349 = vset.pattern.permute.xlu0 0
    %350 = vperm.xlu0 %349, %v72
    %v351 = vpop.permute.xlu0 %350
    %354 = vset.pattern.permute.xlu0 0
    %355 = vperm.xlu0 %354, %v73
    %v356 = vpop.permute.xlu0 %355
    %359 = vset.pattern.permute.xlu0 0
    %360 = vperm.xlu0 %359, %v74
    %v361 = vpop.permute.xlu0 %360
    %364 = vset.pattern.permute.xlu0 0
    %365 = vperm.xlu0 %364, %v75
    %v366 = vpop.permute.xlu0 %365
    %369 = vset.pattern.permute.xlu0 0
    %370 = vperm.xlu0 %369, %v76
    %v371 = vpop.permute.xlu0 %370
    %374 = vset.pattern.permute.xlu0 0
    %375 = vperm.xlu0 %374, %v77
    %v376 = vpop.permute.xlu0 %375
    %379 = vset.pattern.permute.xlu0 0
    %380 = vperm.xlu0 %379, %v78
    %v381 = vpop.permute.xlu0 %380
    %384 = vset.pattern.permute.xlu0 0
    %385 = vperm.xlu0 %384, %v79
    %v386 = vpop.permute.xlu0 %385
    %389 = vset.pattern.permute.xlu0 0
    %390 = vperm.xlu0 %389, %v80
    %v391 = vpop.permute.xlu0 %390
    %394 = vset.pattern.permute.xlu0 0
    %395 = vperm.xlu0 %394, %v81
    %v396 = vpop.permute.xlu0 %395
    %399 = vset.pattern.permute.xlu0 0
    %400 = vperm.xlu0 %399, %v82
    %v401 = vpop.permute.xlu0 %400
    %404 = vset.pattern.permute.xlu0 0
    %405 = vperm.xlu0 %404, %v83
    %v406 = vpop.permute.xlu0 %405
    %409 = vset.pattern.permute.xlu0 0
    %410 = vperm.xlu0 %409, %v84
    %v411 = vpop.permute.xlu0 %410
    %414 = vset.pattern.permute.xlu0 0
    %415 = vperm.xlu0 %414, %v85
    %v416 = vpop.permute.xlu0 %415
    %419 = vset.pattern.permute.xlu0 0
    %420 = vperm.xlu0 %419, %v86
    %v421 = vpop.permute.xlu0 %420
    %424 = vset.pattern.permute.xlu0 0
    %425 = vperm.xlu0 %424, %v87
    %v426 = vpop.permute.xlu0 %425
    %429 = vset.pattern.permute.xlu0 0
    %430 = vperm.xlu0 %429, %v88
    %v431 = vpop.permute.xlu0 %430
    %434 = vset.pattern.permute.xlu0 0
    %435 = vperm.xlu0 %434, %v89
    %v436 = vpop.permute.xlu0 %435
    %439 = vset.pattern.permute.xlu0 0
    %440 = vperm.xlu0 %439, %v90
    %v441 = vpop.permute.xlu0 %440
    %444 = vset.pattern.permute.xlu0 0
    %445 = vperm.xlu0 %444, %v91
    %v446 = vpop.permute.xlu0 %445
    %v448 = vadd.f32 %v291, %v256
    %v449 = vadd.f32 %v296, %v257
    %v450 = vadd.f32 %v301, %v258
    %v451 = vadd.f32 %v306, %v259
    %v452 = vadd.f32 %v311, %v260
    %v453 = vadd.f32 %v316, %v261
    %v454 = vadd.f32 %v321, %v262
    %v455 = vadd.f32 %v326, %v263
    %v456 = vadd.f32 %v331, %v264
    %v457 = vadd.f32 %v336, %v265
    %v458 = vadd.f32 %v341, %v266
    %v459 = vadd.f32 %v346, %v267
    %v460 = vadd.f32 %v351, %v268
    %v461 = vadd.f32 %v356, %v269
    %v462 = vadd.f32 %v361, %v270
    %v463 = vadd.f32 %v366, %v271
    %v464 = vadd.f32 %v371, %v272
    %v465 = vadd.f32 %v376, %v273
    %v466 = vadd.f32 %v381, %v274
    %v467 = vadd.f32 %v386, %v275
    %v468 = vadd.f32 %v391, %v276
    %v469 = vadd.f32 %v396, %v277
    %v470 = vadd.f32 %v401, %v278
    %v471 = vadd.f32 %v406, %v279
    %v472 = vadd.f32 %v411, %v280
    %v473 = vadd.f32 %v416, %v281
    %v474 = vadd.f32 %v421, %v282
    %v475 = vadd.f32 %v426, %v283
    %v476 = vadd.f32 %v431, %v284
    %v477 = vadd.f32 %v436, %v285
    %v478 = vadd.f32 %v441, %v286
    %v479 = vadd.f32 %v446, %v287
    %480 = vset.pattern.permute.xlu0 1
    %481 = vperm.xlu0 %480, %v28
    %v482 = vpop.permute.xlu0 %481
    %484 = vset.pattern.permute.xlu0 1
    %485 = vperm.xlu0 %484, %v29
    %v486 = vpop.permute.xlu0 %485
    %488 = vset.pattern.permute.xlu0 1
    %489 = vperm.xlu0 %488, %v30
    %v490 = vpop.permute.xlu0 %489
    %492 = vset.pattern.permute.xlu0 1
    %493 = vperm.xlu0 %492, %v31
    %v494 = vpop.permute.xlu0 %493
    %496 = vset.pattern.permute.xlu0 1
    %497 = vperm.xlu0 %496, %v32
    %v498 = vpop.permute.xlu0 %497
    %500 = vset.pattern.permute.xlu0 1
    %501 = vperm.xlu0 %500, %v33
    %v502 = vpop.permute.xlu0 %501
    %504 = vset.pattern.permute.xlu0 1
    %505 = vperm.xlu0 %504, %v34
    %v506 = vpop.permute.xlu0 %505
    %508 = vset.pattern.permute.xlu0 1
    %509 = vperm.xlu0 %508, %v35
    %v510 = vpop.permute.xlu0 %509
    %512 = vset.pattern.permute.xlu0 1
    %513 = vperm.xlu0 %512, %v36
    %v514 = vpop.permute.xlu0 %513
    %516 = vset.pattern.permute.xlu0 1
    %517 = vperm.xlu0 %516, %v37
    %v518 = vpop.permute.xlu0 %517
    %520 = vset.pattern.permute.xlu0 1
    %521 = vperm.xlu0 %520, %v38
    %v522 = vpop.permute.xlu0 %521
    %524 = vset.pattern.permute.xlu0 1
    %525 = vperm.xlu0 %524, %v39
    %v526 = vpop.permute.xlu0 %525
    %528 = vset.pattern.permute.xlu0 1
    %529 = vperm.xlu0 %528, %v40
    %v530 = vpop.permute.xlu0 %529
    %532 = vset.pattern.permute.xlu0 1
    %533 = vperm.xlu0 %532, %v41
    %v534 = vpop.permute.xlu0 %533
    %536 = vset.pattern.permute.xlu0 1
    %537 = vperm.xlu0 %536, %v42
    %v538 = vpop.permute.xlu0 %537
    %540 = vset.pattern.permute.xlu0 1
    %541 = vperm.xlu0 %540, %v43
    %v542 = vpop.permute.xlu0 %541
    %544 = vset.pattern.permute.xlu0 1
    %545 = vperm.xlu0 %544, %v44
    %v546 = vpop.permute.xlu0 %545
    %548 = vset.pattern.permute.xlu0 1
    %549 = vperm.xlu0 %548, %v45
    %v550 = vpop.permute.xlu0 %549
    %552 = vset.pattern.permute.xlu0 1
    %553 = vperm.xlu0 %552, %v46
    %v554 = vpop.permute.xlu0 %553
    %556 = vset.pattern.permute.xlu0 1
    %557 = vperm.xlu0 %556, %v47
    %v558 = vpop.permute.xlu0 %557
    %560 = vset.pattern.permute.xlu0 1
    %561 = vperm.xlu0 %560, %v48
    %v562 = vpop.permute.xlu0 %561
    %564 = vset.pattern.permute.xlu0 1
    %565 = vperm.xlu0 %564, %v49
    %v566 = vpop.permute.xlu0 %565
    %568 = vset.pattern.permute.xlu0 1
    %569 = vperm.xlu0 %568, %v50
    %v570 = vpop.permute.xlu0 %569
    %572 = vset.pattern.permute.xlu0 1
    %573 = vperm.xlu0 %572, %v51
    %v574 = vpop.permute.xlu0 %573
    %576 = vset.pattern.permute.xlu0 1
    %577 = vperm.xlu0 %576, %v52
    %v578 = vpop.permute.xlu0 %577
    %580 = vset.pattern.permute.xlu0 1
    %581 = vperm.xlu0 %580, %v53
    %v582 = vpop.permute.xlu0 %581
    %584 = vset.pattern.permute.xlu0 1
    %585 = vperm.xlu0 %584, %v54
    %v586 = vpop.permute.xlu0 %585
    %588 = vset.pattern.permute.xlu0 1
    %589 = vperm.xlu0 %588, %v55
    %v590 = vpop.permute.xlu0 %589
    %592 = vset.pattern.permute.xlu0 1
    %593 = vperm.xlu0 %592, %v56
    %v594 = vpop.permute.xlu0 %593
    %596 = vset.pattern.permute.xlu0 1
    %597 = vperm.xlu0 %596, %v57
    %v598 = vpop.permute.xlu0 %597
    %600 = vset.pattern.permute.xlu0 1
    %601 = vperm.xlu0 %600, %v58
    %v602 = vpop.permute.xlu0 %601
    %604 = vset.pattern.permute.xlu0 1
    %605 = vperm.xlu0 %604, %v59
    %v606 = vpop.permute.xlu0 %605
    %v608 = vlaneseq
    %v609 = vshrl.u32 %v608, 7
    %v610 = vsub.s32 1, %v609
    %v611 = vrot.slane %v27, %v610
    %v612 = vmul.f32 %v482, %v611
    %v613 = vmul.f32 %v486, %v611
    %v614 = vmul.f32 %v490, %v611
    %v615 = vmul.f32 %v494, %v611
    %v616 = vmul.f32 %v498, %v611
    %v617 = vmul.f32 %v502, %v611
    %v618 = vmul.f32 %v506, %v611
    %v619 = vmul.f32 %v510, %v611
    %v620 = vmul.f32 %v514, %v611
    %v621 = vmul.f32 %v518, %v611
    %v622 = vmul.f32 %v522, %v611
    %v623 = vmul.f32 %v526, %v611
    %v624 = vmul.f32 %v530, %v611
    %v625 = vmul.f32 %v534, %v611
    %v626 = vmul.f32 %v538, %v611
    %v627 = vmul.f32 %v542, %v611
    %v628 = vmul.f32 %v546, %v611
    %v629 = vmul.f32 %v550, %v611
    %v630 = vmul.f32 %v554, %v611
    %v631 = vmul.f32 %v558, %v611
    %v632 = vmul.f32 %v562, %v611
    %v633 = vmul.f32 %v566, %v611
    %v634 = vmul.f32 %v570, %v611
    %v635 = vmul.f32 %v574, %v611
    %v636 = vmul.f32 %v578, %v611
    %v637 = vmul.f32 %v582, %v611
    %v638 = vmul.f32 %v586, %v611
    %v639 = vmul.f32 %v590, %v611
    %v640 = vmul.f32 %v594, %v611
    %v641 = vmul.f32 %v598, %v611
    %v642 = vmul.f32 %v602, %v611
    %v643 = vmul.f32 %v606, %v611
    %v644 = vadd.f32 %v448, %v612
    %v645 = vadd.f32 %v449, %v613
    %v646 = vadd.f32 %v450, %v614
    %v647 = vadd.f32 %v451, %v615
    %v648 = vadd.f32 %v452, %v616
    %v649 = vadd.f32 %v453, %v617
    %v650 = vadd.f32 %v454, %v618
    %v651 = vadd.f32 %v455, %v619
    %v652 = vadd.f32 %v456, %v620
    %v653 = vadd.f32 %v457, %v621
    %v654 = vadd.f32 %v458, %v622
    %v655 = vadd.f32 %v459, %v623
    %v656 = vadd.f32 %v460, %v624
    %v657 = vadd.f32 %v461, %v625
    %v658 = vadd.f32 %v462, %v626
    %v659 = vadd.f32 %v463, %v627
    %v660 = vadd.f32 %v464, %v628
    %v661 = vadd.f32 %v465, %v629
    %v662 = vadd.f32 %v466, %v630
    %v663 = vadd.f32 %v467, %v631
    %v664 = vadd.f32 %v468, %v632
    %v665 = vadd.f32 %v469, %v633
    %v666 = vadd.f32 %v470, %v634
    %v667 = vadd.f32 %v471, %v635
    %v668 = vadd.f32 %v472, %v636
    %v669 = vadd.f32 %v473, %v637
    %v670 = vadd.f32 %v474, %v638
    %v671 = vadd.f32 %v475, %v639
    %v672 = vadd.f32 %v476, %v640
    %v673 = vadd.f32 %v477, %v641
    %v674 = vadd.f32 %v478, %v642
    %v675 = vadd.f32 %v479, %v643
    %676 = vset.pattern.permute.xlu0 2
    %677 = vperm.xlu0 %676, %v28
    %v678 = vpop.permute.xlu0 %677
    %680 = vset.pattern.permute.xlu0 2
    %681 = vperm.xlu0 %680, %v29
    %v682 = vpop.permute.xlu0 %681
    %684 = vset.pattern.permute.xlu0 2
    %685 = vperm.xlu0 %684, %v30
    %v686 = vpop.permute.xlu0 %685
    %688 = vset.pattern.permute.xlu0 2
    %689 = vperm.xlu0 %688, %v31
    %v690 = vpop.permute.xlu0 %689
    %692 = vset.pattern.permute.xlu0 2
    %693 = vperm.xlu0 %692, %v32
    %v694 = vpop.permute.xlu0 %693
    %696 = vset.pattern.permute.xlu0 2
    %697 = vperm.xlu0 %696, %v33
    %v698 = vpop.permute.xlu0 %697
    %700 = vset.pattern.permute.xlu0 2
    %701 = vperm.xlu0 %700, %v34
    %v702 = vpop.permute.xlu0 %701
    %704 = vset.pattern.permute.xlu0 2
    %705 = vperm.xlu0 %704, %v35
    %v706 = vpop.permute.xlu0 %705
    %708 = vset.pattern.permute.xlu0 2
    %709 = vperm.xlu0 %708, %v36
    %v710 = vpop.permute.xlu0 %709
    %712 = vset.pattern.permute.xlu0 2
    %713 = vperm.xlu0 %712, %v37
    %v714 = vpop.permute.xlu0 %713
    %716 = vset.pattern.permute.xlu0 2
    %717 = vperm.xlu0 %716, %v38
    %v718 = vpop.permute.xlu0 %717
    %720 = vset.pattern.permute.xlu0 2
    %721 = vperm.xlu0 %720, %v39
    %v722 = vpop.permute.xlu0 %721
    %724 = vset.pattern.permute.xlu0 2
    %725 = vperm.xlu0 %724, %v40
    %v726 = vpop.permute.xlu0 %725
    %728 = vset.pattern.permute.xlu0 2
    %729 = vperm.xlu0 %728, %v41
    %v730 = vpop.permute.xlu0 %729
    %732 = vset.pattern.permute.xlu0 2
    %733 = vperm.xlu0 %732, %v42
    %v734 = vpop.permute.xlu0 %733
    %736 = vset.pattern.permute.xlu0 2
    %737 = vperm.xlu0 %736, %v43
    %v738 = vpop.permute.xlu0 %737
    %740 = vset.pattern.permute.xlu0 2
    %741 = vperm.xlu0 %740, %v44
    %v742 = vpop.permute.xlu0 %741
    %744 = vset.pattern.permute.xlu0 2
    %745 = vperm.xlu0 %744, %v45
    %v746 = vpop.permute.xlu0 %745
    %748 = vset.pattern.permute.xlu0 2
    %749 = vperm.xlu0 %748, %v46
    %v750 = vpop.permute.xlu0 %749
    %752 = vset.pattern.permute.xlu0 2
    %753 = vperm.xlu0 %752, %v47
    %v754 = vpop.permute.xlu0 %753
    %756 = vset.pattern.permute.xlu0 2
    %757 = vperm.xlu0 %756, %v48
    %v758 = vpop.permute.xlu0 %757
    %760 = vset.pattern.permute.xlu0 2
    %761 = vperm.xlu0 %760, %v49
    %v762 = vpop.permute.xlu0 %761
    %764 = vset.pattern.permute.xlu0 2
    %765 = vperm.xlu0 %764, %v50
    %v766 = vpop.permute.xlu0 %765
    %768 = vset.pattern.permute.xlu0 2
    %769 = vperm.xlu0 %768, %v51
    %v770 = vpop.permute.xlu0 %769
    %772 = vset.pattern.permute.xlu0 2
    %773 = vperm.xlu0 %772, %v52
    %v774 = vpop.permute.xlu0 %773
    %776 = vset.pattern.permute.xlu0 2
    %777 = vperm.xlu0 %776, %v53
    %v778 = vpop.permute.xlu0 %777
    %780 = vset.pattern.permute.xlu0 2
    %781 = vperm.xlu0 %780, %v54
    %v782 = vpop.permute.xlu0 %781
    %784 = vset.pattern.permute.xlu0 2
    %785 = vperm.xlu0 %784, %v55
    %v786 = vpop.permute.xlu0 %785
    %788 = vset.pattern.permute.xlu0 2
    %789 = vperm.xlu0 %788, %v56
    %v790 = vpop.permute.xlu0 %789
    %792 = vset.pattern.permute.xlu0 2
    %793 = vperm.xlu0 %792, %v57
    %v794 = vpop.permute.xlu0 %793
    %796 = vset.pattern.permute.xlu0 2
    %797 = vperm.xlu0 %796, %v58
    %v798 = vpop.permute.xlu0 %797
    %800 = vset.pattern.permute.xlu0 2
    %801 = vperm.xlu0 %800, %v59
    %v802 = vpop.permute.xlu0 %801
    %v804 = vlaneseq
    %v805 = vshrl.u32 %v804, 7
    %v806 = vsub.s32 2, %v805
    %v807 = vrot.slane %v27, %v806
    %v808 = vmul.f32 %v678, %v807
    %v809 = vmul.f32 %v682, %v807
    %v810 = vmul.f32 %v686, %v807
    %v811 = vmul.f32 %v690, %v807
    %v812 = vmul.f32 %v694, %v807
    %v813 = vmul.f32 %v698, %v807
    %v814 = vmul.f32 %v702, %v807
    %v815 = vmul.f32 %v706, %v807
    %v816 = vmul.f32 %v710, %v807
    %v817 = vmul.f32 %v714, %v807
    %v818 = vmul.f32 %v718, %v807
    %v819 = vmul.f32 %v722, %v807
    %v820 = vmul.f32 %v726, %v807
    %v821 = vmul.f32 %v730, %v807
    %v822 = vmul.f32 %v734, %v807
    %v823 = vmul.f32 %v738, %v807
    %v824 = vmul.f32 %v742, %v807
    %v825 = vmul.f32 %v746, %v807
    %v826 = vmul.f32 %v750, %v807
    %v827 = vmul.f32 %v754, %v807
    %v828 = vmul.f32 %v758, %v807
    %v829 = vmul.f32 %v762, %v807
    %v830 = vmul.f32 %v766, %v807
    %v831 = vmul.f32 %v770, %v807
    %v832 = vmul.f32 %v774, %v807
    %v833 = vmul.f32 %v778, %v807
    %v834 = vmul.f32 %v782, %v807
    %v835 = vmul.f32 %v786, %v807
    %v836 = vmul.f32 %v790, %v807
    %v837 = vmul.f32 %v794, %v807
    %v838 = vmul.f32 %v798, %v807
    %v839 = vmul.f32 %v802, %v807
    %v840 = vadd.f32 %v644, %v808
    %v841 = vadd.f32 %v645, %v809
    %v842 = vadd.f32 %v646, %v810
    %v843 = vadd.f32 %v647, %v811
    %v844 = vadd.f32 %v648, %v812
    %v845 = vadd.f32 %v649, %v813
    %v846 = vadd.f32 %v650, %v814
    %v847 = vadd.f32 %v651, %v815
    %v848 = vadd.f32 %v652, %v816
    %v849 = vadd.f32 %v653, %v817
    %v850 = vadd.f32 %v654, %v818
    %v851 = vadd.f32 %v655, %v819
    %v852 = vadd.f32 %v656, %v820
    %v853 = vadd.f32 %v657, %v821
    %v854 = vadd.f32 %v658, %v822
    %v855 = vadd.f32 %v659, %v823
    %v856 = vadd.f32 %v660, %v824
    %v857 = vadd.f32 %v661, %v825
    %v858 = vadd.f32 %v662, %v826
    %v859 = vadd.f32 %v663, %v827
    %v860 = vadd.f32 %v664, %v828
    %v861 = vadd.f32 %v665, %v829
    %v862 = vadd.f32 %v666, %v830
    %v863 = vadd.f32 %v667, %v831
    %v864 = vadd.f32 %v668, %v832
    %v865 = vadd.f32 %v669, %v833
    %v866 = vadd.f32 %v670, %v834
    %v867 = vadd.f32 %v671, %v835
    %v868 = vadd.f32 %v672, %v836
    %v869 = vadd.f32 %v673, %v837
    %v870 = vadd.f32 %v674, %v838
    %v871 = vadd.f32 %v675, %v839
    %872 = vset.pattern.permute.xlu0 3
    %873 = vperm.xlu0 %872, %v28
    %v874 = vpop.permute.xlu0 %873
    %876 = vset.pattern.permute.xlu0 3
    %877 = vperm.xlu0 %876, %v29
    %v878 = vpop.permute.xlu0 %877
    %880 = vset.pattern.permute.xlu0 3
    %881 = vperm.xlu0 %880, %v30
    %v882 = vpop.permute.xlu0 %881
    %884 = vset.pattern.permute.xlu0 3
    %885 = vperm.xlu0 %884, %v31
    %v886 = vpop.permute.xlu0 %885
    %888 = vset.pattern.permute.xlu0 3
    %889 = vperm.xlu0 %888, %v32
    %v890 = vpop.permute.xlu0 %889
    %892 = vset.pattern.permute.xlu0 3
    %893 = vperm.xlu0 %892, %v33
    %v894 = vpop.permute.xlu0 %893
    %896 = vset.pattern.permute.xlu0 3
    %897 = vperm.xlu0 %896, %v34
    %v898 = vpop.permute.xlu0 %897
    %900 = vset.pattern.permute.xlu0 3
    %901 = vperm.xlu0 %900, %v35
    %v902 = vpop.permute.xlu0 %901
    %904 = vset.pattern.permute.xlu0 3
    %905 = vperm.xlu0 %904, %v36
    %v906 = vpop.permute.xlu0 %905
    %908 = vset.pattern.permute.xlu0 3
    %909 = vperm.xlu0 %908, %v37
    %v910 = vpop.permute.xlu0 %909
    %912 = vset.pattern.permute.xlu0 3
    %913 = vperm.xlu0 %912, %v38
    %v914 = vpop.permute.xlu0 %913
    %916 = vset.pattern.permute.xlu0 3
    %917 = vperm.xlu0 %916, %v39
    %v918 = vpop.permute.xlu0 %917
    %920 = vset.pattern.permute.xlu0 3
    %921 = vperm.xlu0 %920, %v40
    %v922 = vpop.permute.xlu0 %921
    %924 = vset.pattern.permute.xlu0 3
    %925 = vperm.xlu0 %924, %v41
    %v926 = vpop.permute.xlu0 %925
    %928 = vset.pattern.permute.xlu0 3
    %929 = vperm.xlu0 %928, %v42
    %v930 = vpop.permute.xlu0 %929
    %932 = vset.pattern.permute.xlu0 3
    %933 = vperm.xlu0 %932, %v43
    %v934 = vpop.permute.xlu0 %933
    %936 = vset.pattern.permute.xlu0 3
    %937 = vperm.xlu0 %936, %v44
    %v938 = vpop.permute.xlu0 %937
    %940 = vset.pattern.permute.xlu0 3
    %941 = vperm.xlu0 %940, %v45
    %v942 = vpop.permute.xlu0 %941
    %944 = vset.pattern.permute.xlu0 3
    %945 = vperm.xlu0 %944, %v46
    %v946 = vpop.permute.xlu0 %945
    %948 = vset.pattern.permute.xlu0 3
    %949 = vperm.xlu0 %948, %v47
    %v950 = vpop.permute.xlu0 %949
    %952 = vset.pattern.permute.xlu0 3
    %953 = vperm.xlu0 %952, %v48
    %v954 = vpop.permute.xlu0 %953
    %956 = vset.pattern.permute.xlu0 3
    %957 = vperm.xlu0 %956, %v49
    %v958 = vpop.permute.xlu0 %957
    %960 = vset.pattern.permute.xlu0 3
    %961 = vperm.xlu0 %960, %v50
    %v962 = vpop.permute.xlu0 %961
    %964 = vset.pattern.permute.xlu0 3
    %965 = vperm.xlu0 %964, %v51
    %v966 = vpop.permute.xlu0 %965
    %968 = vset.pattern.permute.xlu0 3
    %969 = vperm.xlu0 %968, %v52
    %v970 = vpop.permute.xlu0 %969
    %972 = vset.pattern.permute.xlu0 3
    %973 = vperm.xlu0 %972, %v53
    %v974 = vpop.permute.xlu0 %973
    %976 = vset.pattern.permute.xlu0 3
    %977 = vperm.xlu0 %976, %v54
    %v978 = vpop.permute.xlu0 %977
    %980 = vset.pattern.permute.xlu0 3
    %981 = vperm.xlu0 %980, %v55
    %v982 = vpop.permute.xlu0 %981
    %984 = vset.pattern.permute.xlu0 3
    %985 = vperm.xlu0 %984, %v56
    %v986 = vpop.permute.xlu0 %985
    %988 = vset.pattern.permute.xlu0 3
    %989 = vperm.xlu0 %988, %v57
    %v990 = vpop.permute.xlu0 %989
    %992 = vset.pattern.permute.xlu0 3
    %993 = vperm.xlu0 %992, %v58
    %v994 = vpop.permute.xlu0 %993
    %996 = vset.pattern.permute.xlu0 3
    %997 = vperm.xlu0 %996, %v59
    %v998 = vpop.permute.xlu0 %997
    %v1000 = vlaneseq
    %v1001 = vshrl.u32 %v1000, 7
    %v1002 = vsub.s32 3, %v1001
    %v1003 = vrot.slane %v27, %v1002
    %v1004 = vmul.f32 %v874, %v1003
    %v1005 = vmul.f32 %v878, %v1003
    %v1006 = vmul.f32 %v882, %v1003
    %v1007 = vmul.f32 %v886, %v1003
    %v1008 = vmul.f32 %v890, %v1003
    %v1009 = vmul.f32 %v894, %v1003
    %v1010 = vmul.f32 %v898, %v1003
    %v1011 = vmul.f32 %v902, %v1003
    %v1012 = vmul.f32 %v906, %v1003
    %v1013 = vmul.f32 %v910, %v1003
    %v1014 = vmul.f32 %v914, %v1003
    %v1015 = vmul.f32 %v918, %v1003
    %v1016 = vmul.f32 %v922, %v1003
    %v1017 = vmul.f32 %v926, %v1003
    %v1018 = vmul.f32 %v930, %v1003
    %v1019 = vmul.f32 %v934, %v1003
    %v1020 = vmul.f32 %v938, %v1003
    %v1021 = vmul.f32 %v942, %v1003
    %v1022 = vmul.f32 %v946, %v1003
    %v1023 = vmul.f32 %v950, %v1003
    %v1024 = vmul.f32 %v954, %v1003
    %v1025 = vmul.f32 %v958, %v1003
    %v1026 = vmul.f32 %v962, %v1003
    %v1027 = vmul.f32 %v966, %v1003
    %v1028 = vmul.f32 %v970, %v1003
    %v1029 = vmul.f32 %v974, %v1003
    %v1030 = vmul.f32 %v978, %v1003
    %v1031 = vmul.f32 %v982, %v1003
    %v1032 = vmul.f32 %v986, %v1003
    %v1033 = vmul.f32 %v990, %v1003
    %v1034 = vmul.f32 %v994, %v1003
    %v1035 = vmul.f32 %v998, %v1003
    %v1036 = vadd.f32 %v840, %v1004
    %v1037 = vadd.f32 %v841, %v1005
    %v1038 = vadd.f32 %v842, %v1006
    %v1039 = vadd.f32 %v843, %v1007
    %v1040 = vadd.f32 %v844, %v1008
    %v1041 = vadd.f32 %v845, %v1009
    %v1042 = vadd.f32 %v846, %v1010
    %v1043 = vadd.f32 %v847, %v1011
    %v1044 = vadd.f32 %v848, %v1012
    %v1045 = vadd.f32 %v849, %v1013
    %v1046 = vadd.f32 %v850, %v1014
    %v1047 = vadd.f32 %v851, %v1015
    %v1048 = vadd.f32 %v852, %v1016
    %v1049 = vadd.f32 %v853, %v1017
    %v1050 = vadd.f32 %v854, %v1018
    %v1051 = vadd.f32 %v855, %v1019
    %v1052 = vadd.f32 %v856, %v1020
    %v1053 = vadd.f32 %v857, %v1021
    %v1054 = vadd.f32 %v858, %v1022
    %v1055 = vadd.f32 %v859, %v1023
    %v1056 = vadd.f32 %v860, %v1024
    %v1057 = vadd.f32 %v861, %v1025
    %v1058 = vadd.f32 %v862, %v1026
    %v1059 = vadd.f32 %v863, %v1027
    %v1060 = vadd.f32 %v864, %v1028
    %v1061 = vadd.f32 %v865, %v1029
    %v1062 = vadd.f32 %v866, %v1030
    %v1063 = vadd.f32 %v867, %v1031
    %v1064 = vadd.f32 %v868, %v1032
    %v1065 = vadd.f32 %v869, %v1033
    %v1066 = vadd.f32 %v870, %v1034
    %v1067 = vadd.f32 %v871, %v1035
    %1068 = vset.pattern.permute.xlu0 4
    %1069 = vperm.xlu0 %1068, %v28
    %v1070 = vpop.permute.xlu0 %1069
    %1072 = vset.pattern.permute.xlu0 4
    %1073 = vperm.xlu0 %1072, %v29
    %v1074 = vpop.permute.xlu0 %1073
    %1076 = vset.pattern.permute.xlu0 4
    %1077 = vperm.xlu0 %1076, %v30
    %v1078 = vpop.permute.xlu0 %1077
    %1080 = vset.pattern.permute.xlu0 4
    %1081 = vperm.xlu0 %1080, %v31
    %v1082 = vpop.permute.xlu0 %1081
    %1084 = vset.pattern.permute.xlu0 4
    %1085 = vperm.xlu0 %1084, %v32
    %v1086 = vpop.permute.xlu0 %1085
    %1088 = vset.pattern.permute.xlu0 4
    %1089 = vperm.xlu0 %1088, %v33
    %v1090 = vpop.permute.xlu0 %1089
    %1092 = vset.pattern.permute.xlu0 4
    %1093 = vperm.xlu0 %1092, %v34
    %v1094 = vpop.permute.xlu0 %1093
    %1096 = vset.pattern.permute.xlu0 4
    %1097 = vperm.xlu0 %1096, %v35
    %v1098 = vpop.permute.xlu0 %1097
    %1100 = vset.pattern.permute.xlu0 4
    %1101 = vperm.xlu0 %1100, %v36
    %v1102 = vpop.permute.xlu0 %1101
    %1104 = vset.pattern.permute.xlu0 4
    %1105 = vperm.xlu0 %1104, %v37
    %v1106 = vpop.permute.xlu0 %1105
    %1108 = vset.pattern.permute.xlu0 4
    %1109 = vperm.xlu0 %1108, %v38
    %v1110 = vpop.permute.xlu0 %1109
    %1112 = vset.pattern.permute.xlu0 4
    %1113 = vperm.xlu0 %1112, %v39
    %v1114 = vpop.permute.xlu0 %1113
    %1116 = vset.pattern.permute.xlu0 4
    %1117 = vperm.xlu0 %1116, %v40
    %v1118 = vpop.permute.xlu0 %1117
    %1120 = vset.pattern.permute.xlu0 4
    %1121 = vperm.xlu0 %1120, %v41
    %v1122 = vpop.permute.xlu0 %1121
    %1124 = vset.pattern.permute.xlu0 4
    %1125 = vperm.xlu0 %1124, %v42
    %v1126 = vpop.permute.xlu0 %1125
    %1128 = vset.pattern.permute.xlu0 4
    %1129 = vperm.xlu0 %1128, %v43
    %v1130 = vpop.permute.xlu0 %1129
    %1132 = vset.pattern.permute.xlu0 4
    %1133 = vperm.xlu0 %1132, %v44
    %v1134 = vpop.permute.xlu0 %1133
    %1136 = vset.pattern.permute.xlu0 4
    %1137 = vperm.xlu0 %1136, %v45
    %v1138 = vpop.permute.xlu0 %1137
    %1140 = vset.pattern.permute.xlu0 4
    %1141 = vperm.xlu0 %1140, %v46
    %v1142 = vpop.permute.xlu0 %1141
    %1144 = vset.pattern.permute.xlu0 4
    %1145 = vperm.xlu0 %1144, %v47
    %v1146 = vpop.permute.xlu0 %1145
    %1148 = vset.pattern.permute.xlu0 4
    %1149 = vperm.xlu0 %1148, %v48
    %v1150 = vpop.permute.xlu0 %1149
    %1152 = vset.pattern.permute.xlu0 4
    %1153 = vperm.xlu0 %1152, %v49
    %v1154 = vpop.permute.xlu0 %1153
    %1156 = vset.pattern.permute.xlu0 4
    %1157 = vperm.xlu0 %1156, %v50
    %v1158 = vpop.permute.xlu0 %1157
    %1160 = vset.pattern.permute.xlu0 4
    %1161 = vperm.xlu0 %1160, %v51
    %v1162 = vpop.permute.xlu0 %1161
    %1164 = vset.pattern.permute.xlu0 4
    %1165 = vperm.xlu0 %1164, %v52
    %v1166 = vpop.permute.xlu0 %1165
    %1168 = vset.pattern.permute.xlu0 4
    %1169 = vperm.xlu0 %1168, %v53
    %v1170 = vpop.permute.xlu0 %1169
    %1172 = vset.pattern.permute.xlu0 4
    %1173 = vperm.xlu0 %1172, %v54
    %v1174 = vpop.permute.xlu0 %1173
    %1176 = vset.pattern.permute.xlu0 4
    %1177 = vperm.xlu0 %1176, %v55
    %v1178 = vpop.permute.xlu0 %1177
    %1180 = vset.pattern.permute.xlu0 4
    %1181 = vperm.xlu0 %1180, %v56
    %v1182 = vpop.permute.xlu0 %1181
    %1184 = vset.pattern.permute.xlu0 4
    %1185 = vperm.xlu0 %1184, %v57
    %v1186 = vpop.permute.xlu0 %1185
    %1188 = vset.pattern.permute.xlu0 4
    %1189 = vperm.xlu0 %1188, %v58
    %v1190 = vpop.permute.xlu0 %1189
    %1192 = vset.pattern.permute.xlu0 4
    %1193 = vperm.xlu0 %1192, %v59
    %v1194 = vpop.permute.xlu0 %1193
    %v1196 = vlaneseq
    %v1197 = vshrl.u32 %v1196, 7
    %v1198 = vsub.s32 4, %v1197
    %v1199 = vrot.slane %v27, %v1198
    %v1200 = vmul.f32 %v1070, %v1199
    %v1201 = vmul.f32 %v1074, %v1199
    %v1202 = vmul.f32 %v1078, %v1199
    %v1203 = vmul.f32 %v1082, %v1199
    %v1204 = vmul.f32 %v1086, %v1199
    %v1205 = vmul.f32 %v1090, %v1199
    %v1206 = vmul.f32 %v1094, %v1199
    %v1207 = vmul.f32 %v1098, %v1199
    %v1208 = vmul.f32 %v1102, %v1199
    %v1209 = vmul.f32 %v1106, %v1199
    %v1210 = vmul.f32 %v1110, %v1199
    %v1211 = vmul.f32 %v1114, %v1199
    %v1212 = vmul.f32 %v1118, %v1199
    %v1213 = vmul.f32 %v1122, %v1199
    %v1214 = vmul.f32 %v1126, %v1199
    %v1215 = vmul.f32 %v1130, %v1199
    %v1216 = vmul.f32 %v1134, %v1199
    %v1217 = vmul.f32 %v1138, %v1199
    %v1218 = vmul.f32 %v1142, %v1199
    %v1219 = vmul.f32 %v1146, %v1199
    %v1220 = vmul.f32 %v1150, %v1199
    %v1221 = vmul.f32 %v1154, %v1199
    %v1222 = vmul.f32 %v1158, %v1199
    %v1223 = vmul.f32 %v1162, %v1199
    %v1224 = vmul.f32 %v1166, %v1199
    %v1225 = vmul.f32 %v1170, %v1199
    %v1226 = vmul.f32 %v1174, %v1199
    %v1227 = vmul.f32 %v1178, %v1199
    %v1228 = vmul.f32 %v1182, %v1199
    %v1229 = vmul.f32 %v1186, %v1199
    %v1230 = vmul.f32 %v1190, %v1199
    %v1231 = vmul.f32 %v1194, %v1199
    %v1232 = vadd.f32 %v1036, %v1200
    %v1233 = vadd.f32 %v1037, %v1201
    %v1234 = vadd.f32 %v1038, %v1202
    %v1235 = vadd.f32 %v1039, %v1203
    %v1236 = vadd.f32 %v1040, %v1204
    %v1237 = vadd.f32 %v1041, %v1205
    %v1238 = vadd.f32 %v1042, %v1206
    %v1239 = vadd.f32 %v1043, %v1207
    %v1240 = vadd.f32 %v1044, %v1208
    %v1241 = vadd.f32 %v1045, %v1209
    %v1242 = vadd.f32 %v1046, %v1210
    %v1243 = vadd.f32 %v1047, %v1211
    %v1244 = vadd.f32 %v1048, %v1212
    %v1245 = vadd.f32 %v1049, %v1213
    %v1246 = vadd.f32 %v1050, %v1214
    %v1247 = vadd.f32 %v1051, %v1215
    %v1248 = vadd.f32 %v1052, %v1216
    %v1249 = vadd.f32 %v1053, %v1217
    %v1250 = vadd.f32 %v1054, %v1218
    %v1251 = vadd.f32 %v1055, %v1219
    %v1252 = vadd.f32 %v1056, %v1220
    %v1253 = vadd.f32 %v1057, %v1221
    %v1254 = vadd.f32 %v1058, %v1222
    %v1255 = vadd.f32 %v1059, %v1223
    %v1256 = vadd.f32 %v1060, %v1224
    %v1257 = vadd.f32 %v1061, %v1225
    %v1258 = vadd.f32 %v1062, %v1226
    %v1259 = vadd.f32 %v1063, %v1227
    %v1260 = vadd.f32 %v1064, %v1228
    %v1261 = vadd.f32 %v1065, %v1229
    %v1262 = vadd.f32 %v1066, %v1230
    %v1263 = vadd.f32 %v1067, %v1231
    %1264 = vset.pattern.permute.xlu0 5
    %1265 = vperm.xlu0 %1264, %v28
    %v1266 = vpop.permute.xlu0 %1265
    %1268 = vset.pattern.permute.xlu0 5
    %1269 = vperm.xlu0 %1268, %v29
    %v1270 = vpop.permute.xlu0 %1269
    %1272 = vset.pattern.permute.xlu0 5
    %1273 = vperm.xlu0 %1272, %v30
    %v1274 = vpop.permute.xlu0 %1273
    %1276 = vset.pattern.permute.xlu0 5
    %1277 = vperm.xlu0 %1276, %v31
    %v1278 = vpop.permute.xlu0 %1277
    %1280 = vset.pattern.permute.xlu0 5
    %1281 = vperm.xlu0 %1280, %v32
    %v1282 = vpop.permute.xlu0 %1281
    %1284 = vset.pattern.permute.xlu0 5
    %1285 = vperm.xlu0 %1284, %v33
    %v1286 = vpop.permute.xlu0 %1285
    %1288 = vset.pattern.permute.xlu0 5
    %1289 = vperm.xlu0 %1288, %v34
    %v1290 = vpop.permute.xlu0 %1289
    %1292 = vset.pattern.permute.xlu0 5
    %1293 = vperm.xlu0 %1292, %v35
    %v1294 = vpop.permute.xlu0 %1293
    %1296 = vset.pattern.permute.xlu0 5
    %1297 = vperm.xlu0 %1296, %v36
    %v1298 = vpop.permute.xlu0 %1297
    %1300 = vset.pattern.permute.xlu0 5
    %1301 = vperm.xlu0 %1300, %v37
    %v1302 = vpop.permute.xlu0 %1301
    %1304 = vset.pattern.permute.xlu0 5
    %1305 = vperm.xlu0 %1304, %v38
    %v1306 = vpop.permute.xlu0 %1305
    %1308 = vset.pattern.permute.xlu0 5
    %1309 = vperm.xlu0 %1308, %v39
    %v1310 = vpop.permute.xlu0 %1309
    %1312 = vset.pattern.permute.xlu0 5
    %1313 = vperm.xlu0 %1312, %v40
    %v1314 = vpop.permute.xlu0 %1313
    %1316 = vset.pattern.permute.xlu0 5
    %1317 = vperm.xlu0 %1316, %v41
    %v1318 = vpop.permute.xlu0 %1317
    %1320 = vset.pattern.permute.xlu0 5
    %1321 = vperm.xlu0 %1320, %v42
    %v1322 = vpop.permute.xlu0 %1321
    %1324 = vset.pattern.permute.xlu0 5
    %1325 = vperm.xlu0 %1324, %v43
    %v1326 = vpop.permute.xlu0 %1325
    %1328 = vset.pattern.permute.xlu0 5
    %1329 = vperm.xlu0 %1328, %v44
    %v1330 = vpop.permute.xlu0 %1329
    %1332 = vset.pattern.permute.xlu0 5
    %1333 = vperm.xlu0 %1332, %v45
    %v1334 = vpop.permute.xlu0 %1333
    %1336 = vset.pattern.permute.xlu0 5
    %1337 = vperm.xlu0 %1336, %v46
    %v1338 = vpop.permute.xlu0 %1337
    %1340 = vset.pattern.permute.xlu0 5
    %1341 = vperm.xlu0 %1340, %v47
    %v1342 = vpop.permute.xlu0 %1341
    %1344 = vset.pattern.permute.xlu0 5
    %1345 = vperm.xlu0 %1344, %v48
    %v1346 = vpop.permute.xlu0 %1345
    %1348 = vset.pattern.permute.xlu0 5
    %1349 = vperm.xlu0 %1348, %v49
    %v1350 = vpop.permute.xlu0 %1349
    %1352 = vset.pattern.permute.xlu0 5
    %1353 = vperm.xlu0 %1352, %v50
    %v1354 = vpop.permute.xlu0 %1353
    %1356 = vset.pattern.permute.xlu0 5
    %1357 = vperm.xlu0 %1356, %v51
    %v1358 = vpop.permute.xlu0 %1357
    %1360 = vset.pattern.permute.xlu0 5
    %1361 = vperm.xlu0 %1360, %v52
    %v1362 = vpop.permute.xlu0 %1361
    %1364 = vset.pattern.permute.xlu0 5
    %1365 = vperm.xlu0 %1364, %v53
    %v1366 = vpop.permute.xlu0 %1365
    %1368 = vset.pattern.permute.xlu0 5
    %1369 = vperm.xlu0 %1368, %v54
    %v1370 = vpop.permute.xlu0 %1369
    %1372 = vset.pattern.permute.xlu0 5
    %1373 = vperm.xlu0 %1372, %v55
    %v1374 = vpop.permute.xlu0 %1373
    %1376 = vset.pattern.permute.xlu0 5
    %1377 = vperm.xlu0 %1376, %v56
    %v1378 = vpop.permute.xlu0 %1377
    %1380 = vset.pattern.permute.xlu0 5
    %1381 = vperm.xlu0 %1380, %v57
    %v1382 = vpop.permute.xlu0 %1381
    %1384 = vset.pattern.permute.xlu0 5
    %1385 = vperm.xlu0 %1384, %v58
    %v1386 = vpop.permute.xlu0 %1385
    %1388 = vset.pattern.permute.xlu0 5
    %1389 = vperm.xlu0 %1388, %v59
    %v1390 = vpop.permute.xlu0 %1389
    %v1392 = vlaneseq
    %v1393 = vshrl.u32 %v1392, 7
    %v1394 = vsub.s32 5, %v1393
    %v1395 = vrot.slane %v27, %v1394
    %v1396 = vmul.f32 %v1266, %v1395
    %v1397 = vmul.f32 %v1270, %v1395
    %v1398 = vmul.f32 %v1274, %v1395
    %v1399 = vmul.f32 %v1278, %v1395
    %v1400 = vmul.f32 %v1282, %v1395
    %v1401 = vmul.f32 %v1286, %v1395
    %v1402 = vmul.f32 %v1290, %v1395
    %v1403 = vmul.f32 %v1294, %v1395
    %v1404 = vmul.f32 %v1298, %v1395
    %v1405 = vmul.f32 %v1302, %v1395
    %v1406 = vmul.f32 %v1306, %v1395
    %v1407 = vmul.f32 %v1310, %v1395
    %v1408 = vmul.f32 %v1314, %v1395
    %v1409 = vmul.f32 %v1318, %v1395
    %v1410 = vmul.f32 %v1322, %v1395
    %v1411 = vmul.f32 %v1326, %v1395
    %v1412 = vmul.f32 %v1330, %v1395
    %v1413 = vmul.f32 %v1334, %v1395
    %v1414 = vmul.f32 %v1338, %v1395
    %v1415 = vmul.f32 %v1342, %v1395
    %v1416 = vmul.f32 %v1346, %v1395
    %v1417 = vmul.f32 %v1350, %v1395
    %v1418 = vmul.f32 %v1354, %v1395
    %v1419 = vmul.f32 %v1358, %v1395
    %v1420 = vmul.f32 %v1362, %v1395
    %v1421 = vmul.f32 %v1366, %v1395
    %v1422 = vmul.f32 %v1370, %v1395
    %v1423 = vmul.f32 %v1374, %v1395
    %v1424 = vmul.f32 %v1378, %v1395
    %v1425 = vmul.f32 %v1382, %v1395
    %v1426 = vmul.f32 %v1386, %v1395
    %v1427 = vmul.f32 %v1390, %v1395
    %v1428 = vadd.f32 %v1232, %v1396
    %v1429 = vadd.f32 %v1233, %v1397
    %v1430 = vadd.f32 %v1234, %v1398
    %v1431 = vadd.f32 %v1235, %v1399
    %v1432 = vadd.f32 %v1236, %v1400
    %v1433 = vadd.f32 %v1237, %v1401
    %v1434 = vadd.f32 %v1238, %v1402
    %v1435 = vadd.f32 %v1239, %v1403
    %v1436 = vadd.f32 %v1240, %v1404
    %v1437 = vadd.f32 %v1241, %v1405
    %v1438 = vadd.f32 %v1242, %v1406
    %v1439 = vadd.f32 %v1243, %v1407
    %v1440 = vadd.f32 %v1244, %v1408
    %v1441 = vadd.f32 %v1245, %v1409
    %v1442 = vadd.f32 %v1246, %v1410
    %v1443 = vadd.f32 %v1247, %v1411
    %v1444 = vadd.f32 %v1248, %v1412
    %v1445 = vadd.f32 %v1249, %v1413
    %v1446 = vadd.f32 %v1250, %v1414
    %v1447 = vadd.f32 %v1251, %v1415
    %v1448 = vadd.f32 %v1252, %v1416
    %v1449 = vadd.f32 %v1253, %v1417
    %v1450 = vadd.f32 %v1254, %v1418
    %v1451 = vadd.f32 %v1255, %v1419
    %v1452 = vadd.f32 %v1256, %v1420
    %v1453 = vadd.f32 %v1257, %v1421
    %v1454 = vadd.f32 %v1258, %v1422
    %v1455 = vadd.f32 %v1259, %v1423
    %v1456 = vadd.f32 %v1260, %v1424
    %v1457 = vadd.f32 %v1261, %v1425
    %v1458 = vadd.f32 %v1262, %v1426
    %v1459 = vadd.f32 %v1263, %v1427
    %v1460 = vmax.f32 %v1428, 0.0
    %v1461 = vmax.f32 %v1429, 0.0
    %v1462 = vmax.f32 %v1430, 0.0
    %v1463 = vmax.f32 %v1431, 0.0
    %v1464 = vmax.f32 %v1432, 0.0
    %v1465 = vmax.f32 %v1433, 0.0
    %v1466 = vmax.f32 %v1434, 0.0
    %v1467 = vmax.f32 %v1435, 0.0
    %v1468 = vmax.f32 %v1436, 0.0
    %v1469 = vmax.f32 %v1437, 0.0
    %v1470 = vmax.f32 %v1438, 0.0
    %v1471 = vmax.f32 %v1439, 0.0
    %v1472 = vmax.f32 %v1440, 0.0
    %v1473 = vmax.f32 %v1441, 0.0
    %v1474 = vmax.f32 %v1442, 0.0
    %v1475 = vmax.f32 %v1443, 0.0
    %v1476 = vmax.f32 %v1444, 0.0
    %v1477 = vmax.f32 %v1445, 0.0
    %v1478 = vmax.f32 %v1446, 0.0
    %v1479 = vmax.f32 %v1447, 0.0
    %v1480 = vmax.f32 %v1448, 0.0
    %v1481 = vmax.f32 %v1449, 0.0
    %v1482 = vmax.f32 %v1450, 0.0
    %v1483 = vmax.f32 %v1451, 0.0
    %v1484 = vmax.f32 %v1452, 0.0
    %v1485 = vmax.f32 %v1453, 0.0
    %v1486 = vmax.f32 %v1454, 0.0
    %v1487 = vmax.f32 %v1455, 0.0
    %v1488 = vmax.f32 %v1456, 0.0
    %v1489 = vmax.f32 %v1457, 0.0
    %v1490 = vmax.f32 %v1458, 0.0
    %v1491 = vmax.f32 %v1459, 0.0
    %v1492 = vld [vmem:[%s3] sm:$0xff]
    %v1493 = vld [vmem:[%s3 + $0x8] sm:$0xff]
    %v1494 = vld [vmem:[%s3 + $0x10] sm:$0xff]
    %v1495 = vld [vmem:[%s3 + $0x18] sm:$0xff]
    %v1496 = vld [vmem:[%s3 + $0x20] sm:$0xff]
    %v1497 = vld [vmem:[%s3 + $0x28] sm:$0xff]
    %v1498 = vld [vmem:[%s3 + $0x30] sm:$0xff]
    %v1499 = vld [vmem:[%s3 + $0x38] sm:$0xff]
    %v1500 = vld [vmem:[%s3 + $0x40] sm:$0xff]
    %v1501 = vld [vmem:[%s3 + $0x48] sm:$0xff]
    %v1502 = vld [vmem:[%s3 + $0x50] sm:$0xff]
    %v1503 = vld [vmem:[%s3 + $0x58] sm:$0xff]
    %v1504 = vld [vmem:[%s3 + $0x60] sm:$0xff]
    %v1505 = vld [vmem:[%s3 + $0x68] sm:$0xff]
    %v1506 = vld [vmem:[%s3 + $0x70] sm:$0xff]
    %v1507 = vld [vmem:[%s3 + $0x78] sm:$0xff]
    %v1508 = vld [vmem:[%s3 + $0x80] sm:$0xff]
    %v1509 = vld [vmem:[%s3 + $0x88] sm:$0xff]
    %v1510 = vld [vmem:[%s3 + $0x90] sm:$0xff]
    %v1511 = vld [vmem:[%s3 + $0x98] sm:$0xff]
    %v1512 = vld [vmem:[%s3 + $0xa0] sm:$0xff]
    %v1513 = vld [vmem:[%s3 + $0xa8] sm:$0xff]
    %v1514 = vld [vmem:[%s3 + $0xb0] sm:$0xff]
    %v1515 = vld [vmem:[%s3 + $0xb8] sm:$0xff]
    %v1516 = vld [vmem:[%s3 + $0xc0] sm:$0xff]
    %v1517 = vld [vmem:[%s3 + $0xc8] sm:$0xff]
    %v1518 = vld [vmem:[%s3 + $0xd0] sm:$0xff]
    %v1519 = vld [vmem:[%s3 + $0xd8] sm:$0xff]
    %v1520 = vld [vmem:[%s3 + $0xe0] sm:$0xff]
    %v1521 = vld [vmem:[%s3 + $0xe8] sm:$0xff]
    %v1522 = vld [vmem:[%s3 + $0xf0] sm:$0xff]
    %v1523 = vld [vmem:[%s3 + $0xf8] sm:$0xff]
    %v1524 = vld [vmem:[%s3 + $0x100] sm:$0xff]
    %v1525 = vld [vmem:[%s3 + $0x108] sm:$0xff]
    %v1526 = vld [vmem:[%s3 + $0x110] sm:$0xff]
    %v1527 = vld [vmem:[%s3 + $0x118] sm:$0xff]
    %v1528 = vld [vmem:[%s3 + $0x120] sm:$0xff]
    %v1529 = vld [vmem:[%s3 + $0x128] sm:$0xff]
    %v1530 = vld [vmem:[%s3 + $0x130] sm:$0xff]
    %v1531 = vld [vmem:[%s3 + $0x138] sm:$0xff]
    %v1532 = vld [vmem:[%s3 + $0x140] sm:$0xff]
    %v1533 = vld [vmem:[%s3 + $0x148] sm:$0xff]
    %v1534 = vld [vmem:[%s3 + $0x150] sm:$0xff]
    %v1535 = vld [vmem:[%s3 + $0x158] sm:$0xff]
    %v1536 = vld [vmem:[%s3 + $0x160] sm:$0xff]
    %v1537 = vld [vmem:[%s3 + $0x168] sm:$0xff]
    %v1538 = vld [vmem:[%s3 + $0x170] sm:$0xff]
    %v1539 = vld [vmem:[%s3 + $0x178] sm:$0xff]
    %v1540 = vld [vmem:[%s3 + $0x180] sm:$0xff]
    %v1541 = vld [vmem:[%s3 + $0x188] sm:$0xff]
    %v1542 = vld [vmem:[%s3 + $0x190] sm:$0xff]
    %v1543 = vld [vmem:[%s3 + $0x198] sm:$0xff]
    %v1544 = vld [vmem:[%s3 + $0x1a0] sm:$0xff]
    %v1545 = vld [vmem:[%s3 + $0x1a8] sm:$0xff]
    %v1546 = vld [vmem:[%s3 + $0x1b0] sm:$0xff]
    %v1547 = vld [vmem:[%s3 + $0x1b8] sm:$0xff]
    %v1548 = vld [vmem:[%s3 + $0x1c0] sm:$0xff]
    %v1549 = vld [vmem:[%s3 + $0x1c8] sm:$0xff]
    %v1550 = vld [vmem:[%s3 + $0x1d0] sm:$0xff]
    %v1551 = vld [vmem:[%s3 + $0x1d8] sm:$0xff]
    %v1552 = vld [vmem:[%s3 + $0x1e0] sm:$0xff]
    %v1553 = vld [vmem:[%s3 + $0x1e8] sm:$0xff]
    %v1554 = vld [vmem:[%s3 + $0x1f0] sm:$0xff]
    %v1555 = vld [vmem:[%s3 + $0x1f8] sm:$0xff]
    %v1556 = vld [vmem:[%s4] sm:$0xff]
    %v1557 = vld [vmem:[%s4 + $0x8] sm:$0xff]
    %v1558 = vld [vmem:[%s4 + $0x10] sm:$0xff]
    %v1559 = vld [vmem:[%s4 + $0x18] sm:$0xff]
    %v1560 = vld [vmem:[%s4 + $0x20] sm:$0xff]
    %v1561 = vld [vmem:[%s4 + $0x28] sm:$0xff]
    %v1562 = vld [vmem:[%s4 + $0x30] sm:$0xff]
    %v1563 = vld [vmem:[%s4 + $0x38] sm:$0xff]
    %v1564 = vld [vmem:[%s4 + $0x40] sm:$0xff]
    %v1565 = vld [vmem:[%s4 + $0x48] sm:$0xff]
    %v1566 = vld [vmem:[%s4 + $0x50] sm:$0xff]
    %v1567 = vld [vmem:[%s4 + $0x58] sm:$0xff]
    %v1568 = vld [vmem:[%s4 + $0x60] sm:$0xff]
    %v1569 = vld [vmem:[%s4 + $0x68] sm:$0xff]
    %v1570 = vld [vmem:[%s4 + $0x70] sm:$0xff]
    %v1571 = vld [vmem:[%s4 + $0x78] sm:$0xff]
    %v1572 = vld [vmem:[%s4 + $0x80] sm:$0xff]
    %v1573 = vld [vmem:[%s4 + $0x88] sm:$0xff]
    %v1574 = vld [vmem:[%s4 + $0x90] sm:$0xff]
    %v1575 = vld [vmem:[%s4 + $0x98] sm:$0xff]
    %v1576 = vld [vmem:[%s4 + $0xa0] sm:$0xff]
    %v1577 = vld [vmem:[%s4 + $0xa8] sm:$0xff]
    %v1578 = vld [vmem:[%s4 + $0xb0] sm:$0xff]
    %v1579 = vld [vmem:[%s4 + $0xb8] sm:$0xff]
    %v1580 = vld [vmem:[%s4 + $0xc0] sm:$0xff]
    %v1581 = vld [vmem:[%s4 + $0xc8] sm:$0xff]
    %v1582 = vld [vmem:[%s4 + $0xd0] sm:$0xff]
    %v1583 = vld [vmem:[%s4 + $0xd8] sm:$0xff]
    %v1584 = vld [vmem:[%s4 + $0xe0] sm:$0xff]
    %v1585 = vld [vmem:[%s4 + $0xe8] sm:$0xff]
    %v1586 = vld [vmem:[%s4 + $0xf0] sm:$0xff]
    %v1587 = vld [vmem:[%s4 + $0xf8] sm:$0xff]
    %1589 = vset.pattern.permute.xlu0 0
    %1590 = vperm.xlu0 %1589, %v1556
    %v1591 = vpop.permute.xlu0 %1590
    %1594 = vset.pattern.permute.xlu0 0
    %1595 = vperm.xlu0 %1594, %v1557
    %v1596 = vpop.permute.xlu0 %1595
    %1599 = vset.pattern.permute.xlu0 0
    %1600 = vperm.xlu0 %1599, %v1558
    %v1601 = vpop.permute.xlu0 %1600
    %1604 = vset.pattern.permute.xlu0 0
    %1605 = vperm.xlu0 %1604, %v1559
    %v1606 = vpop.permute.xlu0 %1605
    %1609 = vset.pattern.permute.xlu0 0
    %1610 = vperm.xlu0 %1609, %v1560
    %v1611 = vpop.permute.xlu0 %1610
    %1614 = vset.pattern.permute.xlu0 0
    %1615 = vperm.xlu0 %1614, %v1561
    %v1616 = vpop.permute.xlu0 %1615
    %1619 = vset.pattern.permute.xlu0 0
    %1620 = vperm.xlu0 %1619, %v1562
    %v1621 = vpop.permute.xlu0 %1620
    %1624 = vset.pattern.permute.xlu0 0
    %1625 = vperm.xlu0 %1624, %v1563
    %v1626 = vpop.permute.xlu0 %1625
    %1629 = vset.pattern.permute.xlu0 0
    %1630 = vperm.xlu0 %1629, %v1564
    %v1631 = vpop.permute.xlu0 %1630
    %1634 = vset.pattern.permute.xlu0 0
    %1635 = vperm.xlu0 %1634, %v1565
    %v1636 = vpop.permute.xlu0 %1635
    %1639 = vset.pattern.permute.xlu0 0
    %1640 = vperm.xlu0 %1639, %v1566
    %v1641 = vpop.permute.xlu0 %1640
    %1644 = vset.pattern.permute.xlu0 0
    %1645 = vperm.xlu0 %1644, %v1567
    %v1646 = vpop.permute.xlu0 %1645
    %1649 = vset.pattern.permute.xlu0 0
    %1650 = vperm.xlu0 %1649, %v1568
    %v1651 = vpop.permute.xlu0 %1650
    %1654 = vset.pattern.permute.xlu0 0
    %1655 = vperm.xlu0 %1654, %v1569
    %v1656 = vpop.permute.xlu0 %1655
    %1659 = vset.pattern.permute.xlu0 0
    %1660 = vperm.xlu0 %1659, %v1570
    %v1661 = vpop.permute.xlu0 %1660
    %1664 = vset.pattern.permute.xlu0 0
    %1665 = vperm.xlu0 %1664, %v1571
    %v1666 = vpop.permute.xlu0 %1665
    %1669 = vset.pattern.permute.xlu0 0
    %1670 = vperm.xlu0 %1669, %v1572
    %v1671 = vpop.permute.xlu0 %1670
    %1674 = vset.pattern.permute.xlu0 0
    %1675 = vperm.xlu0 %1674, %v1573
    %v1676 = vpop.permute.xlu0 %1675
    %1679 = vset.pattern.permute.xlu0 0
    %1680 = vperm.xlu0 %1679, %v1574
    %v1681 = vpop.permute.xlu0 %1680
    %1684 = vset.pattern.permute.xlu0 0
    %1685 = vperm.xlu0 %1684, %v1575
    %v1686 = vpop.permute.xlu0 %1685
    %1689 = vset.pattern.permute.xlu0 0
    %1690 = vperm.xlu0 %1689, %v1576
    %v1691 = vpop.permute.xlu0 %1690
    %1694 = vset.pattern.permute.xlu0 0
    %1695 = vperm.xlu0 %1694, %v1577
    %v1696 = vpop.permute.xlu0 %1695
    %1699 = vset.pattern.permute.xlu0 0
    %1700 = vperm.xlu0 %1699, %v1578
    %v1701 = vpop.permute.xlu0 %1700
    %1704 = vset.pattern.permute.xlu0 0
    %1705 = vperm.xlu0 %1704, %v1579
    %v1706 = vpop.permute.xlu0 %1705
    %1709 = vset.pattern.permute.xlu0 0
    %1710 = vperm.xlu0 %1709, %v1580
    %v1711 = vpop.permute.xlu0 %1710
    %1714 = vset.pattern.permute.xlu0 0
    %1715 = vperm.xlu0 %1714, %v1581
    %v1716 = vpop.permute.xlu0 %1715
    %1719 = vset.pattern.permute.xlu0 0
    %1720 = vperm.xlu0 %1719, %v1582
    %v1721 = vpop.permute.xlu0 %1720
    %1724 = vset.pattern.permute.xlu0 0
    %1725 = vperm.xlu0 %1724, %v1583
    %v1726 = vpop.permute.xlu0 %1725
    %1729 = vset.pattern.permute.xlu0 0
    %1730 = vperm.xlu0 %1729, %v1584
    %v1731 = vpop.permute.xlu0 %1730
    %1734 = vset.pattern.permute.xlu0 0
    %1735 = vperm.xlu0 %1734, %v1585
    %v1736 = vpop.permute.xlu0 %1735
    %1739 = vset.pattern.permute.xlu0 0
    %1740 = vperm.xlu0 %1739, %v1586
    %v1741 = vpop.permute.xlu0 %1740
    %1744 = vset.pattern.permute.xlu0 0
    %1745 = vperm.xlu0 %1744, %v1587
    %v1746 = vpop.permute.xlu0 %1745
    %1748 = vmatprep.subr.mxu0 0.0
    %1749 = vmatpush1.msra.mxu0 %v1475
    %1750 = vmatprep.subr.mxu0 0.0
    %1751 = vmatpush1.msra.mxu0 %v1474
    %1752 = vmatprep.subr.mxu0 0.0
    %1753 = vmatpush1.msra.mxu0 %v1473
    %1754 = vmatprep.subr.mxu0 0.0
    %1755 = vmatpush1.msra.mxu0 %v1472
    %1756 = vmatprep.subr.mxu0 0.0
    %1757 = vmatpush1.msra.mxu0 %v1471
    %1758 = vmatprep.subr.mxu0 0.0
    %1759 = vmatpush1.msra.mxu0 %v1470
    %1760 = vmatprep.subr.mxu0 0.0
    %1761 = vmatpush1.msra.mxu0 %v1469
    %1762 = vmatprep.subr.mxu0 0.0
    %1763 = vmatpush1.msra.mxu0 %v1468
    %1764 = vmatprep.subr.mxu0 0.0
    %1765 = vmatpush1.msra.mxu0 %v1467
    %1766 = vmatprep.subr.mxu0 0.0
    %1767 = vmatpush1.msra.mxu0 %v1466
    %1768 = vmatprep.subr.mxu0 0.0
    %1769 = vmatpush1.msra.mxu0 %v1465
    %1770 = vmatprep.subr.mxu0 0.0
    %1771 = vmatpush1.msra.mxu0 %v1464
    %1772 = vmatprep.subr.mxu0 0.0
    %1773 = vmatpush1.msra.mxu0 %v1463
    %1774 = vmatprep.subr.mxu0 0.0
    %1775 = vmatpush1.msra.mxu0 %v1462
    %1776 = vmatprep.subr.mxu0 0.0
    %1777 = vmatpush1.msra.mxu0 %v1461
    %1778 = vmatprep.subr.mxu0 0.0
    %1779 = vmatpush1.msra.mxu0 %v1460
    %1780 = vmatprep.subr.mxu0 0.0
    %1781 = vmatpush2.msra.mxu0 %v1491
    %1782 = vmatprep.subr.mxu0 0.0
    %1783 = vmatpush2.msra.mxu0 %v1490
    %1784 = vmatprep.subr.mxu0 0.0
    %1785 = vmatpush2.msra.mxu0 %v1489
    %1786 = vmatprep.subr.mxu0 0.0
    %1787 = vmatpush2.msra.mxu0 %v1488
    %1788 = vmatprep.subr.mxu0 0.0
    %1789 = vmatpush2.msra.mxu0 %v1487
    %1790 = vmatprep.subr.mxu0 0.0
    %1791 = vmatpush2.msra.mxu0 %v1486
    %1792 = vmatprep.subr.mxu0 0.0
    %1793 = vmatpush2.msra.mxu0 %v1485
    %1794 = vmatprep.subr.mxu0 0.0
    %1795 = vmatpush2.msra.mxu0 %v1484
    %1796 = vmatprep.subr.mxu0 0.0
    %1797 = vmatpush2.msra.mxu0 %v1483
    %1798 = vmatprep.subr.mxu0 0.0
    %1799 = vmatpush2.msra.mxu0 %v1482
    %1800 = vmatprep.subr.mxu0 0.0
    %1801 = vmatpush2.msra.mxu0 %v1481
    %1802 = vmatprep.subr.mxu0 0.0
    %1803 = vmatpush2.msra.mxu0 %v1480
    %1804 = vmatprep.subr.mxu0 0.0
    %1805 = vmatpush2.msra.mxu0 %v1479
    %1806 = vmatprep.subr.mxu0 0.0
    %1807 = vmatpush2.msra.mxu0 %v1478
    %1808 = vmatprep.subr.mxu0 0.0
    %1809 = vmatpush2.msra.mxu0 %v1477
    %1810 = vmatprep.subr.mxu0 0.0
    %1811 = vmatpush2.msra.mxu0 %v1476
    %1812 = vmatprep.mubr.f32.mxu0 %v1493
    %1813 = vmatmul.mubr.f32.gmra.mxu0 %v1492
    %v1814 = vpop.f32.mrf.mxu0
    %v1815 = vadd.f32 %v1591, %v1814
    %v1816 = vpop.f32.mrf.mxu0
    %1817 = vmatprep.mubr.f32.mxu0 %v1495
    %1818 = vmatmul.mubr.f32.gmra.mxu0 %v1494
    %v1819 = vpop.f32.mrf.mxu0
    %v1820 = vadd.f32 %v1596, %v1819
    %v1821 = vpop.f32.mrf.mxu0
    %1822 = vmatprep.mubr.f32.mxu0 %v1497
    %1823 = vmatmul.mubr.f32.gmra.mxu0 %v1496
    %v1824 = vpop.f32.mrf.mxu0
    %v1825 = vadd.f32 %v1601, %v1824
    %v1826 = vpop.f32.mrf.mxu0
    %1827 = vmatprep.mubr.f32.mxu0 %v1499
    %1828 = vmatmul.mubr.f32.gmra.mxu0 %v1498
    %v1829 = vpop.f32.mrf.mxu0
    %v1830 = vadd.f32 %v1606, %v1829
    %v1831 = vpop.f32.mrf.mxu0
    %1832 = vmatprep.mubr.f32.mxu0 %v1501
    %1833 = vmatmul.mubr.f32.gmra.mxu0 %v1500
    %v1834 = vpop.f32.mrf.mxu0
    %v1835 = vadd.f32 %v1611, %v1834
    %v1836 = vpop.f32.mrf.mxu0
    %1837 = vmatprep.mubr.f32.mxu0 %v1503
    %1838 = vmatmul.mubr.f32.gmra.mxu0 %v1502
    %v1839 = vpop.f32.mrf.mxu0
    %v1840 = vadd.f32 %v1616, %v1839
    %v1841 = vpop.f32.mrf.mxu0
    %1842 = vmatprep.mubr.f32.mxu0 %v1505
    %1843 = vmatmul.mubr.f32.gmra.mxu0 %v1504
    %v1844 = vpop.f32.mrf.mxu0
    %v1845 = vadd.f32 %v1621, %v1844
    %v1846 = vpop.f32.mrf.mxu0
    %1847 = vmatprep.mubr.f32.mxu0 %v1507
    %1848 = vmatmul.mubr.f32.gmra.mxu0 %v1506
    %v1849 = vpop.f32.mrf.mxu0
    %v1850 = vadd.f32 %v1626, %v1849
    %v1851 = vpop.f32.mrf.mxu0
    %1852 = vmatprep.mubr.f32.mxu0 %v1509
    %1853 = vmatmul.mubr.f32.gmra.mxu0 %v1508
    %v1854 = vpop.f32.mrf.mxu0
    %v1855 = vadd.f32 %v1631, %v1854
    %v1856 = vpop.f32.mrf.mxu0
    %1857 = vmatprep.mubr.f32.mxu0 %v1511
    %1858 = vmatmul.mubr.f32.gmra.mxu0 %v1510
    %v1859 = vpop.f32.mrf.mxu0
    %v1860 = vadd.f32 %v1636, %v1859
    %v1861 = vpop.f32.mrf.mxu0
    %1862 = vmatprep.mubr.f32.mxu0 %v1513
    %1863 = vmatmul.mubr.f32.gmra.mxu0 %v1512
    %v1864 = vpop.f32.mrf.mxu0
    %v1865 = vadd.f32 %v1641, %v1864
    %v1866 = vpop.f32.mrf.mxu0
    %1867 = vmatprep.mubr.f32.mxu0 %v1515
    %1868 = vmatmul.mubr.f32.gmra.mxu0 %v1514
    %v1869 = vpop.f32.mrf.mxu0
    %v1870 = vadd.f32 %v1646, %v1869
    %v1871 = vpop.f32.mrf.mxu0
    %1872 = vmatprep.mubr.f32.mxu0 %v1517
    %1873 = vmatmul.mubr.f32.gmra.mxu0 %v1516
    %v1874 = vpop.f32.mrf.mxu0
    %v1875 = vadd.f32 %v1651, %v1874
    %v1876 = vpop.f32.mrf.mxu0
    %1877 = vmatprep.mubr.f32.mxu0 %v1519
    %1878 = vmatmul.mubr.f32.gmra.mxu0 %v1518
    %v1879 = vpop.f32.mrf.mxu0
    %v1880 = vadd.f32 %v1656, %v1879
    %v1881 = vpop.f32.mrf.mxu0
    %1882 = vmatprep.mubr.f32.mxu0 %v1521
    %1883 = vmatmul.mubr.f32.gmra.mxu0 %v1520
    %v1884 = vpop.f32.mrf.mxu0
    %v1885 = vadd.f32 %v1661, %v1884
    %v1886 = vpop.f32.mrf.mxu0
    %1887 = vmatprep.mubr.f32.mxu0 %v1523
    %1888 = vmatmul.mubr.f32.gmra.mxu0 %v1522
    %v1889 = vpop.f32.mrf.mxu0
    %v1890 = vadd.f32 %v1666, %v1889
    %v1891 = vpop.f32.mrf.mxu0
    %1892 = vmatprep.mubr.f32.mxu0 %v1525
    %1893 = vmatmul.mubr.f32.gmra.mxu0 %v1524
    %v1894 = vpop.f32.mrf.mxu0
    %v1895 = vadd.f32 %v1671, %v1894
    %v1896 = vpop.f32.mrf.mxu0
    %1897 = vmatprep.mubr.f32.mxu0 %v1527
    %1898 = vmatmul.mubr.f32.gmra.mxu0 %v1526
    %v1899 = vpop.f32.mrf.mxu0
    %v1900 = vadd.f32 %v1676, %v1899
    %v1901 = vpop.f32.mrf.mxu0
    %1902 = vmatprep.mubr.f32.mxu0 %v1529
    %1903 = vmatmul.mubr.f32.gmra.mxu0 %v1528
    %v1904 = vpop.f32.mrf.mxu0
    %v1905 = vadd.f32 %v1681, %v1904
    %v1906 = vpop.f32.mrf.mxu0
    %1907 = vmatprep.mubr.f32.mxu0 %v1531
    %1908 = vmatmul.mubr.f32.gmra.mxu0 %v1530
    %v1909 = vpop.f32.mrf.mxu0
    %v1910 = vadd.f32 %v1686, %v1909
    %v1911 = vpop.f32.mrf.mxu0
    %1912 = vmatprep.mubr.f32.mxu0 %v1533
    %1913 = vmatmul.mubr.f32.gmra.mxu0 %v1532
    %v1914 = vpop.f32.mrf.mxu0
    %v1915 = vadd.f32 %v1691, %v1914
    %v1916 = vpop.f32.mrf.mxu0
    %1917 = vmatprep.mubr.f32.mxu0 %v1535
    %1918 = vmatmul.mubr.f32.gmra.mxu0 %v1534
    %v1919 = vpop.f32.mrf.mxu0
    %v1920 = vadd.f32 %v1696, %v1919
    %v1921 = vpop.f32.mrf.mxu0
    %1922 = vmatprep.mubr.f32.mxu0 %v1537
    %1923 = vmatmul.mubr.f32.gmra.mxu0 %v1536
    %v1924 = vpop.f32.mrf.mxu0
    %v1925 = vadd.f32 %v1701, %v1924
    %v1926 = vpop.f32.mrf.mxu0
    %1927 = vmatprep.mubr.f32.mxu0 %v1539
    %1928 = vmatmul.mubr.f32.gmra.mxu0 %v1538
    %v1929 = vpop.f32.mrf.mxu0
    %v1930 = vadd.f32 %v1706, %v1929
    %v1931 = vpop.f32.mrf.mxu0
    %1932 = vmatprep.mubr.f32.mxu0 %v1541
    %1933 = vmatmul.mubr.f32.gmra.mxu0 %v1540
    %v1934 = vpop.f32.mrf.mxu0
    %v1935 = vadd.f32 %v1711, %v1934
    %v1936 = vpop.f32.mrf.mxu0
    %1937 = vmatprep.mubr.f32.mxu0 %v1543
    %1938 = vmatmul.mubr.f32.gmra.mxu0 %v1542
    %v1939 = vpop.f32.mrf.mxu0
    %v1940 = vadd.f32 %v1716, %v1939
    %v1941 = vpop.f32.mrf.mxu0
    %1942 = vmatprep.mubr.f32.mxu0 %v1545
    %1943 = vmatmul.mubr.f32.gmra.mxu0 %v1544
    %v1944 = vpop.f32.mrf.mxu0
    %v1945 = vadd.f32 %v1721, %v1944
    %v1946 = vpop.f32.mrf.mxu0
    %1947 = vmatprep.mubr.f32.mxu0 %v1547
    %1948 = vmatmul.mubr.f32.gmra.mxu0 %v1546
    %v1949 = vpop.f32.mrf.mxu0
    %v1950 = vadd.f32 %v1726, %v1949
    %v1951 = vpop.f32.mrf.mxu0
    %1952 = vmatprep.mubr.f32.mxu0 %v1549
    %1953 = vmatmul.mubr.f32.gmra.mxu0 %v1548
    %v1954 = vpop.f32.mrf.mxu0
    %v1955 = vadd.f32 %v1731, %v1954
    %v1956 = vpop.f32.mrf.mxu0
    %1957 = vmatprep.mubr.f32.mxu0 %v1551
    %1958 = vmatmul.mubr.f32.gmra.mxu0 %v1550
    %v1959 = vpop.f32.mrf.mxu0
    %v1960 = vadd.f32 %v1736, %v1959
    %v1961 = vpop.f32.mrf.mxu0
    %1962 = vmatprep.mubr.f32.mxu0 %v1553
    %1963 = vmatmul.mubr.f32.gmra.mxu0 %v1552
    %v1964 = vpop.f32.mrf.mxu0
    %v1965 = vadd.f32 %v1741, %v1964
    %v1966 = vpop.f32.mrf.mxu0
    %1967 = vmatprep.mubr.f32.mxu0 %v1555
    %1968 = vmatmul.mubr.f32.gmra.mxu0 %v1554
    %v1969 = vpop.f32.mrf.mxu0
    %v1970 = vadd.f32 %v1746, %v1969
    %v1971 = vpop.f32.mrf.mxu0
    %1972 = vdwg.mxu0
    %v1973 = vmax.f32 %v1815, 0.0
    %v1974 = vmax.f32 %v1820, 0.0
    %v1975 = vmax.f32 %v1825, 0.0
    %v1976 = vmax.f32 %v1830, 0.0
    %v1977 = vmax.f32 %v1835, 0.0
    %v1978 = vmax.f32 %v1840, 0.0
    %v1979 = vmax.f32 %v1845, 0.0
    %v1980 = vmax.f32 %v1850, 0.0
    %v1981 = vmax.f32 %v1855, 0.0
    %v1982 = vmax.f32 %v1860, 0.0
    %v1983 = vmax.f32 %v1865, 0.0
    %v1984 = vmax.f32 %v1870, 0.0
    %v1985 = vmax.f32 %v1875, 0.0
    %v1986 = vmax.f32 %v1880, 0.0
    %v1987 = vmax.f32 %v1885, 0.0
    %v1988 = vmax.f32 %v1890, 0.0
    %v1989 = vmax.f32 %v1895, 0.0
    %v1990 = vmax.f32 %v1900, 0.0
    %v1991 = vmax.f32 %v1905, 0.0
    %v1992 = vmax.f32 %v1910, 0.0
    %v1993 = vmax.f32 %v1915, 0.0
    %v1994 = vmax.f32 %v1920, 0.0
    %v1995 = vmax.f32 %v1925, 0.0
    %v1996 = vmax.f32 %v1930, 0.0
    %v1997 = vmax.f32 %v1935, 0.0
    %v1998 = vmax.f32 %v1940, 0.0
    %v1999 = vmax.f32 %v1945, 0.0
    %v2000 = vmax.f32 %v1950, 0.0
    %v2001 = vmax.f32 %v1955, 0.0
    %v2002 = vmax.f32 %v1960, 0.0
    %v2003 = vmax.f32 %v1965, 0.0
    %v2004 = vmax.f32 %v1970, 0.0
    %v2005 = vld [vmem:[%s5] sm:$0xff]
    %v2006 = vld [vmem:[%s5 + $0x8] sm:$0xff]
    %v2007 = vld [vmem:[%s6] sm:$0xff]
    %2009 = vset.pattern.permute.xlu0 0
    %2010 = vperm.xlu0 %2009, %v2007
    %v2011 = vpop.permute.xlu0 %2010
    %2013 = vmatprep.subr.mxu0 0.0
    %2014 = vmatpush1.msra.mxu0 %v1988
    %2015 = vmatprep.subr.mxu0 0.0
    %2016 = vmatpush1.msra.mxu0 %v1987
    %2017 = vmatprep.subr.mxu0 0.0
    %2018 = vmatpush1.msra.mxu0 %v1986
    %2019 = vmatprep.subr.mxu0 0.0
    %2020 = vmatpush1.msra.mxu0 %v1985
    %2021 = vmatprep.subr.mxu0 0.0
    %2022 = vmatpush1.msra.mxu0 %v1984
    %2023 = vmatprep.subr.mxu0 0.0
    %2024 = vmatpush1.msra.mxu0 %v1983
    %2025 = vmatprep.subr.mxu0 0.0
    %2026 = vmatpush1.msra.mxu0 %v1982
    %2027 = vmatprep.subr.mxu0 0.0
    %2028 = vmatpush1.msra.mxu0 %v1981
    %2029 = vmatprep.subr.mxu0 0.0
    %2030 = vmatpush1.msra.mxu0 %v1980
    %2031 = vmatprep.subr.mxu0 0.0
    %2032 = vmatpush1.msra.mxu0 %v1979
    %2033 = vmatprep.subr.mxu0 0.0
    %2034 = vmatpush1.msra.mxu0 %v1978
    %2035 = vmatprep.subr.mxu0 0.0
    %2036 = vmatpush1.msra.mxu0 %v1977
    %2037 = vmatprep.subr.mxu0 0.0
    %2038 = vmatpush1.msra.mxu0 %v1976
    %2039 = vmatprep.subr.mxu0 0.0
    %2040 = vmatpush1.msra.mxu0 %v1975
    %2041 = vmatprep.subr.mxu0 0.0
    %2042 = vmatpush1.msra.mxu0 %v1974
    %2043 = vmatprep.subr.mxu0 0.0
    %2044 = vmatpush1.msra.mxu0 %v1973
    %2045 = vmatprep.subr.mxu0 0.0
    %2046 = vmatpush2.msra.mxu0 %v2004
    %2047 = vmatprep.subr.mxu0 0.0
    %2048 = vmatpush2.msra.mxu0 %v2003
    %2049 = vmatprep.subr.mxu0 0.0
    %2050 = vmatpush2.msra.mxu0 %v2002
    %2051 = vmatprep.subr.mxu0 0.0
    %2052 = vmatpush2.msra.mxu0 %v2001
    %2053 = vmatprep.subr.mxu0 0.0
    %2054 = vmatpush2.msra.mxu0 %v2000
    %2055 = vmatprep.subr.mxu0 0.0
    %2056 = vmatpush2.msra.mxu0 %v1999
    %2057 = vmatprep.subr.mxu0 0.0
    %2058 = vmatpush2.msra.mxu0 %v1998
    %2059 = vmatprep.subr.mxu0 0.0
    %2060 = vmatpush2.msra.mxu0 %v1997
    %2061 = vmatprep.subr.mxu0 0.0
    %2062 = vmatpush2.msra.mxu0 %v1996
    %2063 = vmatprep.subr.mxu0 0.0
    %2064 = vmatpush2.msra.mxu0 %v1995
    %2065 = vmatprep.subr.mxu0 0.0
    %2066 = vmatpush2.msra.mxu0 %v1994
    %2067 = vmatprep.subr.mxu0 0.0
    %2068 = vmatpush2.msra.mxu0 %v1993
    %2069 = vmatprep.subr.mxu0 0.0
    %2070 = vmatpush2.msra.mxu0 %v1992
    %2071 = vmatprep.subr.mxu0 0.0
    %2072 = vmatpush2.msra.mxu0 %v1991
    %2073 = vmatprep.subr.mxu0 0.0
    %2074 = vmatpush2.msra.mxu0 %v1990
    %2075 = vmatprep.subr.mxu0 0.0
    %2076 = vmatpush2.msra.mxu0 %v1989
    %2077 = vmatprep.mubr.f32.mxu0 %v2006
    %2078 = vmatmul.mubr.f32.gmra.mxu0 %v2005
    %v2079 = vpop.f32.mrf.mxu0
    %v2080 = vadd.f32 %v2011, %v2079
    %v2081 = vpop.f32.mrf.mxu0
    %2082 = vdwg.mxu0
    %v2084 = vrot.slane %v2080, 7
    %v2086 = vsub.f32 %v2080, %v2084
    %v2087 = vmul.f32 %v2086, 1.442695
    %v2088 = vpow.pop %v2087
    %v2089 = vadd.f32 %v2088, 1.0
    %v2090 = vrcp.pop %v2089
    %v2091 = vmul.f32 1.0, %v2090
    %v2092 = vsub.f32 1.0, %v2091
    %v2093 = vlaneseq
    %v2094 = vshrl.u32 %v2093, 7
    %vm2095 = vcmp.eq.s32.totalorder %v2094, 0
    %vm2096 = vcmp.eq.s32.totalorder %v2094, 1
    %vm2097 = vcmp.eq.s32.totalorder %v2094, 2
    %v2098 = vsel %vm2097, %v2080, 0.0
    %v2099 = vlaneseq
    %v2100 = vshrl.u32 %v2099, 7
    %v2101 = vsub.s32 1, %v2100
    %v2102 = vrot.slane %v2092, %v2101
    %v2103 = vsel %vm2096, %v2102, %v2098
    %v2104 = vlaneseq
    %v2105 = vshrl.u32 %v2104, 7
    %v2106 = vsub.s32 1, %v2105
    %v2107 = vrot.slane %v2091, %v2106
    %v2108 = vsel %vm2095, %v2107, %v2103
    %2109 = vst [vmem:[#allocation2] sm:$0xff] %v2108
    // Predicated region
    $region30: #{tpu_custom_call.1} parent=1 // pred_check
      _
    $region31: #{tpu_custom_call.1} parent=1 // pred_check_branch
      %2111 = sbr.rel (0) target = $region33
    $region32: #{tpu_custom_call.1} parent=1 // pred_region
      %s2113 = ssub.s32 128, 128
      %2114 = vsyncadd [#allocation3], %s2113
      %s2116 = sshll.u32 [#allocation2], 4
      %s2117 = int_to_ptr.vmem [resolvable:$true] %s2116
      %2119 = dma.vmem_to_hbm [thread:$0]  %s2117, 128, %s7, [#allocation3]
    $region33: #{tpu_custom_call.1} parent=1 // pred_fallthru
      _
    // Predicated region
    $region34: #{tpu_custom_call.1} parent=1 // pred_check
      _
    $region35: #{tpu_custom_call.1} parent=1 // pred_check_branch
      %2121 = sbr.rel (0) target = $region37
    $region36: #{tpu_custom_call.1} parent=1 // pred_region
      %2122 = dma.done [#allocation3], 128
    $region37: #{tpu_custom_call.1} parent=1 // pred_fallthru
      _
    %2123 = vsyncpa [#allocation3], 1

</llo_original>
